<compile_context>
chip_gen: v7x
topology: tpu7x:2x2x1
jax: 0.10.0
libtpu: 0.0.40
codegen_flags: <defaults>
</compile_context>

<pallas_src>
import functools
import math

import jax
import jax.numpy as jnp
from jax.experimental import pallas as pl
from jax.experimental.pallas import tpu as pltpu


_VMEM = pl.BlockSpec(memory_space=pltpu.MemorySpace.VMEM)


def _round_up(v, m):
    return ((v + m - 1) // m) * m


# --------------------------------------------------------------------------- #
# Fused kernel
# --------------------------------------------------------------------------- #
def _make_fused_kernel(S, B, D_pad, H, num_layers, n_predictions, row_offsets):
    f32, bf16 = jnp.float32, jnp.bfloat16
    H4 = 4 * H
    o_wih0, o_whh0, o_wcat, o_wfuse, o_wfc = row_offsets

    def kernel(x_ref, w_ref, b_ref, out_ref):
        # ---- resident weights: one bf16 slab, 16-row-aligned static slices ----
        wih0 = w_ref[o_wih0:o_wih0 + D_pad, :]                 # (D_pad, 4H)
        whh0 = w_ref[o_whh0:o_whh0 + H, :]                     # (H, 4H)
        wcat = [w_ref[o_wcat[l - 1]:o_wcat[l - 1] + 2 * H, :]  # (2H, 4H)
                for l in range(1, num_layers)]
        wfuse = w_ref[o_wfuse:o_wfuse + H, :]                  # (H, 4H)
        wfc = w_ref[o_wfc:o_wfc + H, :]                        # (H, 4H) (cols>O zero)

        # ---- biases: one f32 slab ----
        b0 = b_ref[0:1, :]
        b_hi = [b_ref[l:l + 1, :] for l in range(1, num_layers)]
        bfuse = b_ref[num_layers:num_layers + 1, :]
        bfc = b_ref[num_layers + 1:num_layers + 2, :]

        # ---- hoisted layer-0 projection of the ORIGINAL sequence (off-chain,
        #      shared by every prediction): one (S*B, D_pad)@(D_pad, 4H) matmul.
        x = x_ref[...].astype(bf16)                             # (S*B, D_pad)
        xw0 = jnp.dot(x, wih0, preferred_element_type=f32) + b0  # (S*B, 4H)

        def gates_to_hc(gates, c):
            # One full-width sigmoid (EUP); g-gate columns were pre-scaled by 2
            # so tanh(g) = 2*sigmoid(2g) - 1 is a VPU fma (saves an EUP push).
            sig = jax.nn.sigmoid(gates)
            i = sig[:, 0 * H:1 * H]
            f = sig[:, 1 * H:2 * H]
            g = 2.0 * sig[:, 2 * H:3 * H] - 1.0
            o = sig[:, 3 * H:4 * H]
            c_new = f * c + i * g
            h_new = o * jnp.tanh(c_new)
            return h_new, c_new

        def cell0(pre, h, c):
            gates = pre + jnp.dot(h.astype(bf16), whh0, preferred_element_type=f32)
            return gates_to_hc(gates, c)

        def cell_hi(l, h_below, h, c):
            # Fused input+hidden projection: one (B, 2H)@(2H, 4H) matmul.
            inp = jnp.concatenate([h_below, h], axis=1).astype(bf16)
            gates = jnp.dot(inp, wcat[l - 1], preferred_element_type=f32) + b_hi[l - 1]
            return gates_to_hc(gates, c)

        h_st = [jnp.zeros((B, H), f32) for _ in range(num_layers)]
        c_st = [jnp.zeros((B, H), f32) for _ in range(num_layers)]

        h_lasts = []
        for p in range(n_predictions):
            pre_list = [xw0[t * B:(t + 1) * B, :] for t in range(S)]
            if p > 0:
                # fc -> re-projection folded:  pre = h_last @ (w_fc @ w_ih0) + b_fuse
                pre_list.append(jnp.dot(h_lasts[-1].astype(bf16), wfuse,
                                        preferred_element_type=f32) + bfuse)
            # Wavefront: (layer l, step t) depends only on (l-1, t) and (l, t-1),
            # exposing L independent cell chains to the scheduler.
            for pre in pre_list:
                h_st[0], c_st[0] = cell0(pre, h_st[0], c_st[0])
                for l in range(1, num_layers):
                    h_st[l], c_st[l] = cell_hi(l, h_st[l - 1], h_st[l], c_st[l])
            h_lasts.append(h_st[-1])

        # Final Linear for ALL predictions: one matmul, off the recurrence chain,
        # single lane-dense (4H-wide) store.
        h_stack = jnp.concatenate(h_lasts, axis=0).astype(bf16)          # (P*B, H)
        outs = jnp.dot(h_stack, wfc, preferred_element_type=f32) + bfc   # (P*B, 4H)
        out_ref[...] = outs.reshape(n_predictions, B, H4)

    return kernel


# --------------------------------------------------------------------------- #
# Parameter packing (weight slab + bias slab, g-gate pre-scaling, fc folding)
# --------------------------------------------------------------------------- #
def init_params(key, input_dim, hidden_dim, num_layers, output_dim):
    """PyTorch default init U(-1/sqrt(H), 1/sqrt(H)).  Weights are rounded to
    bf16 once (the MXU operand precision) and kept as f32 so the kernel and
    the pure-JAX reference share identical weight values."""
    k = 1.0 / math.sqrt(hidden_dim)
    rb = lambda w: w.astype(jnp.bfloat16).astype(jnp.float32)
    params = {"wih_t": [], "whh_t": [], "b": []}
    for layer in range(num_layers):
        d_in = input_dim if layer == 0 else hidden_dim
        key, k1, k2, k3, k4 = jax.random.split(key, 5)
        wih = jax.random.uniform(k1, (4 * hidden_dim, d_in), jnp.float32, -k, k)
        whh = jax.random.uniform(k2, (4 * hidden_dim, hidden_dim), jnp.float32, -k, k)
        bih = jax.random.uniform(k3, (4 * hidden_dim,), jnp.float32, -k, k)
        bhh = jax.random.uniform(k4, (4 * hidden_dim,), jnp.float32, -k, k)
        params["wih_t"].append(rb(wih.T))                     # (D_in, 4H)
        params["whh_t"].append(rb(whh.T))                     # (H, 4H)
        params["b"].append((bih + bhh).reshape(1, -1))        # (1, 4H)
    key, k1, k2 = jax.random.split(key, 3)
    w_fc = jax.random.uniform(k1, (output_dim, hidden_dim), jnp.float32, -k, k)
    b_fc = jax.random.uniform(k2, (output_dim,), jnp.float32, -k, k)
    params["w_fc_t"] = rb(w_fc.T)                             # (H, O)
    params["b_fc"] = b_fc.reshape(1, -1)                      # (1, O)
    return params


def pack_params(params, input_dim, hidden_dim, num_layers, output_dim):
    """Builds the single bf16 weight slab and single f32 bias slab the kernel
    consumes (3 DMAs total instead of 9)."""
    H, H4, D, O = hidden_dim, 4 * hidden_dim, input_dim, output_dim
    assert H % 16 == 0, "pack_params assumes hidden_dim % 16 == 0"
    assert O <= H4
    D_pad = _round_up(D, 16)

    def scale_g(w):  # pre-scale g-gate block by 2  =>  tanh(g) = 2*sigmoid(2g)-1
        return w.at[..., 2 * H:3 * H].multiply(2.0)

    wih = [scale_g(params["wih_t"][l]) for l in range(num_layers)]
    whh = [scale_g(params["whh_t"][l]) for l in range(num_layers)]
    b = [scale_g(params["b"][l]) for l in range(num_layers)]
    wfc, bfc = params["w_fc_t"], params["b_fc"]

    # fc -> layer-0 re-projection folded (takes two matmuls off the serial chain)
    wfuse = wfc @ wih[0]                                       # (H, 4H)
    bfuse = bfc @ wih[0] + b[0]                                # (1, 4H)

    # ---- bf16 weight slab (sections aligned to 16 rows) ----
    rows, offs = [], {}

    def add(name, w, pad_rows=None):
        offs[name] = sum(r.shape[0] for r in rows)
        if pad_rows is not None and w.shape[0] < pad_rows:
            w = jnp.pad(w, ((0, pad_rows - w.shape[0]), (0, 0)))
        rows.append(w)

    add("wih0", wih[0], pad_rows=D_pad)
    add("whh0", whh[0])
    wcat_offs = []
    for l in range(1, num_layers):
        add(f"wcat{l}", jnp.concatenate([wih[l], whh[l]], axis=0))  # (2H, 4H)
        wcat_offs.append(offs[f"wcat{l}"])
    add("wfuse", wfuse)
    add("wfc", jnp.pad(wfc, ((0, 0), (0, H4 - O))))
    w_slab = jnp.concatenate(rows, axis=0).astype(jnp.bfloat16)

    # ---- f32 bias slab ----
    b_rows = b + [bfuse, jnp.pad(bfc, ((0, 0), (0, H4 - O)))]
    n_rows = len(b_rows)
    b_slab = jnp.concatenate(b_rows, axis=0)
    b_slab = jnp.pad(b_slab, ((0, _round_up(n_rows, 8) - n_rows), (0, 0)))

    row_offsets = (offs["wih0"], offs["whh0"], tuple(wcat_offs),
                   offs["wfuse"], offs["wfc"])
    return w_slab, b_slab, row_offsets, D_pad


# --------------------------------------------------------------------------- #
# Forward wrapper
# --------------------------------------------------------------------------- #
def lstm_model_v2_forward(x, w_slab, b_slab, row_offsets, D_pad, num_layers,
                          hidden_dim, output_dim, n_predictions):
    """Mirrors LSTMModelV2.forward.  x: (B, S, D) -> (B, n_predictions, O)."""
    B, S, D = x.shape
    H, H4 = hidden_dim, 4 * hidden_dim
    B_pad = max(8, _round_up(B, 8))           # fill the 8-sublane vreg dimension
    # NOTE: if batch grows, split it over a `dimension_semantics=("parallel",)`
    # grid axis (uses both v7x TensorCores) rather than growing the unroll.

    x_tm = jnp.transpose(x, (1, 0, 2)).astype(jnp.float32)      # (S, B, D)
    x_tm = jnp.pad(x_tm, ((0, 0), (0, B_pad - B), (0, D_pad - D)))
    x2d = x_tm.reshape(S * B_pad, D_pad)

    kernel = _make_fused_kernel(S, B_pad, D_pad, H, num_layers, n_predictions,
                                row_offsets)
    out = pl.pallas_call(
        kernel,
        out_shape=jax.ShapeDtypeStruct((n_predictions, B_pad, H4), jnp.float32),
        in_specs=[_VMEM, _VMEM, _VMEM],
        out_specs=_VMEM,
        compiler_params=pltpu.CompilerParams(vmem_limit_bytes=32 * 1024 * 1024),
    )(x2d, w_slab, b_slab)
    # kernel store is lane-dense (4H wide); slice the real output_dim here
    return jnp.transpose(out, (1, 0, 2))[:B, :, :output_dim]


# --------------------------------------------------------------------------- #
# Pure-JAX f32 reference of LSTMModelV2.forward (same bf16-rounded weights)
# --------------------------------------------------------------------------- #
def _reference_forward(x, params, num_layers, hidden_dim, n_predictions):
    B, H = x.shape[0], hidden_dim
    wih, whh, bs = params["wih_t"], params["whh_t"], params["b"]
    wfc, bfc = params["w_fc_t"], params["b_fc"]

    def cell(xt, h, c, wih_l, whh_l, b_l):
        g = xt @ wih_l + h @ whh_l + b_l
        i = jax.nn.sigmoid(g[:, :H])
        f = jax.nn.sigmoid(g[:, H:2 * H])
        gg = jnp.tanh(g[:, 2 * H:3 * H])
        o = jax.nn.sigmoid(g[:, 3 * H:])
        c = f * c + i * gg
        h = o * jnp.tanh(c)
        return h, c

    h = [jnp.zeros((B, H), jnp.float32) for _ in range(num_layers)]
    c = [jnp.zeros((B, H), jnp.float32) for _ in range(num_layers)]
    outs, seq = [], x
    for _ in range(n_predictions):
        layer_in = seq
        for layer in range(num_layers):
            hh, cc = h[layer], c[layer]
            ys = []
            for t in range(layer_in.shape[1]):
                hh, cc = cell(layer_in[:, t, :], hh, cc,
                              wih[layer], whh[layer], bs[layer])
                ys.append(hh)
            h[layer], c[layer] = hh, cc
            layer_in = jnp.stack(ys, axis=1)
        o = h[-1] @ wfc + bfc
        outs.append(o)
        seq = jnp.concatenate([x, o[:, None, :]], axis=1)
    return jnp.stack(outs, axis=1)


if __name__ == "__main__":
    # output_dim must equal input_dim: predictions are concatenated back onto x.
    batch, seq_len, input_dim = 2, 8, 4
    hidden_dim, num_layers = 32, 2
    output_dim, n_predictions = 4, 3

    key = jax.random.PRNGKey(0)
    key, kx, kp = jax.random.split(key, 3)
    x = jax.random.normal(kx, (batch, seq_len, input_dim), jnp.float32)
    params = init_params(kp, input_dim, hidden_dim, num_layers, output_dim)
    w_slab, b_slab, row_offsets, D_pad = pack_params(
        params, input_dim, hidden_dim, num_layers, output_dim)

    fwd = jax.jit(functools.partial(
        lstm_model_v2_forward, w_slab=w_slab, b_slab=b_slab,
        row_offsets=row_offsets, D_pad=D_pad, num_layers=num_layers,
        hidden_dim=hidden_dim, output_dim=output_dim,
        n_predictions=n_predictions))
    out = jax.block_until_ready(fwd(x))

    assert out.shape == (batch, n_predictions, output_dim), out.shape
    assert bool(jnp.all(jnp.isfinite(out)))

    ref = _reference_forward(x, params, num_layers, hidden_dim, n_predictions)
    err = float(jnp.max(jnp.abs(out - ref)))
    assert bool(jnp.allclose(out, ref, atol=5e-2, rtol=5e-2)), err

    print("KERNEL_OK")
</pallas_src>

<mosaic_0001>
module attributes {stable_mosaic.version = 11 : i64} {
  func.func @kernel(%arg0: memref<64x16xf32, #tpu.memory_space<vmem>>, %arg1: memref<176x128xbf16, #tpu.memory_space<vmem>>, %arg2: memref<8x128xf32, #tpu.memory_space<vmem>>, %arg3: memref<3x8x128xf32, #tpu.memory_space<vmem>>) attributes {dimension_semantics = [], scalar_prefetch = 0 : i64, scratch_operands = 0 : i64, tpu.core_type = #tpu.core_type<tc>} {
    %c0 = arith.constant 0 : index
    %c0_0 = arith.constant 0 : index
    %0 = vector.load %arg1[%c0, %c0_0] : memref<176x128xbf16, #tpu.memory_space<vmem>>, vector<16x128xbf16>
    %c16 = arith.constant 16 : index
    %c0_1 = arith.constant 0 : index
    %1 = vector.load %arg1[%c16, %c0_1] : memref<176x128xbf16, #tpu.memory_space<vmem>>, vector<32x128xbf16>
    %c48 = arith.constant 48 : index
    %c0_2 = arith.constant 0 : index
    %2 = vector.load %arg1[%c48, %c0_2] : memref<176x128xbf16, #tpu.memory_space<vmem>>, vector<64x128xbf16>
    %c112 = arith.constant 112 : index
    %c0_3 = arith.constant 0 : index
    %3 = vector.load %arg1[%c112, %c0_3] : memref<176x128xbf16, #tpu.memory_space<vmem>>, vector<32x128xbf16>
    %c144 = arith.constant 144 : index
    %c0_4 = arith.constant 0 : index
    %4 = vector.load %arg1[%c144, %c0_4] : memref<176x128xbf16, #tpu.memory_space<vmem>>, vector<32x128xbf16>
    %c0_5 = arith.constant 0 : index
    %c0_6 = arith.constant 0 : index
    %5 = vector.load %arg2[%c0_5, %c0_6] : memref<8x128xf32, #tpu.memory_space<vmem>>, vector<1x128xf32>
    %c1 = arith.constant 1 : index
    %c0_7 = arith.constant 0 : index
    %6 = vector.load %arg2[%c1, %c0_7] : memref<8x128xf32, #tpu.memory_space<vmem>>, vector<1x128xf32>
    %c2 = arith.constant 2 : index
    %c0_8 = arith.constant 0 : index
    %7 = vector.load %arg2[%c2, %c0_8] : memref<8x128xf32, #tpu.memory_space<vmem>>, vector<1x128xf32>
    %c3 = arith.constant 3 : index
    %c0_9 = arith.constant 0 : index
    %8 = vector.load %arg2[%c3, %c0_9] : memref<8x128xf32, #tpu.memory_space<vmem>>, vector<1x128xf32>
    %c0_10 = arith.constant 0 : index
    %c0_11 = arith.constant 0 : index
    %9 = vector.load %arg0[%c0_10, %c0_11] : memref<64x16xf32, #tpu.memory_space<vmem>>, vector<64x16xf32>
    %10 = arith.truncf %9 : vector<64x16xf32> to vector<64x16xbf16>
    %cst = arith.constant dense<0.000000e+00> : vector<64x128xf32>
    %11 = tpu.matmul %10, %0, %cst {dimension_numbers = #tpu.dot_dimension_numbers<[1], [0], [0], [1], [0, 0, 1, 1], [], []>} : vector<64x16xbf16>, vector<16x128xbf16>, vector<64x128xf32> -> vector<64x128xf32>
    %12 = vector.broadcast %5 : vector<1x128xf32> to vector<64x128xf32>
    %13 = arith.addf %11, %12 : vector<64x128xf32>
    %cst_12 = arith.constant 0.000000e+00 : f32
    %14 = vector.broadcast %cst_12 : f32 to vector<8x32xf32>
    %cst_13 = arith.constant 0.000000e+00 : f32
    %15 = vector.broadcast %cst_13 : f32 to vector<8x32xf32>
    %cst_14 = arith.constant 0.000000e+00 : f32
    %16 = vector.broadcast %cst_14 : f32 to vector<8x32xf32>
    %cst_15 = arith.constant 0.000000e+00 : f32
    %17 = vector.broadcast %cst_15 : f32 to vector<8x32xf32>
    %18 = vector.extract_strided_slice %13 {offsets = [0, 0], sizes = [8, 128], strides = [1, 1]} : vector<64x128xf32> to vector<8x128xf32>
    %19 = vector.extract_strided_slice %13 {offsets = [8, 0], sizes = [8, 128], strides = [1, 1]} : vector<64x128xf32> to vector<8x128xf32>
    %20 = vector.extract_strided_slice %13 {offsets = [16, 0], sizes = [8, 128], strides = [1, 1]} : vector<64x128xf32> to vector<8x128xf32>
    %21 = vector.extract_strided_slice %13 {offsets = [24, 0], sizes = [8, 128], strides = [1, 1]} : vector<64x128xf32> to vector<8x128xf32>
    %22 = vector.extract_strided_slice %13 {offsets = [32, 0], sizes = [8, 128], strides = [1, 1]} : vector<64x128xf32> to vector<8x128xf32>
    %23 = vector.extract_strided_slice %13 {offsets = [40, 0], sizes = [8, 128], strides = [1, 1]} : vector<64x128xf32> to vector<8x128xf32>
    %24 = vector.extract_strided_slice %13 {offsets = [48, 0], sizes = [8, 128], strides = [1, 1]} : vector<64x128xf32> to vector<8x128xf32>
    %25 = vector.extract_strided_slice %13 {offsets = [56, 0], sizes = [8, 128], strides = [1, 1]} : vector<64x128xf32> to vector<8x128xf32>
    %26 = arith.truncf %14 : vector<8x32xf32> to vector<8x32xbf16>
    %cst_16 = arith.constant dense<0.000000e+00> : vector<8x128xf32>
    %27 = tpu.matmul %26, %1, %cst_16 {dimension_numbers = #tpu.dot_dimension_numbers<[1], [0], [0], [1], [0, 0, 1, 1], [], []>} : vector<8x32xbf16>, vector<32x128xbf16>, vector<8x128xf32> -> vector<8x128xf32>
    %28 = arith.addf %18, %27 : vector<8x128xf32>
    %29 = arith.negf %28 : vector<8x128xf32>
    %30 = math.exp %29 : vector<8x128xf32>
    %cst_17 = arith.constant 1.000000e+00 : f32
    %31 = vector.broadcast %cst_17 : f32 to vector<8x128xf32>
    %32 = arith.addf %31, %30 : vector<8x128xf32>
    %33 = arith.divf %31, %32 : vector<8x128xf32>
    %34 = vector.extract_strided_slice %33 {offsets = [0, 0], sizes = [8, 32], strides = [1, 1]} : vector<8x128xf32> to vector<8x32xf32>
    %35 = vector.extract_strided_slice %33 {offsets = [0, 32], sizes = [8, 32], strides = [1, 1]} : vector<8x128xf32> to vector<8x32xf32>
    %36 = vector.extract_strided_slice %33 {offsets = [0, 64], sizes = [8, 32], strides = [1, 1]} : vector<8x128xf32> to vector<8x32xf32>
    %cst_18 = arith.constant 2.000000e+00 : f32
    %37 = vector.broadcast %cst_18 : f32 to vector<8x32xf32>
    %38 = arith.mulf %37, %36 : vector<8x32xf32>
    %cst_19 = arith.constant 1.000000e+00 : f32
    %39 = vector.broadcast %cst_19 : f32 to vector<8x32xf32>
    %40 = arith.subf %38, %39 : vector<8x32xf32>
    %41 = vector.extract_strided_slice %33 {offsets = [0, 96], sizes = [8, 32], strides = [1, 1]} : vector<8x128xf32> to vector<8x32xf32>
    %42 = arith.mulf %35, %16 : vector<8x32xf32>
    %43 = arith.mulf %34, %40 : vector<8x32xf32>
    %44 = arith.addf %42, %43 : vector<8x32xf32>
    %45 = math.tanh %44 : vector<8x32xf32>
    %46 = arith.mulf %41, %45 : vector<8x32xf32>
    %47 = tpu.concatenate %46, %15 in 1 : vector<8x32xf32>, vector<8x32xf32> -> vector<8x64xf32>
    %48 = arith.truncf %47 : vector<8x64xf32> to vector<8x64xbf16>
    %cst_20 = arith.constant dense<0.000000e+00> : vector<8x128xf32>
    %49 = tpu.matmul %48, %2, %cst_20 {dimension_numbers = #tpu.dot_dimension_numbers<[1], [0], [0], [1], [0, 0, 1, 1], [], []>} : vector<8x64xbf16>, vector<64x128xbf16>, vector<8x128xf32> -> vector<8x128xf32>
    %50 = vector.broadcast %6 : vector<1x128xf32> to vector<8x128xf32>
    %51 = arith.addf %49, %50 : vector<8x128xf32>
    %52 = arith.negf %51 : vector<8x128xf32>
    %53 = math.exp %52 : vector<8x128xf32>
    %cst_21 = arith.constant 1.000000e+00 : f32
    %54 = vector.broadcast %cst_21 : f32 to vector<8x128xf32>
    %55 = arith.addf %54, %53 : vector<8x128xf32>
    %56 = arith.divf %54, %55 : vector<8x128xf32>
    %57 = vector.extract_strided_slice %56 {offsets = [0, 0], sizes = [8, 32], strides = [1, 1]} : vector<8x128xf32> to vector<8x32xf32>
    %58 = vector.extract_strided_slice %56 {offsets = [0, 32], sizes = [8, 32], strides = [1, 1]} : vector<8x128xf32> to vector<8x32xf32>
    %59 = vector.extract_strided_slice %56 {offsets = [0, 64], sizes = [8, 32], strides = [1, 1]} : vector<8x128xf32> to vector<8x32xf32>
    %cst_22 = arith.constant 2.000000e+00 : f32
    %60 = vector.broadcast %cst_22 : f32 to vector<8x32xf32>
    %61 = arith.mulf %60, %59 : vector<8x32xf32>
    %cst_23 = arith.constant 1.000000e+00 : f32
    %62 = vector.broadcast %cst_23 : f32 to vector<8x32xf32>
    %63 = arith.subf %61, %62 : vector<8x32xf32>
    %64 = vector.extract_strided_slice %56 {offsets = [0, 96], sizes = [8, 32], strides = [1, 1]} : vector<8x128xf32> to vector<8x32xf32>
    %65 = arith.mulf %58, %17 : vector<8x32xf32>
    %66 = arith.mulf %57, %63 : vector<8x32xf32>
    %67 = arith.addf %65, %66 : vector<8x32xf32>
    %68 = math.tanh %67 : vector<8x32xf32>
    %69 = arith.mulf %64, %68 : vector<8x32xf32>
    %70 = arith.truncf %46 : vector<8x32xf32> to vector<8x32xbf16>
    %cst_24 = arith.constant dense<0.000000e+00> : vector<8x128xf32>
    %71 = tpu.matmul %70, %1, %cst_24 {dimension_numbers = #tpu.dot_dimension_numbers<[1], [0], [0], [1], [0, 0, 1, 1], [], []>} : vector<8x32xbf16>, vector<32x128xbf16>, vector<8x128xf32> -> vector<8x128xf32>
    %72 = arith.addf %19, %71 : vector<8x128xf32>
    %73 = arith.negf %72 : vector<8x128xf32>
    %74 = math.exp %73 : vector<8x128xf32>
    %cst_25 = arith.constant 1.000000e+00 : f32
    %75 = vector.broadcast %cst_25 : f32 to vector<8x128xf32>
    %76 = arith.addf %75, %74 : vector<8x128xf32>
    %77 = arith.divf %75, %76 : vector<8x128xf32>
    %78 = vector.extract_strided_slice %77 {offsets = [0, 0], sizes = [8, 32], strides = [1, 1]} : vector<8x128xf32> to vector<8x32xf32>
    %79 = vector.extract_strided_slice %77 {offsets = [0, 32], sizes = [8, 32], strides = [1, 1]} : vector<8x128xf32> to vector<8x32xf32>
    %80 = vector.extract_strided_slice %77 {offsets = [0, 64], sizes = [8, 32], strides = [1, 1]} : vector<8x128xf32> to vector<8x32xf32>
    %cst_26 = arith.constant 2.000000e+00 : f32
    %81 = vector.broadcast %cst_26 : f32 to vector<8x32xf32>
    %82 = arith.mulf %81, %80 : vector<8x32xf32>
    %cst_27 = arith.constant 1.000000e+00 : f32
    %83 = vector.broadcast %cst_27 : f32 to vector<8x32xf32>
    %84 = arith.subf %82, %83 : vector<8x32xf32>
    %85 = vector.extract_strided_slice %77 {offsets = [0, 96], sizes = [8, 32], strides = [1, 1]} : vector<8x128xf32> to vector<8x32xf32>
    %86 = arith.mulf %79, %44 : vector<8x32xf32>
    %87 = arith.mulf %78, %84 : vector<8x32xf32>
    %88 = arith.addf %86, %87 : vector<8x32xf32>
    %89 = math.tanh %88 : vector<8x32xf32>
    %90 = arith.mulf %85, %89 : vector<8x32xf32>
    %91 = tpu.concatenate %90, %69 in 1 : vector<8x32xf32>, vector<8x32xf32> -> vector<8x64xf32>
    %92 = arith.truncf %91 : vector<8x64xf32> to vector<8x64xbf16>
    %cst_28 = arith.constant dense<0.000000e+00> : vector<8x128xf32>
    %93 = tpu.matmul %92, %2, %cst_28 {dimension_numbers = #tpu.dot_dimension_numbers<[1], [0], [0], [1], [0, 0, 1, 1], [], []>} : vector<8x64xbf16>, vector<64x128xbf16>, vector<8x128xf32> -> vector<8x128xf32>
    %94 = vector.broadcast %6 : vector<1x128xf32> to vector<8x128xf32>
    %95 = arith.addf %93, %94 : vector<8x128xf32>
    %96 = arith.negf %95 : vector<8x128xf32>
    %97 = math.exp %96 : vector<8x128xf32>
    %cst_29 = arith.constant 1.000000e+00 : f32
    %98 = vector.broadcast %cst_29 : f32 to vector<8x128xf32>
    %99 = arith.addf %98, %97 : vector<8x128xf32>
    %100 = arith.divf %98, %99 : vector<8x128xf32>
    %101 = vector.extract_strided_slice %100 {offsets = [0, 0], sizes = [8, 32], strides = [1, 1]} : vector<8x128xf32> to vector<8x32xf32>
    %102 = vector.extract_strided_slice %100 {offsets = [0, 32], sizes = [8, 32], strides = [1, 1]} : vector<8x128xf32> to vector<8x32xf32>
    %103 = vector.extract_strided_slice %100 {offsets = [0, 64], sizes = [8, 32], strides = [1, 1]} : vector<8x128xf32> to vector<8x32xf32>
    %cst_30 = arith.constant 2.000000e+00 : f32
    %104 = vector.broadcast %cst_30 : f32 to vector<8x32xf32>
    %105 = arith.mulf %104, %103 : vector<8x32xf32>
    %cst_31 = arith.constant 1.000000e+00 : f32
    %106 = vector.broadcast %cst_31 : f32 to vector<8x32xf32>
    %107 = arith.subf %105, %106 : vector<8x32xf32>
    %108 = vector.extract_strided_slice %100 {offsets = [0, 96], sizes = [8, 32], strides = [1, 1]} : vector<8x128xf32> to vector<8x32xf32>
    %109 = arith.mulf %102, %67 : vector<8x32xf32>
    %110 = arith.mulf %101, %107 : vector<8x32xf32>
    %111 = arith.addf %109, %110 : vector<8x32xf32>
    %112 = math.tanh %111 : vector<8x32xf32>
    %113 = arith.mulf %108, %112 : vector<8x32xf32>
    %114 = arith.truncf %90 : vector<8x32xf32> to vector<8x32xbf16>
    %cst_32 = arith.constant dense<0.000000e+00> : vector<8x128xf32>
    %115 = tpu.matmul %114, %1, %cst_32 {dimension_numbers = #tpu.dot_dimension_numbers<[1], [0], [0], [1], [0, 0, 1, 1], [], []>} : vector<8x32xbf16>, vector<32x128xbf16>, vector<8x128xf32> -> vector<8x128xf32>
    %116 = arith.addf %20, %115 : vector<8x128xf32>
    %117 = arith.negf %116 : vector<8x128xf32>
    %118 = math.exp %117 : vector<8x128xf32>
    %cst_33 = arith.constant 1.000000e+00 : f32
    %119 = vector.broadcast %cst_33 : f32 to vector<8x128xf32>
    %120 = arith.addf %119, %118 : vector<8x128xf32>
    %121 = arith.divf %119, %120 : vector<8x128xf32>
    %122 = vector.extract_strided_slice %121 {offsets = [0, 0], sizes = [8, 32], strides = [1, 1]} : vector<8x128xf32> to vector<8x32xf32>
    %123 = vector.extract_strided_slice %121 {offsets = [0, 32], sizes = [8, 32], strides = [1, 1]} : vector<8x128xf32> to vector<8x32xf32>
    %124 = vector.extract_strided_slice %121 {offsets = [0, 64], sizes = [8, 32], strides = [1, 1]} : vector<8x128xf32> to vector<8x32xf32>
    %cst_34 = arith.constant 2.000000e+00 : f32
    %125 = vector.broadcast %cst_34 : f32 to vector<8x32xf32>
    %126 = arith.mulf %125, %124 : vector<8x32xf32>
    %cst_35 = arith.constant 1.000000e+00 : f32
    %127 = vector.broadcast %cst_35 : f32 to vector<8x32xf32>
    %128 = arith.subf %126, %127 : vector<8x32xf32>
    %129 = vector.extract_strided_slice %121 {offsets = [0, 96], sizes = [8, 32], strides = [1, 1]} : vector<8x128xf32> to vector<8x32xf32>
    %130 = arith.mulf %123, %88 : vector<8x32xf32>
    %131 = arith.mulf %122, %128 : vector<8x32xf32>
    %132 = arith.addf %130, %131 : vector<8x32xf32>
    %133 = math.tanh %132 : vector<8x32xf32>
    %134 = arith.mulf %129, %133 : vector<8x32xf32>
    %135 = tpu.concatenate %134, %113 in 1 : vector<8x32xf32>, vector<8x32xf32> -> vector<8x64xf32>
    %136 = arith.truncf %135 : vector<8x64xf32> to vector<8x64xbf16>
    %cst_36 = arith.constant dense<0.000000e+00> : vector<8x128xf32>
    %137 = tpu.matmul %136, %2, %cst_36 {dimension_numbers = #tpu.dot_dimension_numbers<[1], [0], [0], [1], [0, 0, 1, 1], [], []>} : vector<8x64xbf16>, vector<64x128xbf16>, vector<8x128xf32> -> vector<8x128xf32>
    %138 = vector.broadcast %6 : vector<1x128xf32> to vector<8x128xf32>
    %139 = arith.addf %137, %138 : vector<8x128xf32>
    %140 = arith.negf %139 : vector<8x128xf32>
    %141 = math.exp %140 : vector<8x128xf32>
    %cst_37 = arith.constant 1.000000e+00 : f32
    %142 = vector.broadcast %cst_37 : f32 to vector<8x128xf32>
    %143 = arith.addf %142, %141 : vector<8x128xf32>
    %144 = arith.divf %142, %143 : vector<8x128xf32>
    %145 = vector.extract_strided_slice %144 {offsets = [0, 0], sizes = [8, 32], strides = [1, 1]} : vector<8x128xf32> to vector<8x32xf32>
    %146 = vector.extract_strided_slice %144 {offsets = [0, 32], sizes = [8, 32], strides = [1, 1]} : vector<8x128xf32> to vector<8x32xf32>
    %147 = vector.extract_strided_slice %144 {offsets = [0, 64], sizes = [8, 32], strides = [1, 1]} : vector<8x128xf32> to vector<8x32xf32>
    %cst_38 = arith.constant 2.000000e+00 : f32
    %148 = vector.broadcast %cst_38 : f32 to vector<8x32xf32>
    %149 = arith.mulf %148, %147 : vector<8x32xf32>
    %cst_39 = arith.constant 1.000000e+00 : f32
    %150 = vector.broadcast %cst_39 : f32 to vector<8x32xf32>
    %151 = arith.subf %149, %150 : vector<8x32xf32>
    %152 = vector.extract_strided_slice %144 {offsets = [0, 96], sizes = [8, 32], strides = [1, 1]} : vector<8x128xf32> to vector<8x32xf32>
    %153 = arith.mulf %146, %111 : vector<8x32xf32>
    %154 = arith.mulf %145, %151 : vector<8x32xf32>
    %155 = arith.addf %153, %154 : vector<8x32xf32>
    %156 = math.tanh %155 : vector<8x32xf32>
    %157 = arith.mulf %152, %156 : vector<8x32xf32>
    %158 = arith.truncf %134 : vector<8x32xf32> to vector<8x32xbf16>
    %cst_40 = arith.constant dense<0.000000e+00> : vector<8x128xf32>
    %159 = tpu.matmul %158, %1, %cst_40 {dimension_numbers = #tpu.dot_dimension_numbers<[1], [0], [0], [1], [0, 0, 1, 1], [], []>} : vector<8x32xbf16>, vector<32x128xbf16>, vector<8x128xf32> -> vector<8x128xf32>
    %160 = arith.addf %21, %159 : vector<8x128xf32>
    %161 = arith.negf %160 : vector<8x128xf32>
    %162 = math.exp %161 : vector<8x128xf32>
    %cst_41 = arith.constant 1.000000e+00 : f32
    %163 = vector.broadcast %cst_41 : f32 to vector<8x128xf32>
    %164 = arith.addf %163, %162 : vector<8x128xf32>
    %165 = arith.divf %163, %164 : vector<8x128xf32>
    %166 = vector.extract_strided_slice %165 {offsets = [0, 0], sizes = [8, 32], strides = [1, 1]} : vector<8x128xf32> to vector<8x32xf32>
    %167 = vector.extract_strided_slice %165 {offsets = [0, 32], sizes = [8, 32], strides = [1, 1]} : vector<8x128xf32> to vector<8x32xf32>
    %168 = vector.extract_strided_slice %165 {offsets = [0, 64], sizes = [8, 32], strides = [1, 1]} : vector<8x128xf32> to vector<8x32xf32>
    %cst_42 = arith.constant 2.000000e+00 : f32
    %169 = vector.broadcast %cst_42 : f32 to vector<8x32xf32>
    %170 = arith.mulf %169, %168 : vector<8x32xf32>
    %cst_43 = arith.constant 1.000000e+00 : f32
    %171 = vector.broadcast %cst_43 : f32 to vector<8x32xf32>
    %172 = arith.subf %170, %171 : vector<8x32xf32>
    %173 = vector.extract_strided_slice %165 {offsets = [0, 96], sizes = [8, 32], strides = [1, 1]} : vector<8x128xf32> to vector<8x32xf32>
    %174 = arith.mulf %167, %132 : vector<8x32xf32>
    %175 = arith.mulf %166, %172 : vector<8x32xf32>
    %176 = arith.addf %174, %175 : vector<8x32xf32>
    %177 = math.tanh %176 : vector<8x32xf32>
    %178 = arith.mulf %173, %177 : vector<8x32xf32>
    %179 = tpu.concatenate %178, %157 in 1 : vector<8x32xf32>, vector<8x32xf32> -> vector<8x64xf32>
    %180 = arith.truncf %179 : vector<8x64xf32> to vector<8x64xbf16>
    %cst_44 = arith.constant dense<0.000000e+00> : vector<8x128xf32>
    %181 = tpu.matmul %180, %2, %cst_44 {dimension_numbers = #tpu.dot_dimension_numbers<[1], [0], [0], [1], [0, 0, 1, 1], [], []>} : vector<8x64xbf16>, vector<64x128xbf16>, vector<8x128xf32> -> vector<8x128xf32>
    %182 = vector.broadcast %6 : vector<1x128xf32> to vector<8x128xf32>
    %183 = arith.addf %181, %182 : vector<8x128xf32>
    %184 = arith.negf %183 : vector<8x128xf32>
    %185 = math.exp %184 : vector<8x128xf32>
    %cst_45 = arith.constant 1.000000e+00 : f32
    %186 = vector.broadcast %cst_45 : f32 to vector<8x128xf32>
    %187 = arith.addf %186, %185 : vector<8x128xf32>
    %188 = arith.divf %186, %187 : vector<8x128xf32>
    %189 = vector.extract_strided_slice %188 {offsets = [0, 0], sizes = [8, 32], strides = [1, 1]} : vector<8x128xf32> to vector<8x32xf32>
    %190 = vector.extract_strided_slice %188 {offsets = [0, 32], sizes = [8, 32], strides = [1, 1]} : vector<8x128xf32> to vector<8x32xf32>
    %191 = vector.extract_strided_slice %188 {offsets = [0, 64], sizes = [8, 32], strides = [1, 1]} : vector<8x128xf32> to vector<8x32xf32>
    %cst_46 = arith.constant 2.000000e+00 : f32
    %192 = vector.broadcast %cst_46 : f32 to vector<8x32xf32>
    %193 = arith.mulf %192, %191 : vector<8x32xf32>
    %cst_47 = arith.constant 1.000000e+00 : f32
    %194 = vector.broadcast %cst_47 : f32 to vector<8x32xf32>
    %195 = arith.subf %193, %194 : vector<8x32xf32>
    %196 = vector.extract_strided_slice %188 {offsets = [0, 96], sizes = [8, 32], strides = [1, 1]} : vector<8x128xf32> to vector<8x32xf32>
    %197 = arith.mulf %190, %155 : vector<8x32xf32>
    %198 = arith.mulf %189, %195 : vector<8x32xf32>
    %199 = arith.addf %197, %198 : vector<8x32xf32>
    %200 = math.tanh %199 : vector<8x32xf32>
    %201 = arith.mulf %196, %200 : vector<8x32xf32>
    %202 = arith.truncf %178 : vector<8x32xf32> to vector<8x32xbf16>
    %cst_48 = arith.constant dense<0.000000e+00> : vector<8x128xf32>
    %203 = tpu.matmul %202, %1, %cst_48 {dimension_numbers = #tpu.dot_dimension_numbers<[1], [0], [0], [1], [0, 0, 1, 1], [], []>} : vector<8x32xbf16>, vector<32x128xbf16>, vector<8x128xf32> -> vector<8x128xf32>
    %204 = arith.addf %22, %203 : vector<8x128xf32>
    %205 = arith.negf %204 : vector<8x128xf32>
    %206 = math.exp %205 : vector<8x128xf32>
    %cst_49 = arith.constant 1.000000e+00 : f32
    %207 = vector.broadcast %cst_49 : f32 to vector<8x128xf32>
    %208 = arith.addf %207, %206 : vector<8x128xf32>
    %209 = arith.divf %207, %208 : vector<8x128xf32>
    %210 = vector.extract_strided_slice %209 {offsets = [0, 0], sizes = [8, 32], strides = [1, 1]} : vector<8x128xf32> to vector<8x32xf32>
    %211 = vector.extract_strided_slice %209 {offsets = [0, 32], sizes = [8, 32], strides = [1, 1]} : vector<8x128xf32> to vector<8x32xf32>
    %212 = vector.extract_strided_slice %209 {offsets = [0, 64], sizes = [8, 32], strides = [1, 1]} : vector<8x128xf32> to vector<8x32xf32>
    %cst_50 = arith.constant 2.000000e+00 : f32
    %213 = vector.broadcast %cst_50 : f32 to vector<8x32xf32>
    %214 = arith.mulf %213, %212 : vector<8x32xf32>
    %cst_51 = arith.constant 1.000000e+00 : f32
    %215 = vector.broadcast %cst_51 : f32 to vector<8x32xf32>
    %216 = arith.subf %214, %215 : vector<8x32xf32>
    %217 = vector.extract_strided_slice %209 {offsets = [0, 96], sizes = [8, 32], strides = [1, 1]} : vector<8x128xf32> to vector<8x32xf32>
    %218 = arith.mulf %211, %176 : vector<8x32xf32>
    %219 = arith.mulf %210, %216 : vector<8x32xf32>
    %220 = arith.addf %218, %219 : vector<8x32xf32>
    %221 = math.tanh %220 : vector<8x32xf32>
    %222 = arith.mulf %217, %221 : vector<8x32xf32>
    %223 = tpu.concatenate %222, %201 in 1 : vector<8x32xf32>, vector<8x32xf32> -> vector<8x64xf32>
    %224 = arith.truncf %223 : vector<8x64xf32> to vector<8x64xbf16>
    %cst_52 = arith.constant dense<0.000000e+00> : vector<8x128xf32>
    %225 = tpu.matmul %224, %2, %cst_52 {dimension_numbers = #tpu.dot_dimension_numbers<[1], [0], [0], [1], [0, 0, 1, 1], [], []>} : vector<8x64xbf16>, vector<64x128xbf16>, vector<8x128xf32> -> vector<8x128xf32>
    %226 = vector.broadcast %6 : vector<1x128xf32> to vector<8x128xf32>
    %227 = arith.addf %225, %226 : vector<8x128xf32>
    %228 = arith.negf %227 : vector<8x128xf32>
    %229 = math.exp %228 : vector<8x128xf32>
    %cst_53 = arith.constant 1.000000e+00 : f32
    %230 = vector.broadcast %cst_53 : f32 to vector<8x128xf32>
    %231 = arith.addf %230, %229 : vector<8x128xf32>
    %232 = arith.divf %230, %231 : vector<8x128xf32>
    %233 = vector.extract_strided_slice %232 {offsets = [0, 0], sizes = [8, 32], strides = [1, 1]} : vector<8x128xf32> to vector<8x32xf32>
    %234 = vector.extract_strided_slice %232 {offsets = [0, 32], sizes = [8, 32], strides = [1, 1]} : vector<8x128xf32> to vector<8x32xf32>
    %235 = vector.extract_strided_slice %232 {offsets = [0, 64], sizes = [8, 32], strides = [1, 1]} : vector<8x128xf32> to vector<8x32xf32>
    %cst_54 = arith.constant 2.000000e+00 : f32
    %236 = vector.broadcast %cst_54 : f32 to vector<8x32xf32>
    %237 = arith.mulf %236, %235 : vector<8x32xf32>
    %cst_55 = arith.constant 1.000000e+00 : f32
    %238 = vector.broadcast %cst_55 : f32 to vector<8x32xf32>
    %239 = arith.subf %237, %238 : vector<8x32xf32>
    %240 = vector.extract_strided_slice %232 {offsets = [0, 96], sizes = [8, 32], strides = [1, 1]} : vector<8x128xf32> to vector<8x32xf32>
    %241 = arith.mulf %234, %199 : vector<8x32xf32>
    %242 = arith.mulf %233, %239 : vector<8x32xf32>
    %243 = arith.addf %241, %242 : vector<8x32xf32>
    %244 = math.tanh %243 : vector<8x32xf32>
    %245 = arith.mulf %240, %244 : vector<8x32xf32>
    %246 = arith.truncf %222 : vector<8x32xf32> to vector<8x32xbf16>
    %cst_56 = arith.constant dense<0.000000e+00> : vector<8x128xf32>
    %247 = tpu.matmul %246, %1, %cst_56 {dimension_numbers = #tpu.dot_dimension_numbers<[1], [0], [0], [1], [0, 0, 1, 1], [], []>} : vector<8x32xbf16>, vector<32x128xbf16>, vector<8x128xf32> -> vector<8x128xf32>
    %248 = arith.addf %23, %247 : vector<8x128xf32>
    %249 = arith.negf %248 : vector<8x128xf32>
    %250 = math.exp %249 : vector<8x128xf32>
    %cst_57 = arith.constant 1.000000e+00 : f32
    %251 = vector.broadcast %cst_57 : f32 to vector<8x128xf32>
    %252 = arith.addf %251, %250 : vector<8x128xf32>
    %253 = arith.divf %251, %252 : vector<8x128xf32>
    %254 = vector.extract_strided_slice %253 {offsets = [0, 0], sizes = [8, 32], strides = [1, 1]} : vector<8x128xf32> to vector<8x32xf32>
    %255 = vector.extract_strided_slice %253 {offsets = [0, 32], sizes = [8, 32], strides = [1, 1]} : vector<8x128xf32> to vector<8x32xf32>
    %256 = vector.extract_strided_slice %253 {offsets = [0, 64], sizes = [8, 32], strides = [1, 1]} : vector<8x128xf32> to vector<8x32xf32>
    %cst_58 = arith.constant 2.000000e+00 : f32
    %257 = vector.broadcast %cst_58 : f32 to vector<8x32xf32>
    %258 = arith.mulf %257, %256 : vector<8x32xf32>
    %cst_59 = arith.constant 1.000000e+00 : f32
    %259 = vector.broadcast %cst_59 : f32 to vector<8x32xf32>
    %260 = arith.subf %258, %259 : vector<8x32xf32>
    %261 = vector.extract_strided_slice %253 {offsets = [0, 96], sizes = [8, 32], strides = [1, 1]} : vector<8x128xf32> to vector<8x32xf32>
    %262 = arith.mulf %255, %220 : vector<8x32xf32>
    %263 = arith.mulf %254, %260 : vector<8x32xf32>
    %264 = arith.addf %262, %263 : vector<8x32xf32>
    %265 = math.tanh %264 : vector<8x32xf32>
    %266 = arith.mulf %261, %265 : vector<8x32xf32>
    %267 = tpu.concatenate %266, %245 in 1 : vector<8x32xf32>, vector<8x32xf32> -> vector<8x64xf32>
    %268 = arith.truncf %267 : vector<8x64xf32> to vector<8x64xbf16>
    %cst_60 = arith.constant dense<0.000000e+00> : vector<8x128xf32>
    %269 = tpu.matmul %268, %2, %cst_60 {dimension_numbers = #tpu.dot_dimension_numbers<[1], [0], [0], [1], [0, 0, 1, 1], [], []>} : vector<8x64xbf16>, vector<64x128xbf16>, vector<8x128xf32> -> vector<8x128xf32>
    %270 = vector.broadcast %6 : vector<1x128xf32> to vector<8x128xf32>
    %271 = arith.addf %269, %270 : vector<8x128xf32>
    %272 = arith.negf %271 : vector<8x128xf32>
    %273 = math.exp %272 : vector<8x128xf32>
    %cst_61 = arith.constant 1.000000e+00 : f32
    %274 = vector.broadcast %cst_61 : f32 to vector<8x128xf32>
    %275 = arith.addf %274, %273 : vector<8x128xf32>
    %276 = arith.divf %274, %275 : vector<8x128xf32>
    %277 = vector.extract_strided_slice %276 {offsets = [0, 0], sizes = [8, 32], strides = [1, 1]} : vector<8x128xf32> to vector<8x32xf32>
    %278 = vector.extract_strided_slice %276 {offsets = [0, 32], sizes = [8, 32], strides = [1, 1]} : vector<8x128xf32> to vector<8x32xf32>
    %279 = vector.extract_strided_slice %276 {offsets = [0, 64], sizes = [8, 32], strides = [1, 1]} : vector<8x128xf32> to vector<8x32xf32>
    %cst_62 = arith.constant 2.000000e+00 : f32
    %280 = vector.broadcast %cst_62 : f32 to vector<8x32xf32>
    %281 = arith.mulf %280, %279 : vector<8x32xf32>
    %cst_63 = arith.constant 1.000000e+00 : f32
    %282 = vector.broadcast %cst_63 : f32 to vector<8x32xf32>
    %283 = arith.subf %281, %282 : vector<8x32xf32>
    %284 = vector.extract_strided_slice %276 {offsets = [0, 96], sizes = [8, 32], strides = [1, 1]} : vector<8x128xf32> to vector<8x32xf32>
    %285 = arith.mulf %278, %243 : vector<8x32xf32>
    %286 = arith.mulf %277, %283 : vector<8x32xf32>
    %287 = arith.addf %285, %286 : vector<8x32xf32>
    %288 = math.tanh %287 : vector<8x32xf32>
    %289 = arith.mulf %284, %288 : vector<8x32xf32>
    %290 = arith.truncf %266 : vector<8x32xf32> to vector<8x32xbf16>
    %cst_64 = arith.constant dense<0.000000e+00> : vector<8x128xf32>
    %291 = tpu.matmul %290, %1, %cst_64 {dimension_numbers = #tpu.dot_dimension_numbers<[1], [0], [0], [1], [0, 0, 1, 1], [], []>} : vector<8x32xbf16>, vector<32x128xbf16>, vector<8x128xf32> -> vector<8x128xf32>
    %292 = arith.addf %24, %291 : vector<8x128xf32>
    %293 = arith.negf %292 : vector<8x128xf32>
    %294 = math.exp %293 : vector<8x128xf32>
    %cst_65 = arith.constant 1.000000e+00 : f32
    %295 = vector.broadcast %cst_65 : f32 to vector<8x128xf32>
    %296 = arith.addf %295, %294 : vector<8x128xf32>
    %297 = arith.divf %295, %296 : vector<8x128xf32>
    %298 = vector.extract_strided_slice %297 {offsets = [0, 0], sizes = [8, 32], strides = [1, 1]} : vector<8x128xf32> to vector<8x32xf32>
    %299 = vector.extract_strided_slice %297 {offsets = [0, 32], sizes = [8, 32], strides = [1, 1]} : vector<8x128xf32> to vector<8x32xf32>
    %300 = vector.extract_strided_slice %297 {offsets = [0, 64], sizes = [8, 32], strides = [1, 1]} : vector<8x128xf32> to vector<8x32xf32>
    %cst_66 = arith.constant 2.000000e+00 : f32
    %301 = vector.broadcast %cst_66 : f32 to vector<8x32xf32>
    %302 = arith.mulf %301, %300 : vector<8x32xf32>
    %cst_67 = arith.constant 1.000000e+00 : f32
    %303 = vector.broadcast %cst_67 : f32 to vector<8x32xf32>
    %304 = arith.subf %302, %303 : vector<8x32xf32>
    %305 = vector.extract_strided_slice %297 {offsets = [0, 96], sizes = [8, 32], strides = [1, 1]} : vector<8x128xf32> to vector<8x32xf32>
    %306 = arith.mulf %299, %264 : vector<8x32xf32>
    %307 = arith.mulf %298, %304 : vector<8x32xf32>
    %308 = arith.addf %306, %307 : vector<8x32xf32>
    %309 = math.tanh %308 : vector<8x32xf32>
    %310 = arith.mulf %305, %309 : vector<8x32xf32>
    %311 = tpu.concatenate %310, %289 in 1 : vector<8x32xf32>, vector<8x32xf32> -> vector<8x64xf32>
    %312 = arith.truncf %311 : vector<8x64xf32> to vector<8x64xbf16>
    %cst_68 = arith.constant dense<0.000000e+00> : vector<8x128xf32>
    %313 = tpu.matmul %312, %2, %cst_68 {dimension_numbers = #tpu.dot_dimension_numbers<[1], [0], [0], [1], [0, 0, 1, 1], [], []>} : vector<8x64xbf16>, vector<64x128xbf16>, vector<8x128xf32> -> vector<8x128xf32>
    %314 = vector.broadcast %6 : vector<1x128xf32> to vector<8x128xf32>
    %315 = arith.addf %313, %314 : vector<8x128xf32>
    %316 = arith.negf %315 : vector<8x128xf32>
    %317 = math.exp %316 : vector<8x128xf32>
    %cst_69 = arith.constant 1.000000e+00 : f32
    %318 = vector.broadcast %cst_69 : f32 to vector<8x128xf32>
    %319 = arith.addf %318, %317 : vector<8x128xf32>
    %320 = arith.divf %318, %319 : vector<8x128xf32>
    %321 = vector.extract_strided_slice %320 {offsets = [0, 0], sizes = [8, 32], strides = [1, 1]} : vector<8x128xf32> to vector<8x32xf32>
    %322 = vector.extract_strided_slice %320 {offsets = [0, 32], sizes = [8, 32], strides = [1, 1]} : vector<8x128xf32> to vector<8x32xf32>
    %323 = vector.extract_strided_slice %320 {offsets = [0, 64], sizes = [8, 32], strides = [1, 1]} : vector<8x128xf32> to vector<8x32xf32>
    %cst_70 = arith.constant 2.000000e+00 : f32
    %324 = vector.broadcast %cst_70 : f32 to vector<8x32xf32>
    %325 = arith.mulf %324, %323 : vector<8x32xf32>
    %cst_71 = arith.constant 1.000000e+00 : f32
    %326 = vector.broadcast %cst_71 : f32 to vector<8x32xf32>
    %327 = arith.subf %325, %326 : vector<8x32xf32>
    %328 = vector.extract_strided_slice %320 {offsets = [0, 96], sizes = [8, 32], strides = [1, 1]} : vector<8x128xf32> to vector<8x32xf32>
    %329 = arith.mulf %322, %287 : vector<8x32xf32>
    %330 = arith.mulf %321, %327 : vector<8x32xf32>
    %331 = arith.addf %329, %330 : vector<8x32xf32>
    %332 = math.tanh %331 : vector<8x32xf32>
    %333 = arith.mulf %328, %332 : vector<8x32xf32>
    %334 = arith.truncf %310 : vector<8x32xf32> to vector<8x32xbf16>
    %cst_72 = arith.constant dense<0.000000e+00> : vector<8x128xf32>
    %335 = tpu.matmul %334, %1, %cst_72 {dimension_numbers = #tpu.dot_dimension_numbers<[1], [0], [0], [1], [0, 0, 1, 1], [], []>} : vector<8x32xbf16>, vector<32x128xbf16>, vector<8x128xf32> -> vector<8x128xf32>
    %336 = arith.addf %25, %335 : vector<8x128xf32>
    %337 = arith.negf %336 : vector<8x128xf32>
    %338 = math.exp %337 : vector<8x128xf32>
    %cst_73 = arith.constant 1.000000e+00 : f32
    %339 = vector.broadcast %cst_73 : f32 to vector<8x128xf32>
    %340 = arith.addf %339, %338 : vector<8x128xf32>
    %341 = arith.divf %339, %340 : vector<8x128xf32>
    %342 = vector.extract_strided_slice %341 {offsets = [0, 0], sizes = [8, 32], strides = [1, 1]} : vector<8x128xf32> to vector<8x32xf32>
    %343 = vector.extract_strided_slice %341 {offsets = [0, 32], sizes = [8, 32], strides = [1, 1]} : vector<8x128xf32> to vector<8x32xf32>
    %344 = vector.extract_strided_slice %341 {offsets = [0, 64], sizes = [8, 32], strides = [1, 1]} : vector<8x128xf32> to vector<8x32xf32>
    %cst_74 = arith.constant 2.000000e+00 : f32
    %345 = vector.broadcast %cst_74 : f32 to vector<8x32xf32>
    %346 = arith.mulf %345, %344 : vector<8x32xf32>
    %cst_75 = arith.constant 1.000000e+00 : f32
    %347 = vector.broadcast %cst_75 : f32 to vector<8x32xf32>
    %348 = arith.subf %346, %347 : vector<8x32xf32>
    %349 = vector.extract_strided_slice %341 {offsets = [0, 96], sizes = [8, 32], strides = [1, 1]} : vector<8x128xf32> to vector<8x32xf32>
    %350 = arith.mulf %343, %308 : vector<8x32xf32>
    %351 = arith.mulf %342, %348 : vector<8x32xf32>
    %352 = arith.addf %350, %351 : vector<8x32xf32>
    %353 = math.tanh %352 : vector<8x32xf32>
    %354 = arith.mulf %349, %353 : vector<8x32xf32>
    %355 = tpu.concatenate %354, %333 in 1 : vector<8x32xf32>, vector<8x32xf32> -> vector<8x64xf32>
    %356 = arith.truncf %355 : vector<8x64xf32> to vector<8x64xbf16>
    %cst_76 = arith.constant dense<0.000000e+00> : vector<8x128xf32>
    %357 = tpu.matmul %356, %2, %cst_76 {dimension_numbers = #tpu.dot_dimension_numbers<[1], [0], [0], [1], [0, 0, 1, 1], [], []>} : vector<8x64xbf16>, vector<64x128xbf16>, vector<8x128xf32> -> vector<8x128xf32>
    %358 = vector.broadcast %6 : vector<1x128xf32> to vector<8x128xf32>
    %359 = arith.addf %357, %358 : vector<8x128xf32>
    %360 = arith.negf %359 : vector<8x128xf32>
    %361 = math.exp %360 : vector<8x128xf32>
    %cst_77 = arith.constant 1.000000e+00 : f32
    %362 = vector.broadcast %cst_77 : f32 to vector<8x128xf32>
    %363 = arith.addf %362, %361 : vector<8x128xf32>
    %364 = arith.divf %362, %363 : vector<8x128xf32>
    %365 = vector.extract_strided_slice %364 {offsets = [0, 0], sizes = [8, 32], strides = [1, 1]} : vector<8x128xf32> to vector<8x32xf32>
    %366 = vector.extract_strided_slice %364 {offsets = [0, 32], sizes = [8, 32], strides = [1, 1]} : vector<8x128xf32> to vector<8x32xf32>
    %367 = vector.extract_strided_slice %364 {offsets = [0, 64], sizes = [8, 32], strides = [1, 1]} : vector<8x128xf32> to vector<8x32xf32>
    %cst_78 = arith.constant 2.000000e+00 : f32
    %368 = vector.broadcast %cst_78 : f32 to vector<8x32xf32>
    %369 = arith.mulf %368, %367 : vector<8x32xf32>
    %cst_79 = arith.constant 1.000000e+00 : f32
    %370 = vector.broadcast %cst_79 : f32 to vector<8x32xf32>
    %371 = arith.subf %369, %370 : vector<8x32xf32>
    %372 = vector.extract_strided_slice %364 {offsets = [0, 96], sizes = [8, 32], strides = [1, 1]} : vector<8x128xf32> to vector<8x32xf32>
    %373 = arith.mulf %366, %331 : vector<8x32xf32>
    %374 = arith.mulf %365, %371 : vector<8x32xf32>
    %375 = arith.addf %373, %374 : vector<8x32xf32>
    %376 = math.tanh %375 : vector<8x32xf32>
    %377 = arith.mulf %372, %376 : vector<8x32xf32>
    %378 = vector.extract_strided_slice %13 {offsets = [0, 0], sizes = [8, 128], strides = [1, 1]} : vector<64x128xf32> to vector<8x128xf32>
    %379 = vector.extract_strided_slice %13 {offsets = [8, 0], sizes = [8, 128], strides = [1, 1]} : vector<64x128xf32> to vector<8x128xf32>
    %380 = vector.extract_strided_slice %13 {offsets = [16, 0], sizes = [8, 128], strides = [1, 1]} : vector<64x128xf32> to vector<8x128xf32>
    %381 = vector.extract_strided_slice %13 {offsets = [24, 0], sizes = [8, 128], strides = [1, 1]} : vector<64x128xf32> to vector<8x128xf32>
    %382 = vector.extract_strided_slice %13 {offsets = [32, 0], sizes = [8, 128], strides = [1, 1]} : vector<64x128xf32> to vector<8x128xf32>
    %383 = vector.extract_strided_slice %13 {offsets = [40, 0], sizes = [8, 128], strides = [1, 1]} : vector<64x128xf32> to vector<8x128xf32>
    %384 = vector.extract_strided_slice %13 {offsets = [48, 0], sizes = [8, 128], strides = [1, 1]} : vector<64x128xf32> to vector<8x128xf32>
    %385 = vector.extract_strided_slice %13 {offsets = [56, 0], sizes = [8, 128], strides = [1, 1]} : vector<64x128xf32> to vector<8x128xf32>
    %386 = arith.truncf %377 : vector<8x32xf32> to vector<8x32xbf16>
    %cst_80 = arith.constant dense<0.000000e+00> : vector<8x128xf32>
    %387 = tpu.matmul %386, %3, %cst_80 {dimension_numbers = #tpu.dot_dimension_numbers<[1], [0], [0], [1], [0, 0, 1, 1], [], []>} : vector<8x32xbf16>, vector<32x128xbf16>, vector<8x128xf32> -> vector<8x128xf32>
    %388 = vector.broadcast %7 : vector<1x128xf32> to vector<8x128xf32>
    %389 = arith.addf %387, %388 : vector<8x128xf32>
    %390 = arith.truncf %354 : vector<8x32xf32> to vector<8x32xbf16>
    %cst_81 = arith.constant dense<0.000000e+00> : vector<8x128xf32>
    %391 = tpu.matmul %390, %1, %cst_81 {dimension_numbers = #tpu.dot_dimension_numbers<[1], [0], [0], [1], [0, 0, 1, 1], [], []>} : vector<8x32xbf16>, vector<32x128xbf16>, vector<8x128xf32> -> vector<8x128xf32>
    %392 = arith.addf %378, %391 : vector<8x128xf32>
    %393 = arith.negf %392 : vector<8x128xf32>
    %394 = math.exp %393 : vector<8x128xf32>
    %cst_82 = arith.constant 1.000000e+00 : f32
    %395 = vector.broadcast %cst_82 : f32 to vector<8x128xf32>
    %396 = arith.addf %395, %394 : vector<8x128xf32>
    %397 = arith.divf %395, %396 : vector<8x128xf32>
    %398 = vector.extract_strided_slice %397 {offsets = [0, 0], sizes = [8, 32], strides = [1, 1]} : vector<8x128xf32> to vector<8x32xf32>
    %399 = vector.extract_strided_slice %397 {offsets = [0, 32], sizes = [8, 32], strides = [1, 1]} : vector<8x128xf32> to vector<8x32xf32>
    %400 = vector.extract_strided_slice %397 {offsets = [0, 64], sizes = [8, 32], strides = [1, 1]} : vector<8x128xf32> to vector<8x32xf32>
    %cst_83 = arith.constant 2.000000e+00 : f32
    %401 = vector.broadcast %cst_83 : f32 to vector<8x32xf32>
    %402 = arith.mulf %401, %400 : vector<8x32xf32>
    %cst_84 = arith.constant 1.000000e+00 : f32
    %403 = vector.broadcast %cst_84 : f32 to vector<8x32xf32>
    %404 = arith.subf %402, %403 : vector<8x32xf32>
    %405 = vector.extract_strided_slice %397 {offsets = [0, 96], sizes = [8, 32], strides = [1, 1]} : vector<8x128xf32> to vector<8x32xf32>
    %406 = arith.mulf %399, %352 : vector<8x32xf32>
    %407 = arith.mulf %398, %404 : vector<8x32xf32>
    %408 = arith.addf %406, %407 : vector<8x32xf32>
    %409 = math.tanh %408 : vector<8x32xf32>
    %410 = arith.mulf %405, %409 : vector<8x32xf32>
    %411 = tpu.concatenate %410, %377 in 1 : vector<8x32xf32>, vector<8x32xf32> -> vector<8x64xf32>
    %412 = arith.truncf %411 : vector<8x64xf32> to vector<8x64xbf16>
    %cst_85 = arith.constant dense<0.000000e+00> : vector<8x128xf32>
    %413 = tpu.matmul %412, %2, %cst_85 {dimension_numbers = #tpu.dot_dimension_numbers<[1], [0], [0], [1], [0, 0, 1, 1], [], []>} : vector<8x64xbf16>, vector<64x128xbf16>, vector<8x128xf32> -> vector<8x128xf32>
    %414 = vector.broadcast %6 : vector<1x128xf32> to vector<8x128xf32>
    %415 = arith.addf %413, %414 : vector<8x128xf32>
    %416 = arith.negf %415 : vector<8x128xf32>
    %417 = math.exp %416 : vector<8x128xf32>
    %cst_86 = arith.constant 1.000000e+00 : f32
    %418 = vector.broadcast %cst_86 : f32 to vector<8x128xf32>
    %419 = arith.addf %418, %417 : vector<8x128xf32>
    %420 = arith.divf %418, %419 : vector<8x128xf32>
    %421 = vector.extract_strided_slice %420 {offsets = [0, 0], sizes = [8, 32], strides = [1, 1]} : vector<8x128xf32> to vector<8x32xf32>
    %422 = vector.extract_strided_slice %420 {offsets = [0, 32], sizes = [8, 32], strides = [1, 1]} : vector<8x128xf32> to vector<8x32xf32>
    %423 = vector.extract_strided_slice %420 {offsets = [0, 64], sizes = [8, 32], strides = [1, 1]} : vector<8x128xf32> to vector<8x32xf32>
    %cst_87 = arith.constant 2.000000e+00 : f32
    %424 = vector.broadcast %cst_87 : f32 to vector<8x32xf32>
    %425 = arith.mulf %424, %423 : vector<8x32xf32>
    %cst_88 = arith.constant 1.000000e+00 : f32
    %426 = vector.broadcast %cst_88 : f32 to vector<8x32xf32>
    %427 = arith.subf %425, %426 : vector<8x32xf32>
    %428 = vector.extract_strided_slice %420 {offsets = [0, 96], sizes = [8, 32], strides = [1, 1]} : vector<8x128xf32> to vector<8x32xf32>
    %429 = arith.mulf %422, %375 : vector<8x32xf32>
    %430 = arith.mulf %421, %427 : vector<8x32xf32>
    %431 = arith.addf %429, %430 : vector<8x32xf32>
    %432 = math.tanh %431 : vector<8x32xf32>
    %433 = arith.mulf %428, %432 : vector<8x32xf32>
    %434 = arith.truncf %410 : vector<8x32xf32> to vector<8x32xbf16>
    %cst_89 = arith.constant dense<0.000000e+00> : vector<8x128xf32>
    %435 = tpu.matmul %434, %1, %cst_89 {dimension_numbers = #tpu.dot_dimension_numbers<[1], [0], [0], [1], [0, 0, 1, 1], [], []>} : vector<8x32xbf16>, vector<32x128xbf16>, vector<8x128xf32> -> vector<8x128xf32>
    %436 = arith.addf %379, %435 : vector<8x128xf32>
    %437 = arith.negf %436 : vector<8x128xf32>
    %438 = math.exp %437 : vector<8x128xf32>
    %cst_90 = arith.constant 1.000000e+00 : f32
    %439 = vector.broadcast %cst_90 : f32 to vector<8x128xf32>
    %440 = arith.addf %439, %438 : vector<8x128xf32>
    %441 = arith.divf %439, %440 : vector<8x128xf32>
    %442 = vector.extract_strided_slice %441 {offsets = [0, 0], sizes = [8, 32], strides = [1, 1]} : vector<8x128xf32> to vector<8x32xf32>
    %443 = vector.extract_strided_slice %441 {offsets = [0, 32], sizes = [8, 32], strides = [1, 1]} : vector<8x128xf32> to vector<8x32xf32>
    %444 = vector.extract_strided_slice %441 {offsets = [0, 64], sizes = [8, 32], strides = [1, 1]} : vector<8x128xf32> to vector<8x32xf32>
    %cst_91 = arith.constant 2.000000e+00 : f32
    %445 = vector.broadcast %cst_91 : f32 to vector<8x32xf32>
    %446 = arith.mulf %445, %444 : vector<8x32xf32>
    %cst_92 = arith.constant 1.000000e+00 : f32
    %447 = vector.broadcast %cst_92 : f32 to vector<8x32xf32>
    %448 = arith.subf %446, %447 : vector<8x32xf32>
    %449 = vector.extract_strided_slice %441 {offsets = [0, 96], sizes = [8, 32], strides = [1, 1]} : vector<8x128xf32> to vector<8x32xf32>
    %450 = arith.mulf %443, %408 : vector<8x32xf32>
    %451 = arith.mulf %442, %448 : vector<8x32xf32>
    %452 = arith.addf %450, %451 : vector<8x32xf32>
    %453 = math.tanh %452 : vector<8x32xf32>
    %454 = arith.mulf %449, %453 : vector<8x32xf32>
    %455 = tpu.concatenate %454, %433 in 1 : vector<8x32xf32>, vector<8x32xf32> -> vector<8x64xf32>
    %456 = arith.truncf %455 : vector<8x64xf32> to vector<8x64xbf16>
    %cst_93 = arith.constant dense<0.000000e+00> : vector<8x128xf32>
    %457 = tpu.matmul %456, %2, %cst_93 {dimension_numbers = #tpu.dot_dimension_numbers<[1], [0], [0], [1], [0, 0, 1, 1], [], []>} : vector<8x64xbf16>, vector<64x128xbf16>, vector<8x128xf32> -> vector<8x128xf32>
    %458 = vector.broadcast %6 : vector<1x128xf32> to vector<8x128xf32>
    %459 = arith.addf %457, %458 : vector<8x128xf32>
    %460 = arith.negf %459 : vector<8x128xf32>
    %461 = math.exp %460 : vector<8x128xf32>
    %cst_94 = arith.constant 1.000000e+00 : f32
    %462 = vector.broadcast %cst_94 : f32 to vector<8x128xf32>
    %463 = arith.addf %462, %461 : vector<8x128xf32>
    %464 = arith.divf %462, %463 : vector<8x128xf32>
    %465 = vector.extract_strided_slice %464 {offsets = [0, 0], sizes = [8, 32], strides = [1, 1]} : vector<8x128xf32> to vector<8x32xf32>
    %466 = vector.extract_strided_slice %464 {offsets = [0, 32], sizes = [8, 32], strides = [1, 1]} : vector<8x128xf32> to vector<8x32xf32>
    %467 = vector.extract_strided_slice %464 {offsets = [0, 64], sizes = [8, 32], strides = [1, 1]} : vector<8x128xf32> to vector<8x32xf32>
    %cst_95 = arith.constant 2.000000e+00 : f32
    %468 = vector.broadcast %cst_95 : f32 to vector<8x32xf32>
    %469 = arith.mulf %468, %467 : vector<8x32xf32>
    %cst_96 = arith.constant 1.000000e+00 : f32
    %470 = vector.broadcast %cst_96 : f32 to vector<8x32xf32>
    %471 = arith.subf %469, %470 : vector<8x32xf32>
    %472 = vector.extract_strided_slice %464 {offsets = [0, 96], sizes = [8, 32], strides = [1, 1]} : vector<8x128xf32> to vector<8x32xf32>
    %473 = arith.mulf %466, %431 : vector<8x32xf32>
    %474 = arith.mulf %465, %471 : vector<8x32xf32>
    %475 = arith.addf %473, %474 : vector<8x32xf32>
    %476 = math.tanh %475 : vector<8x32xf32>
    %477 = arith.mulf %472, %476 : vector<8x32xf32>
    %478 = arith.truncf %454 : vector<8x32xf32> to vector<8x32xbf16>
    %cst_97 = arith.constant dense<0.000000e+00> : vector<8x128xf32>
    %479 = tpu.matmul %478, %1, %cst_97 {dimension_numbers = #tpu.dot_dimension_numbers<[1], [0], [0], [1], [0, 0, 1, 1], [], []>} : vector<8x32xbf16>, vector<32x128xbf16>, vector<8x128xf32> -> vector<8x128xf32>
    %480 = arith.addf %380, %479 : vector<8x128xf32>
    %481 = arith.negf %480 : vector<8x128xf32>
    %482 = math.exp %481 : vector<8x128xf32>
    %cst_98 = arith.constant 1.000000e+00 : f32
    %483 = vector.broadcast %cst_98 : f32 to vector<8x128xf32>
    %484 = arith.addf %483, %482 : vector<8x128xf32>
    %485 = arith.divf %483, %484 : vector<8x128xf32>
    %486 = vector.extract_strided_slice %485 {offsets = [0, 0], sizes = [8, 32], strides = [1, 1]} : vector<8x128xf32> to vector<8x32xf32>
    %487 = vector.extract_strided_slice %485 {offsets = [0, 32], sizes = [8, 32], strides = [1, 1]} : vector<8x128xf32> to vector<8x32xf32>
    %488 = vector.extract_strided_slice %485 {offsets = [0, 64], sizes = [8, 32], strides = [1, 1]} : vector<8x128xf32> to vector<8x32xf32>
    %cst_99 = arith.constant 2.000000e+00 : f32
    %489 = vector.broadcast %cst_99 : f32 to vector<8x32xf32>
    %490 = arith.mulf %489, %488 : vector<8x32xf32>
    %cst_100 = arith.constant 1.000000e+00 : f32
    %491 = vector.broadcast %cst_100 : f32 to vector<8x32xf32>
    %492 = arith.subf %490, %491 : vector<8x32xf32>
    %493 = vector.extract_strided_slice %485 {offsets = [0, 96], sizes = [8, 32], strides = [1, 1]} : vector<8x128xf32> to vector<8x32xf32>
    %494 = arith.mulf %487, %452 : vector<8x32xf32>
    %495 = arith.mulf %486, %492 : vector<8x32xf32>
    %496 = arith.addf %494, %495 : vector<8x32xf32>
    %497 = math.tanh %496 : vector<8x32xf32>
    %498 = arith.mulf %493, %497 : vector<8x32xf32>
    %499 = tpu.concatenate %498, %477 in 1 : vector<8x32xf32>, vector<8x32xf32> -> vector<8x64xf32>
    %500 = arith.truncf %499 : vector<8x64xf32> to vector<8x64xbf16>
    %cst_101 = arith.constant dense<0.000000e+00> : vector<8x128xf32>
    %501 = tpu.matmul %500, %2, %cst_101 {dimension_numbers = #tpu.dot_dimension_numbers<[1], [0], [0], [1], [0, 0, 1, 1], [], []>} : vector<8x64xbf16>, vector<64x128xbf16>, vector<8x128xf32> -> vector<8x128xf32>
    %502 = vector.broadcast %6 : vector<1x128xf32> to vector<8x128xf32>
    %503 = arith.addf %501, %502 : vector<8x128xf32>
    %504 = arith.negf %503 : vector<8x128xf32>
    %505 = math.exp %504 : vector<8x128xf32>
    %cst_102 = arith.constant 1.000000e+00 : f32
    %506 = vector.broadcast %cst_102 : f32 to vector<8x128xf32>
    %507 = arith.addf %506, %505 : vector<8x128xf32>
    %508 = arith.divf %506, %507 : vector<8x128xf32>
    %509 = vector.extract_strided_slice %508 {offsets = [0, 0], sizes = [8, 32], strides = [1, 1]} : vector<8x128xf32> to vector<8x32xf32>
    %510 = vector.extract_strided_slice %508 {offsets = [0, 32], sizes = [8, 32], strides = [1, 1]} : vector<8x128xf32> to vector<8x32xf32>
    %511 = vector.extract_strided_slice %508 {offsets = [0, 64], sizes = [8, 32], strides = [1, 1]} : vector<8x128xf32> to vector<8x32xf32>
    %cst_103 = arith.constant 2.000000e+00 : f32
    %512 = vector.broadcast %cst_103 : f32 to vector<8x32xf32>
    %513 = arith.mulf %512, %511 : vector<8x32xf32>
    %cst_104 = arith.constant 1.000000e+00 : f32
    %514 = vector.broadcast %cst_104 : f32 to vector<8x32xf32>
    %515 = arith.subf %513, %514 : vector<8x32xf32>
    %516 = vector.extract_strided_slice %508 {offsets = [0, 96], sizes = [8, 32], strides = [1, 1]} : vector<8x128xf32> to vector<8x32xf32>
    %517 = arith.mulf %510, %475 : vector<8x32xf32>
    %518 = arith.mulf %509, %515 : vector<8x32xf32>
    %519 = arith.addf %517, %518 : vector<8x32xf32>
    %520 = math.tanh %519 : vector<8x32xf32>
    %521 = arith.mulf %516, %520 : vector<8x32xf32>
    %522 = arith.truncf %498 : vector<8x32xf32> to vector<8x32xbf16>
    %cst_105 = arith.constant dense<0.000000e+00> : vector<8x128xf32>
    %523 = tpu.matmul %522, %1, %cst_105 {dimension_numbers = #tpu.dot_dimension_numbers<[1], [0], [0], [1], [0, 0, 1, 1], [], []>} : vector<8x32xbf16>, vector<32x128xbf16>, vector<8x128xf32> -> vector<8x128xf32>
    %524 = arith.addf %381, %523 : vector<8x128xf32>
    %525 = arith.negf %524 : vector<8x128xf32>
    %526 = math.exp %525 : vector<8x128xf32>
    %cst_106 = arith.constant 1.000000e+00 : f32
    %527 = vector.broadcast %cst_106 : f32 to vector<8x128xf32>
    %528 = arith.addf %527, %526 : vector<8x128xf32>
    %529 = arith.divf %527, %528 : vector<8x128xf32>
    %530 = vector.extract_strided_slice %529 {offsets = [0, 0], sizes = [8, 32], strides = [1, 1]} : vector<8x128xf32> to vector<8x32xf32>
    %531 = vector.extract_strided_slice %529 {offsets = [0, 32], sizes = [8, 32], strides = [1, 1]} : vector<8x128xf32> to vector<8x32xf32>
    %532 = vector.extract_strided_slice %529 {offsets = [0, 64], sizes = [8, 32], strides = [1, 1]} : vector<8x128xf32> to vector<8x32xf32>
    %cst_107 = arith.constant 2.000000e+00 : f32
    %533 = vector.broadcast %cst_107 : f32 to vector<8x32xf32>
    %534 = arith.mulf %533, %532 : vector<8x32xf32>
    %cst_108 = arith.constant 1.000000e+00 : f32
    %535 = vector.broadcast %cst_108 : f32 to vector<8x32xf32>
    %536 = arith.subf %534, %535 : vector<8x32xf32>
    %537 = vector.extract_strided_slice %529 {offsets = [0, 96], sizes = [8, 32], strides = [1, 1]} : vector<8x128xf32> to vector<8x32xf32>
    %538 = arith.mulf %531, %496 : vector<8x32xf32>
    %539 = arith.mulf %530, %536 : vector<8x32xf32>
    %540 = arith.addf %538, %539 : vector<8x32xf32>
    %541 = math.tanh %540 : vector<8x32xf32>
    %542 = arith.mulf %537, %541 : vector<8x32xf32>
    %543 = tpu.concatenate %542, %521 in 1 : vector<8x32xf32>, vector<8x32xf32> -> vector<8x64xf32>
    %544 = arith.truncf %543 : vector<8x64xf32> to vector<8x64xbf16>
    %cst_109 = arith.constant dense<0.000000e+00> : vector<8x128xf32>
    %545 = tpu.matmul %544, %2, %cst_109 {dimension_numbers = #tpu.dot_dimension_numbers<[1], [0], [0], [1], [0, 0, 1, 1], [], []>} : vector<8x64xbf16>, vector<64x128xbf16>, vector<8x128xf32> -> vector<8x128xf32>
    %546 = vector.broadcast %6 : vector<1x128xf32> to vector<8x128xf32>
    %547 = arith.addf %545, %546 : vector<8x128xf32>
    %548 = arith.negf %547 : vector<8x128xf32>
    %549 = math.exp %548 : vector<8x128xf32>
    %cst_110 = arith.constant 1.000000e+00 : f32
    %550 = vector.broadcast %cst_110 : f32 to vector<8x128xf32>
    %551 = arith.addf %550, %549 : vector<8x128xf32>
    %552 = arith.divf %550, %551 : vector<8x128xf32>
    %553 = vector.extract_strided_slice %552 {offsets = [0, 0], sizes = [8, 32], strides = [1, 1]} : vector<8x128xf32> to vector<8x32xf32>
    %554 = vector.extract_strided_slice %552 {offsets = [0, 32], sizes = [8, 32], strides = [1, 1]} : vector<8x128xf32> to vector<8x32xf32>
    %555 = vector.extract_strided_slice %552 {offsets = [0, 64], sizes = [8, 32], strides = [1, 1]} : vector<8x128xf32> to vector<8x32xf32>
    %cst_111 = arith.constant 2.000000e+00 : f32
    %556 = vector.broadcast %cst_111 : f32 to vector<8x32xf32>
    %557 = arith.mulf %556, %555 : vector<8x32xf32>
    %cst_112 = arith.constant 1.000000e+00 : f32
    %558 = vector.broadcast %cst_112 : f32 to vector<8x32xf32>
    %559 = arith.subf %557, %558 : vector<8x32xf32>
    %560 = vector.extract_strided_slice %552 {offsets = [0, 96], sizes = [8, 32], strides = [1, 1]} : vector<8x128xf32> to vector<8x32xf32>
    %561 = arith.mulf %554, %519 : vector<8x32xf32>
    %562 = arith.mulf %553, %559 : vector<8x32xf32>
    %563 = arith.addf %561, %562 : vector<8x32xf32>
    %564 = math.tanh %563 : vector<8x32xf32>
    %565 = arith.mulf %560, %564 : vector<8x32xf32>
    %566 = arith.truncf %542 : vector<8x32xf32> to vector<8x32xbf16>
    %cst_113 = arith.constant dense<0.000000e+00> : vector<8x128xf32>
    %567 = tpu.matmul %566, %1, %cst_113 {dimension_numbers = #tpu.dot_dimension_numbers<[1], [0], [0], [1], [0, 0, 1, 1], [], []>} : vector<8x32xbf16>, vector<32x128xbf16>, vector<8x128xf32> -> vector<8x128xf32>
    %568 = arith.addf %382, %567 : vector<8x128xf32>
    %569 = arith.negf %568 : vector<8x128xf32>
    %570 = math.exp %569 : vector<8x128xf32>
    %cst_114 = arith.constant 1.000000e+00 : f32
    %571 = vector.broadcast %cst_114 : f32 to vector<8x128xf32>
    %572 = arith.addf %571, %570 : vector<8x128xf32>
    %573 = arith.divf %571, %572 : vector<8x128xf32>
    %574 = vector.extract_strided_slice %573 {offsets = [0, 0], sizes = [8, 32], strides = [1, 1]} : vector<8x128xf32> to vector<8x32xf32>
    %575 = vector.extract_strided_slice %573 {offsets = [0, 32], sizes = [8, 32], strides = [1, 1]} : vector<8x128xf32> to vector<8x32xf32>
    %576 = vector.extract_strided_slice %573 {offsets = [0, 64], sizes = [8, 32], strides = [1, 1]} : vector<8x128xf32> to vector<8x32xf32>
    %cst_115 = arith.constant 2.000000e+00 : f32
    %577 = vector.broadcast %cst_115 : f32 to vector<8x32xf32>
    %578 = arith.mulf %577, %576 : vector<8x32xf32>
    %cst_116 = arith.constant 1.000000e+00 : f32
    %579 = vector.broadcast %cst_116 : f32 to vector<8x32xf32>
    %580 = arith.subf %578, %579 : vector<8x32xf32>
    %581 = vector.extract_strided_slice %573 {offsets = [0, 96], sizes = [8, 32], strides = [1, 1]} : vector<8x128xf32> to vector<8x32xf32>
    %582 = arith.mulf %575, %540 : vector<8x32xf32>
    %583 = arith.mulf %574, %580 : vector<8x32xf32>
    %584 = arith.addf %582, %583 : vector<8x32xf32>
    %585 = math.tanh %584 : vector<8x32xf32>
    %586 = arith.mulf %581, %585 : vector<8x32xf32>
    %587 = tpu.concatenate %586, %565 in 1 : vector<8x32xf32>, vector<8x32xf32> -> vector<8x64xf32>
    %588 = arith.truncf %587 : vector<8x64xf32> to vector<8x64xbf16>
    %cst_117 = arith.constant dense<0.000000e+00> : vector<8x128xf32>
    %589 = tpu.matmul %588, %2, %cst_117 {dimension_numbers = #tpu.dot_dimension_numbers<[1], [0], [0], [1], [0, 0, 1, 1], [], []>} : vector<8x64xbf16>, vector<64x128xbf16>, vector<8x128xf32> -> vector<8x128xf32>
    %590 = vector.broadcast %6 : vector<1x128xf32> to vector<8x128xf32>
    %591 = arith.addf %589, %590 : vector<8x128xf32>
    %592 = arith.negf %591 : vector<8x128xf32>
    %593 = math.exp %592 : vector<8x128xf32>
    %cst_118 = arith.constant 1.000000e+00 : f32
    %594 = vector.broadcast %cst_118 : f32 to vector<8x128xf32>
    %595 = arith.addf %594, %593 : vector<8x128xf32>
    %596 = arith.divf %594, %595 : vector<8x128xf32>
    %597 = vector.extract_strided_slice %596 {offsets = [0, 0], sizes = [8, 32], strides = [1, 1]} : vector<8x128xf32> to vector<8x32xf32>
    %598 = vector.extract_strided_slice %596 {offsets = [0, 32], sizes = [8, 32], strides = [1, 1]} : vector<8x128xf32> to vector<8x32xf32>
    %599 = vector.extract_strided_slice %596 {offsets = [0, 64], sizes = [8, 32], strides = [1, 1]} : vector<8x128xf32> to vector<8x32xf32>
    %cst_119 = arith.constant 2.000000e+00 : f32
    %600 = vector.broadcast %cst_119 : f32 to vector<8x32xf32>
    %601 = arith.mulf %600, %599 : vector<8x32xf32>
    %cst_120 = arith.constant 1.000000e+00 : f32
    %602 = vector.broadcast %cst_120 : f32 to vector<8x32xf32>
    %603 = arith.subf %601, %602 : vector<8x32xf32>
    %604 = vector.extract_strided_slice %596 {offsets = [0, 96], sizes = [8, 32], strides = [1, 1]} : vector<8x128xf32> to vector<8x32xf32>
    %605 = arith.mulf %598, %563 : vector<8x32xf32>
    %606 = arith.mulf %597, %603 : vector<8x32xf32>
    %607 = arith.addf %605, %606 : vector<8x32xf32>
    %608 = math.tanh %607 : vector<8x32xf32>
    %609 = arith.mulf %604, %608 : vector<8x32xf32>
    %610 = arith.truncf %586 : vector<8x32xf32> to vector<8x32xbf16>
    %cst_121 = arith.constant dense<0.000000e+00> : vector<8x128xf32>
    %611 = tpu.matmul %610, %1, %cst_121 {dimension_numbers = #tpu.dot_dimension_numbers<[1], [0], [0], [1], [0, 0, 1, 1], [], []>} : vector<8x32xbf16>, vector<32x128xbf16>, vector<8x128xf32> -> vector<8x128xf32>
    %612 = arith.addf %383, %611 : vector<8x128xf32>
    %613 = arith.negf %612 : vector<8x128xf32>
    %614 = math.exp %613 : vector<8x128xf32>
    %cst_122 = arith.constant 1.000000e+00 : f32
    %615 = vector.broadcast %cst_122 : f32 to vector<8x128xf32>
    %616 = arith.addf %615, %614 : vector<8x128xf32>
    %617 = arith.divf %615, %616 : vector<8x128xf32>
    %618 = vector.extract_strided_slice %617 {offsets = [0, 0], sizes = [8, 32], strides = [1, 1]} : vector<8x128xf32> to vector<8x32xf32>
    %619 = vector.extract_strided_slice %617 {offsets = [0, 32], sizes = [8, 32], strides = [1, 1]} : vector<8x128xf32> to vector<8x32xf32>
    %620 = vector.extract_strided_slice %617 {offsets = [0, 64], sizes = [8, 32], strides = [1, 1]} : vector<8x128xf32> to vector<8x32xf32>
    %cst_123 = arith.constant 2.000000e+00 : f32
    %621 = vector.broadcast %cst_123 : f32 to vector<8x32xf32>
    %622 = arith.mulf %621, %620 : vector<8x32xf32>
    %cst_124 = arith.constant 1.000000e+00 : f32
    %623 = vector.broadcast %cst_124 : f32 to vector<8x32xf32>
    %624 = arith.subf %622, %623 : vector<8x32xf32>
    %625 = vector.extract_strided_slice %617 {offsets = [0, 96], sizes = [8, 32], strides = [1, 1]} : vector<8x128xf32> to vector<8x32xf32>
    %626 = arith.mulf %619, %584 : vector<8x32xf32>
    %627 = arith.mulf %618, %624 : vector<8x32xf32>
    %628 = arith.addf %626, %627 : vector<8x32xf32>
    %629 = math.tanh %628 : vector<8x32xf32>
    %630 = arith.mulf %625, %629 : vector<8x32xf32>
    %631 = tpu.concatenate %630, %609 in 1 : vector<8x32xf32>, vector<8x32xf32> -> vector<8x64xf32>
    %632 = arith.truncf %631 : vector<8x64xf32> to vector<8x64xbf16>
    %cst_125 = arith.constant dense<0.000000e+00> : vector<8x128xf32>
    %633 = tpu.matmul %632, %2, %cst_125 {dimension_numbers = #tpu.dot_dimension_numbers<[1], [0], [0], [1], [0, 0, 1, 1], [], []>} : vector<8x64xbf16>, vector<64x128xbf16>, vector<8x128xf32> -> vector<8x128xf32>
    %634 = vector.broadcast %6 : vector<1x128xf32> to vector<8x128xf32>
    %635 = arith.addf %633, %634 : vector<8x128xf32>
    %636 = arith.negf %635 : vector<8x128xf32>
    %637 = math.exp %636 : vector<8x128xf32>
    %cst_126 = arith.constant 1.000000e+00 : f32
    %638 = vector.broadcast %cst_126 : f32 to vector<8x128xf32>
    %639 = arith.addf %638, %637 : vector<8x128xf32>
    %640 = arith.divf %638, %639 : vector<8x128xf32>
    %641 = vector.extract_strided_slice %640 {offsets = [0, 0], sizes = [8, 32], strides = [1, 1]} : vector<8x128xf32> to vector<8x32xf32>
    %642 = vector.extract_strided_slice %640 {offsets = [0, 32], sizes = [8, 32], strides = [1, 1]} : vector<8x128xf32> to vector<8x32xf32>
    %643 = vector.extract_strided_slice %640 {offsets = [0, 64], sizes = [8, 32], strides = [1, 1]} : vector<8x128xf32> to vector<8x32xf32>
    %cst_127 = arith.constant 2.000000e+00 : f32
    %644 = vector.broadcast %cst_127 : f32 to vector<8x32xf32>
    %645 = arith.mulf %644, %643 : vector<8x32xf32>
    %cst_128 = arith.constant 1.000000e+00 : f32
    %646 = vector.broadcast %cst_128 : f32 to vector<8x32xf32>
    %647 = arith.subf %645, %646 : vector<8x32xf32>
    %648 = vector.extract_strided_slice %640 {offsets = [0, 96], sizes = [8, 32], strides = [1, 1]} : vector<8x128xf32> to vector<8x32xf32>
    %649 = arith.mulf %642, %607 : vector<8x32xf32>
    %650 = arith.mulf %641, %647 : vector<8x32xf32>
    %651 = arith.addf %649, %650 : vector<8x32xf32>
    %652 = math.tanh %651 : vector<8x32xf32>
    %653 = arith.mulf %648, %652 : vector<8x32xf32>
    %654 = arith.truncf %630 : vector<8x32xf32> to vector<8x32xbf16>
    %cst_129 = arith.constant dense<0.000000e+00> : vector<8x128xf32>
    %655 = tpu.matmul %654, %1, %cst_129 {dimension_numbers = #tpu.dot_dimension_numbers<[1], [0], [0], [1], [0, 0, 1, 1], [], []>} : vector<8x32xbf16>, vector<32x128xbf16>, vector<8x128xf32> -> vector<8x128xf32>
    %656 = arith.addf %384, %655 : vector<8x128xf32>
    %657 = arith.negf %656 : vector<8x128xf32>
    %658 = math.exp %657 : vector<8x128xf32>
    %cst_130 = arith.constant 1.000000e+00 : f32
    %659 = vector.broadcast %cst_130 : f32 to vector<8x128xf32>
    %660 = arith.addf %659, %658 : vector<8x128xf32>
    %661 = arith.divf %659, %660 : vector<8x128xf32>
    %662 = vector.extract_strided_slice %661 {offsets = [0, 0], sizes = [8, 32], strides = [1, 1]} : vector<8x128xf32> to vector<8x32xf32>
    %663 = vector.extract_strided_slice %661 {offsets = [0, 32], sizes = [8, 32], strides = [1, 1]} : vector<8x128xf32> to vector<8x32xf32>
    %664 = vector.extract_strided_slice %661 {offsets = [0, 64], sizes = [8, 32], strides = [1, 1]} : vector<8x128xf32> to vector<8x32xf32>
    %cst_131 = arith.constant 2.000000e+00 : f32
    %665 = vector.broadcast %cst_131 : f32 to vector<8x32xf32>
    %666 = arith.mulf %665, %664 : vector<8x32xf32>
    %cst_132 = arith.constant 1.000000e+00 : f32
    %667 = vector.broadcast %cst_132 : f32 to vector<8x32xf32>
    %668 = arith.subf %666, %667 : vector<8x32xf32>
    %669 = vector.extract_strided_slice %661 {offsets = [0, 96], sizes = [8, 32], strides = [1, 1]} : vector<8x128xf32> to vector<8x32xf32>
    %670 = arith.mulf %663, %628 : vector<8x32xf32>
    %671 = arith.mulf %662, %668 : vector<8x32xf32>
    %672 = arith.addf %670, %671 : vector<8x32xf32>
    %673 = math.tanh %672 : vector<8x32xf32>
    %674 = arith.mulf %669, %673 : vector<8x32xf32>
    %675 = tpu.concatenate %674, %653 in 1 : vector<8x32xf32>, vector<8x32xf32> -> vector<8x64xf32>
    %676 = arith.truncf %675 : vector<8x64xf32> to vector<8x64xbf16>
    %cst_133 = arith.constant dense<0.000000e+00> : vector<8x128xf32>
    %677 = tpu.matmul %676, %2, %cst_133 {dimension_numbers = #tpu.dot_dimension_numbers<[1], [0], [0], [1], [0, 0, 1, 1], [], []>} : vector<8x64xbf16>, vector<64x128xbf16>, vector<8x128xf32> -> vector<8x128xf32>
    %678 = vector.broadcast %6 : vector<1x128xf32> to vector<8x128xf32>
    %679 = arith.addf %677, %678 : vector<8x128xf32>
    %680 = arith.negf %679 : vector<8x128xf32>
    %681 = math.exp %680 : vector<8x128xf32>
    %cst_134 = arith.constant 1.000000e+00 : f32
    %682 = vector.broadcast %cst_134 : f32 to vector<8x128xf32>
    %683 = arith.addf %682, %681 : vector<8x128xf32>
    %684 = arith.divf %682, %683 : vector<8x128xf32>
    %685 = vector.extract_strided_slice %684 {offsets = [0, 0], sizes = [8, 32], strides = [1, 1]} : vector<8x128xf32> to vector<8x32xf32>
    %686 = vector.extract_strided_slice %684 {offsets = [0, 32], sizes = [8, 32], strides = [1, 1]} : vector<8x128xf32> to vector<8x32xf32>
    %687 = vector.extract_strided_slice %684 {offsets = [0, 64], sizes = [8, 32], strides = [1, 1]} : vector<8x128xf32> to vector<8x32xf32>
    %cst_135 = arith.constant 2.000000e+00 : f32
    %688 = vector.broadcast %cst_135 : f32 to vector<8x32xf32>
    %689 = arith.mulf %688, %687 : vector<8x32xf32>
    %cst_136 = arith.constant 1.000000e+00 : f32
    %690 = vector.broadcast %cst_136 : f32 to vector<8x32xf32>
    %691 = arith.subf %689, %690 : vector<8x32xf32>
    %692 = vector.extract_strided_slice %684 {offsets = [0, 96], sizes = [8, 32], strides = [1, 1]} : vector<8x128xf32> to vector<8x32xf32>
    %693 = arith.mulf %686, %651 : vector<8x32xf32>
    %694 = arith.mulf %685, %691 : vector<8x32xf32>
    %695 = arith.addf %693, %694 : vector<8x32xf32>
    %696 = math.tanh %695 : vector<8x32xf32>
    %697 = arith.mulf %692, %696 : vector<8x32xf32>
    %698 = arith.truncf %674 : vector<8x32xf32> to vector<8x32xbf16>
    %cst_137 = arith.constant dense<0.000000e+00> : vector<8x128xf32>
    %699 = tpu.matmul %698, %1, %cst_137 {dimension_numbers = #tpu.dot_dimension_numbers<[1], [0], [0], [1], [0, 0, 1, 1], [], []>} : vector<8x32xbf16>, vector<32x128xbf16>, vector<8x128xf32> -> vector<8x128xf32>
    %700 = arith.addf %385, %699 : vector<8x128xf32>
    %701 = arith.negf %700 : vector<8x128xf32>
    %702 = math.exp %701 : vector<8x128xf32>
    %cst_138 = arith.constant 1.000000e+00 : f32
    %703 = vector.broadcast %cst_138 : f32 to vector<8x128xf32>
    %704 = arith.addf %703, %702 : vector<8x128xf32>
    %705 = arith.divf %703, %704 : vector<8x128xf32>
    %706 = vector.extract_strided_slice %705 {offsets = [0, 0], sizes = [8, 32], strides = [1, 1]} : vector<8x128xf32> to vector<8x32xf32>
    %707 = vector.extract_strided_slice %705 {offsets = [0, 32], sizes = [8, 32], strides = [1, 1]} : vector<8x128xf32> to vector<8x32xf32>
    %708 = vector.extract_strided_slice %705 {offsets = [0, 64], sizes = [8, 32], strides = [1, 1]} : vector<8x128xf32> to vector<8x32xf32>
    %cst_139 = arith.constant 2.000000e+00 : f32
    %709 = vector.broadcast %cst_139 : f32 to vector<8x32xf32>
    %710 = arith.mulf %709, %708 : vector<8x32xf32>
    %cst_140 = arith.constant 1.000000e+00 : f32
    %711 = vector.broadcast %cst_140 : f32 to vector<8x32xf32>
    %712 = arith.subf %710, %711 : vector<8x32xf32>
    %713 = vector.extract_strided_slice %705 {offsets = [0, 96], sizes = [8, 32], strides = [1, 1]} : vector<8x128xf32> to vector<8x32xf32>
    %714 = arith.mulf %707, %672 : vector<8x32xf32>
    %715 = arith.mulf %706, %712 : vector<8x32xf32>
    %716 = arith.addf %714, %715 : vector<8x32xf32>
    %717 = math.tanh %716 : vector<8x32xf32>
    %718 = arith.mulf %713, %717 : vector<8x32xf32>
    %719 = tpu.concatenate %718, %697 in 1 : vector<8x32xf32>, vector<8x32xf32> -> vector<8x64xf32>
    %720 = arith.truncf %719 : vector<8x64xf32> to vector<8x64xbf16>
    %cst_141 = arith.constant dense<0.000000e+00> : vector<8x128xf32>
    %721 = tpu.matmul %720, %2, %cst_141 {dimension_numbers = #tpu.dot_dimension_numbers<[1], [0], [0], [1], [0, 0, 1, 1], [], []>} : vector<8x64xbf16>, vector<64x128xbf16>, vector<8x128xf32> -> vector<8x128xf32>
    %722 = vector.broadcast %6 : vector<1x128xf32> to vector<8x128xf32>
    %723 = arith.addf %721, %722 : vector<8x128xf32>
    %724 = arith.negf %723 : vector<8x128xf32>
    %725 = math.exp %724 : vector<8x128xf32>
    %cst_142 = arith.constant 1.000000e+00 : f32
    %726 = vector.broadcast %cst_142 : f32 to vector<8x128xf32>
    %727 = arith.addf %726, %725 : vector<8x128xf32>
    %728 = arith.divf %726, %727 : vector<8x128xf32>
    %729 = vector.extract_strided_slice %728 {offsets = [0, 0], sizes = [8, 32], strides = [1, 1]} : vector<8x128xf32> to vector<8x32xf32>
    %730 = vector.extract_strided_slice %728 {offsets = [0, 32], sizes = [8, 32], strides = [1, 1]} : vector<8x128xf32> to vector<8x32xf32>
    %731 = vector.extract_strided_slice %728 {offsets = [0, 64], sizes = [8, 32], strides = [1, 1]} : vector<8x128xf32> to vector<8x32xf32>
    %cst_143 = arith.constant 2.000000e+00 : f32
    %732 = vector.broadcast %cst_143 : f32 to vector<8x32xf32>
    %733 = arith.mulf %732, %731 : vector<8x32xf32>
    %cst_144 = arith.constant 1.000000e+00 : f32
    %734 = vector.broadcast %cst_144 : f32 to vector<8x32xf32>
    %735 = arith.subf %733, %734 : vector<8x32xf32>
    %736 = vector.extract_strided_slice %728 {offsets = [0, 96], sizes = [8, 32], strides = [1, 1]} : vector<8x128xf32> to vector<8x32xf32>
    %737 = arith.mulf %730, %695 : vector<8x32xf32>
    %738 = arith.mulf %729, %735 : vector<8x32xf32>
    %739 = arith.addf %737, %738 : vector<8x32xf32>
    %740 = math.tanh %739 : vector<8x32xf32>
    %741 = arith.mulf %736, %740 : vector<8x32xf32>
    %742 = arith.truncf %718 : vector<8x32xf32> to vector<8x32xbf16>
    %cst_145 = arith.constant dense<0.000000e+00> : vector<8x128xf32>
    %743 = tpu.matmul %742, %1, %cst_145 {dimension_numbers = #tpu.dot_dimension_numbers<[1], [0], [0], [1], [0, 0, 1, 1], [], []>} : vector<8x32xbf16>, vector<32x128xbf16>, vector<8x128xf32> -> vector<8x128xf32>
    %744 = arith.addf %389, %743 : vector<8x128xf32>
    %745 = arith.negf %744 : vector<8x128xf32>
    %746 = math.exp %745 : vector<8x128xf32>
    %cst_146 = arith.constant 1.000000e+00 : f32
    %747 = vector.broadcast %cst_146 : f32 to vector<8x128xf32>
    %748 = arith.addf %747, %746 : vector<8x128xf32>
    %749 = arith.divf %747, %748 : vector<8x128xf32>
    %750 = vector.extract_strided_slice %749 {offsets = [0, 0], sizes = [8, 32], strides = [1, 1]} : vector<8x128xf32> to vector<8x32xf32>
    %751 = vector.extract_strided_slice %749 {offsets = [0, 32], sizes = [8, 32], strides = [1, 1]} : vector<8x128xf32> to vector<8x32xf32>
    %752 = vector.extract_strided_slice %749 {offsets = [0, 64], sizes = [8, 32], strides = [1, 1]} : vector<8x128xf32> to vector<8x32xf32>
    %cst_147 = arith.constant 2.000000e+00 : f32
    %753 = vector.broadcast %cst_147 : f32 to vector<8x32xf32>
    %754 = arith.mulf %753, %752 : vector<8x32xf32>
    %cst_148 = arith.constant 1.000000e+00 : f32
    %755 = vector.broadcast %cst_148 : f32 to vector<8x32xf32>
    %756 = arith.subf %754, %755 : vector<8x32xf32>
    %757 = vector.extract_strided_slice %749 {offsets = [0, 96], sizes = [8, 32], strides = [1, 1]} : vector<8x128xf32> to vector<8x32xf32>
    %758 = arith.mulf %751, %716 : vector<8x32xf32>
    %759 = arith.mulf %750, %756 : vector<8x32xf32>
    %760 = arith.addf %758, %759 : vector<8x32xf32>
    %761 = math.tanh %760 : vector<8x32xf32>
    %762 = arith.mulf %757, %761 : vector<8x32xf32>
    %763 = tpu.concatenate %762, %741 in 1 : vector<8x32xf32>, vector<8x32xf32> -> vector<8x64xf32>
    %764 = arith.truncf %763 : vector<8x64xf32> to vector<8x64xbf16>
    %cst_149 = arith.constant dense<0.000000e+00> : vector<8x128xf32>
    %765 = tpu.matmul %764, %2, %cst_149 {dimension_numbers = #tpu.dot_dimension_numbers<[1], [0], [0], [1], [0, 0, 1, 1], [], []>} : vector<8x64xbf16>, vector<64x128xbf16>, vector<8x128xf32> -> vector<8x128xf32>
    %766 = vector.broadcast %6 : vector<1x128xf32> to vector<8x128xf32>
    %767 = arith.addf %765, %766 : vector<8x128xf32>
    %768 = arith.negf %767 : vector<8x128xf32>
    %769 = math.exp %768 : vector<8x128xf32>
    %cst_150 = arith.constant 1.000000e+00 : f32
    %770 = vector.broadcast %cst_150 : f32 to vector<8x128xf32>
    %771 = arith.addf %770, %769 : vector<8x128xf32>
    %772 = arith.divf %770, %771 : vector<8x128xf32>
    %773 = vector.extract_strided_slice %772 {offsets = [0, 0], sizes = [8, 32], strides = [1, 1]} : vector<8x128xf32> to vector<8x32xf32>
    %774 = vector.extract_strided_slice %772 {offsets = [0, 32], sizes = [8, 32], strides = [1, 1]} : vector<8x128xf32> to vector<8x32xf32>
    %775 = vector.extract_strided_slice %772 {offsets = [0, 64], sizes = [8, 32], strides = [1, 1]} : vector<8x128xf32> to vector<8x32xf32>
    %cst_151 = arith.constant 2.000000e+00 : f32
    %776 = vector.broadcast %cst_151 : f32 to vector<8x32xf32>
    %777 = arith.mulf %776, %775 : vector<8x32xf32>
    %cst_152 = arith.constant 1.000000e+00 : f32
    %778 = vector.broadcast %cst_152 : f32 to vector<8x32xf32>
    %779 = arith.subf %777, %778 : vector<8x32xf32>
    %780 = vector.extract_strided_slice %772 {offsets = [0, 96], sizes = [8, 32], strides = [1, 1]} : vector<8x128xf32> to vector<8x32xf32>
    %781 = arith.mulf %774, %739 : vector<8x32xf32>
    %782 = arith.mulf %773, %779 : vector<8x32xf32>
    %783 = arith.addf %781, %782 : vector<8x32xf32>
    %784 = math.tanh %783 : vector<8x32xf32>
    %785 = arith.mulf %780, %784 : vector<8x32xf32>
    %786 = vector.extract_strided_slice %13 {offsets = [0, 0], sizes = [8, 128], strides = [1, 1]} : vector<64x128xf32> to vector<8x128xf32>
    %787 = vector.extract_strided_slice %13 {offsets = [8, 0], sizes = [8, 128], strides = [1, 1]} : vector<64x128xf32> to vector<8x128xf32>
    %788 = vector.extract_strided_slice %13 {offsets = [16, 0], sizes = [8, 128], strides = [1, 1]} : vector<64x128xf32> to vector<8x128xf32>
    %789 = vector.extract_strided_slice %13 {offsets = [24, 0], sizes = [8, 128], strides = [1, 1]} : vector<64x128xf32> to vector<8x128xf32>
    %790 = vector.extract_strided_slice %13 {offsets = [32, 0], sizes = [8, 128], strides = [1, 1]} : vector<64x128xf32> to vector<8x128xf32>
    %791 = vector.extract_strided_slice %13 {offsets = [40, 0], sizes = [8, 128], strides = [1, 1]} : vector<64x128xf32> to vector<8x128xf32>
    %792 = vector.extract_strided_slice %13 {offsets = [48, 0], sizes = [8, 128], strides = [1, 1]} : vector<64x128xf32> to vector<8x128xf32>
    %793 = vector.extract_strided_slice %13 {offsets = [56, 0], sizes = [8, 128], strides = [1, 1]} : vector<64x128xf32> to vector<8x128xf32>
    %794 = arith.truncf %785 : vector<8x32xf32> to vector<8x32xbf16>
    %cst_153 = arith.constant dense<0.000000e+00> : vector<8x128xf32>
    %795 = tpu.matmul %794, %3, %cst_153 {dimension_numbers = #tpu.dot_dimension_numbers<[1], [0], [0], [1], [0, 0, 1, 1], [], []>} : vector<8x32xbf16>, vector<32x128xbf16>, vector<8x128xf32> -> vector<8x128xf32>
    %796 = vector.broadcast %7 : vector<1x128xf32> to vector<8x128xf32>
    %797 = arith.addf %795, %796 : vector<8x128xf32>
    %798 = arith.truncf %762 : vector<8x32xf32> to vector<8x32xbf16>
    %cst_154 = arith.constant dense<0.000000e+00> : vector<8x128xf32>
    %799 = tpu.matmul %798, %1, %cst_154 {dimension_numbers = #tpu.dot_dimension_numbers<[1], [0], [0], [1], [0, 0, 1, 1], [], []>} : vector<8x32xbf16>, vector<32x128xbf16>, vector<8x128xf32> -> vector<8x128xf32>
    %800 = arith.addf %786, %799 : vector<8x128xf32>
    %801 = arith.negf %800 : vector<8x128xf32>
    %802 = math.exp %801 : vector<8x128xf32>
    %cst_155 = arith.constant 1.000000e+00 : f32
    %803 = vector.broadcast %cst_155 : f32 to vector<8x128xf32>
    %804 = arith.addf %803, %802 : vector<8x128xf32>
    %805 = arith.divf %803, %804 : vector<8x128xf32>
    %806 = vector.extract_strided_slice %805 {offsets = [0, 0], sizes = [8, 32], strides = [1, 1]} : vector<8x128xf32> to vector<8x32xf32>
    %807 = vector.extract_strided_slice %805 {offsets = [0, 32], sizes = [8, 32], strides = [1, 1]} : vector<8x128xf32> to vector<8x32xf32>
    %808 = vector.extract_strided_slice %805 {offsets = [0, 64], sizes = [8, 32], strides = [1, 1]} : vector<8x128xf32> to vector<8x32xf32>
    %cst_156 = arith.constant 2.000000e+00 : f32
    %809 = vector.broadcast %cst_156 : f32 to vector<8x32xf32>
    %810 = arith.mulf %809, %808 : vector<8x32xf32>
    %cst_157 = arith.constant 1.000000e+00 : f32
    %811 = vector.broadcast %cst_157 : f32 to vector<8x32xf32>
    %812 = arith.subf %810, %811 : vector<8x32xf32>
    %813 = vector.extract_strided_slice %805 {offsets = [0, 96], sizes = [8, 32], strides = [1, 1]} : vector<8x128xf32> to vector<8x32xf32>
    %814 = arith.mulf %807, %760 : vector<8x32xf32>
    %815 = arith.mulf %806, %812 : vector<8x32xf32>
    %816 = arith.addf %814, %815 : vector<8x32xf32>
    %817 = math.tanh %816 : vector<8x32xf32>
    %818 = arith.mulf %813, %817 : vector<8x32xf32>
    %819 = tpu.concatenate %818, %785 in 1 : vector<8x32xf32>, vector<8x32xf32> -> vector<8x64xf32>
    %820 = arith.truncf %819 : vector<8x64xf32> to vector<8x64xbf16>
    %cst_158 = arith.constant dense<0.000000e+00> : vector<8x128xf32>
    %821 = tpu.matmul %820, %2, %cst_158 {dimension_numbers = #tpu.dot_dimension_numbers<[1], [0], [0], [1], [0, 0, 1, 1], [], []>} : vector<8x64xbf16>, vector<64x128xbf16>, vector<8x128xf32> -> vector<8x128xf32>
    %822 = vector.broadcast %6 : vector<1x128xf32> to vector<8x128xf32>
    %823 = arith.addf %821, %822 : vector<8x128xf32>
    %824 = arith.negf %823 : vector<8x128xf32>
    %825 = math.exp %824 : vector<8x128xf32>
    %cst_159 = arith.constant 1.000000e+00 : f32
    %826 = vector.broadcast %cst_159 : f32 to vector<8x128xf32>
    %827 = arith.addf %826, %825 : vector<8x128xf32>
    %828 = arith.divf %826, %827 : vector<8x128xf32>
    %829 = vector.extract_strided_slice %828 {offsets = [0, 0], sizes = [8, 32], strides = [1, 1]} : vector<8x128xf32> to vector<8x32xf32>
    %830 = vector.extract_strided_slice %828 {offsets = [0, 32], sizes = [8, 32], strides = [1, 1]} : vector<8x128xf32> to vector<8x32xf32>
    %831 = vector.extract_strided_slice %828 {offsets = [0, 64], sizes = [8, 32], strides = [1, 1]} : vector<8x128xf32> to vector<8x32xf32>
    %cst_160 = arith.constant 2.000000e+00 : f32
    %832 = vector.broadcast %cst_160 : f32 to vector<8x32xf32>
    %833 = arith.mulf %832, %831 : vector<8x32xf32>
    %cst_161 = arith.constant 1.000000e+00 : f32
    %834 = vector.broadcast %cst_161 : f32 to vector<8x32xf32>
    %835 = arith.subf %833, %834 : vector<8x32xf32>
    %836 = vector.extract_strided_slice %828 {offsets = [0, 96], sizes = [8, 32], strides = [1, 1]} : vector<8x128xf32> to vector<8x32xf32>
    %837 = arith.mulf %830, %783 : vector<8x32xf32>
    %838 = arith.mulf %829, %835 : vector<8x32xf32>
    %839 = arith.addf %837, %838 : vector<8x32xf32>
    %840 = math.tanh %839 : vector<8x32xf32>
    %841 = arith.mulf %836, %840 : vector<8x32xf32>
    %842 = arith.truncf %818 : vector<8x32xf32> to vector<8x32xbf16>
    %cst_162 = arith.constant dense<0.000000e+00> : vector<8x128xf32>
    %843 = tpu.matmul %842, %1, %cst_162 {dimension_numbers = #tpu.dot_dimension_numbers<[1], [0], [0], [1], [0, 0, 1, 1], [], []>} : vector<8x32xbf16>, vector<32x128xbf16>, vector<8x128xf32> -> vector<8x128xf32>
    %844 = arith.addf %787, %843 : vector<8x128xf32>
    %845 = arith.negf %844 : vector<8x128xf32>
    %846 = math.exp %845 : vector<8x128xf32>
    %cst_163 = arith.constant 1.000000e+00 : f32
    %847 = vector.broadcast %cst_163 : f32 to vector<8x128xf32>
    %848 = arith.addf %847, %846 : vector<8x128xf32>
    %849 = arith.divf %847, %848 : vector<8x128xf32>
    %850 = vector.extract_strided_slice %849 {offsets = [0, 0], sizes = [8, 32], strides = [1, 1]} : vector<8x128xf32> to vector<8x32xf32>
    %851 = vector.extract_strided_slice %849 {offsets = [0, 32], sizes = [8, 32], strides = [1, 1]} : vector<8x128xf32> to vector<8x32xf32>
    %852 = vector.extract_strided_slice %849 {offsets = [0, 64], sizes = [8, 32], strides = [1, 1]} : vector<8x128xf32> to vector<8x32xf32>
    %cst_164 = arith.constant 2.000000e+00 : f32
    %853 = vector.broadcast %cst_164 : f32 to vector<8x32xf32>
    %854 = arith.mulf %853, %852 : vector<8x32xf32>
    %cst_165 = arith.constant 1.000000e+00 : f32
    %855 = vector.broadcast %cst_165 : f32 to vector<8x32xf32>
    %856 = arith.subf %854, %855 : vector<8x32xf32>
    %857 = vector.extract_strided_slice %849 {offsets = [0, 96], sizes = [8, 32], strides = [1, 1]} : vector<8x128xf32> to vector<8x32xf32>
    %858 = arith.mulf %851, %816 : vector<8x32xf32>
    %859 = arith.mulf %850, %856 : vector<8x32xf32>
    %860 = arith.addf %858, %859 : vector<8x32xf32>
    %861 = math.tanh %860 : vector<8x32xf32>
    %862 = arith.mulf %857, %861 : vector<8x32xf32>
    %863 = tpu.concatenate %862, %841 in 1 : vector<8x32xf32>, vector<8x32xf32> -> vector<8x64xf32>
    %864 = arith.truncf %863 : vector<8x64xf32> to vector<8x64xbf16>
    %cst_166 = arith.constant dense<0.000000e+00> : vector<8x128xf32>
    %865 = tpu.matmul %864, %2, %cst_166 {dimension_numbers = #tpu.dot_dimension_numbers<[1], [0], [0], [1], [0, 0, 1, 1], [], []>} : vector<8x64xbf16>, vector<64x128xbf16>, vector<8x128xf32> -> vector<8x128xf32>
    %866 = vector.broadcast %6 : vector<1x128xf32> to vector<8x128xf32>
    %867 = arith.addf %865, %866 : vector<8x128xf32>
    %868 = arith.negf %867 : vector<8x128xf32>
    %869 = math.exp %868 : vector<8x128xf32>
    %cst_167 = arith.constant 1.000000e+00 : f32
    %870 = vector.broadcast %cst_167 : f32 to vector<8x128xf32>
    %871 = arith.addf %870, %869 : vector<8x128xf32>
    %872 = arith.divf %870, %871 : vector<8x128xf32>
    %873 = vector.extract_strided_slice %872 {offsets = [0, 0], sizes = [8, 32], strides = [1, 1]} : vector<8x128xf32> to vector<8x32xf32>
    %874 = vector.extract_strided_slice %872 {offsets = [0, 32], sizes = [8, 32], strides = [1, 1]} : vector<8x128xf32> to vector<8x32xf32>
    %875 = vector.extract_strided_slice %872 {offsets = [0, 64], sizes = [8, 32], strides = [1, 1]} : vector<8x128xf32> to vector<8x32xf32>
    %cst_168 = arith.constant 2.000000e+00 : f32
    %876 = vector.broadcast %cst_168 : f32 to vector<8x32xf32>
    %877 = arith.mulf %876, %875 : vector<8x32xf32>
    %cst_169 = arith.constant 1.000000e+00 : f32
    %878 = vector.broadcast %cst_169 : f32 to vector<8x32xf32>
    %879 = arith.subf %877, %878 : vector<8x32xf32>
    %880 = vector.extract_strided_slice %872 {offsets = [0, 96], sizes = [8, 32], strides = [1, 1]} : vector<8x128xf32> to vector<8x32xf32>
    %881 = arith.mulf %874, %839 : vector<8x32xf32>
    %882 = arith.mulf %873, %879 : vector<8x32xf32>
    %883 = arith.addf %881, %882 : vector<8x32xf32>
    %884 = math.tanh %883 : vector<8x32xf32>
    %885 = arith.mulf %880, %884 : vector<8x32xf32>
    %886 = arith.truncf %862 : vector<8x32xf32> to vector<8x32xbf16>
    %cst_170 = arith.constant dense<0.000000e+00> : vector<8x128xf32>
    %887 = tpu.matmul %886, %1, %cst_170 {dimension_numbers = #tpu.dot_dimension_numbers<[1], [0], [0], [1], [0, 0, 1, 1], [], []>} : vector<8x32xbf16>, vector<32x128xbf16>, vector<8x128xf32> -> vector<8x128xf32>
    %888 = arith.addf %788, %887 : vector<8x128xf32>
    %889 = arith.negf %888 : vector<8x128xf32>
    %890 = math.exp %889 : vector<8x128xf32>
    %cst_171 = arith.constant 1.000000e+00 : f32
    %891 = vector.broadcast %cst_171 : f32 to vector<8x128xf32>
    %892 = arith.addf %891, %890 : vector<8x128xf32>
    %893 = arith.divf %891, %892 : vector<8x128xf32>
    %894 = vector.extract_strided_slice %893 {offsets = [0, 0], sizes = [8, 32], strides = [1, 1]} : vector<8x128xf32> to vector<8x32xf32>
    %895 = vector.extract_strided_slice %893 {offsets = [0, 32], sizes = [8, 32], strides = [1, 1]} : vector<8x128xf32> to vector<8x32xf32>
    %896 = vector.extract_strided_slice %893 {offsets = [0, 64], sizes = [8, 32], strides = [1, 1]} : vector<8x128xf32> to vector<8x32xf32>
    %cst_172 = arith.constant 2.000000e+00 : f32
    %897 = vector.broadcast %cst_172 : f32 to vector<8x32xf32>
    %898 = arith.mulf %897, %896 : vector<8x32xf32>
    %cst_173 = arith.constant 1.000000e+00 : f32
    %899 = vector.broadcast %cst_173 : f32 to vector<8x32xf32>
    %900 = arith.subf %898, %899 : vector<8x32xf32>
    %901 = vector.extract_strided_slice %893 {offsets = [0, 96], sizes = [8, 32], strides = [1, 1]} : vector<8x128xf32> to vector<8x32xf32>
    %902 = arith.mulf %895, %860 : vector<8x32xf32>
    %903 = arith.mulf %894, %900 : vector<8x32xf32>
    %904 = arith.addf %902, %903 : vector<8x32xf32>
    %905 = math.tanh %904 : vector<8x32xf32>
    %906 = arith.mulf %901, %905 : vector<8x32xf32>
    %907 = tpu.concatenate %906, %885 in 1 : vector<8x32xf32>, vector<8x32xf32> -> vector<8x64xf32>
    %908 = arith.truncf %907 : vector<8x64xf32> to vector<8x64xbf16>
    %cst_174 = arith.constant dense<0.000000e+00> : vector<8x128xf32>
    %909 = tpu.matmul %908, %2, %cst_174 {dimension_numbers = #tpu.dot_dimension_numbers<[1], [0], [0], [1], [0, 0, 1, 1], [], []>} : vector<8x64xbf16>, vector<64x128xbf16>, vector<8x128xf32> -> vector<8x128xf32>
    %910 = vector.broadcast %6 : vector<1x128xf32> to vector<8x128xf32>
    %911 = arith.addf %909, %910 : vector<8x128xf32>
    %912 = arith.negf %911 : vector<8x128xf32>
    %913 = math.exp %912 : vector<8x128xf32>
    %cst_175 = arith.constant 1.000000e+00 : f32
    %914 = vector.broadcast %cst_175 : f32 to vector<8x128xf32>
    %915 = arith.addf %914, %913 : vector<8x128xf32>
    %916 = arith.divf %914, %915 : vector<8x128xf32>
    %917 = vector.extract_strided_slice %916 {offsets = [0, 0], sizes = [8, 32], strides = [1, 1]} : vector<8x128xf32> to vector<8x32xf32>
    %918 = vector.extract_strided_slice %916 {offsets = [0, 32], sizes = [8, 32], strides = [1, 1]} : vector<8x128xf32> to vector<8x32xf32>
    %919 = vector.extract_strided_slice %916 {offsets = [0, 64], sizes = [8, 32], strides = [1, 1]} : vector<8x128xf32> to vector<8x32xf32>
    %cst_176 = arith.constant 2.000000e+00 : f32
    %920 = vector.broadcast %cst_176 : f32 to vector<8x32xf32>
    %921 = arith.mulf %920, %919 : vector<8x32xf32>
    %cst_177 = arith.constant 1.000000e+00 : f32
    %922 = vector.broadcast %cst_177 : f32 to vector<8x32xf32>
    %923 = arith.subf %921, %922 : vector<8x32xf32>
    %924 = vector.extract_strided_slice %916 {offsets = [0, 96], sizes = [8, 32], strides = [1, 1]} : vector<8x128xf32> to vector<8x32xf32>
    %925 = arith.mulf %918, %883 : vector<8x32xf32>
    %926 = arith.mulf %917, %923 : vector<8x32xf32>
    %927 = arith.addf %925, %926 : vector<8x32xf32>
    %928 = math.tanh %927 : vector<8x32xf32>
    %929 = arith.mulf %924, %928 : vector<8x32xf32>
    %930 = arith.truncf %906 : vector<8x32xf32> to vector<8x32xbf16>
    %cst_178 = arith.constant dense<0.000000e+00> : vector<8x128xf32>
    %931 = tpu.matmul %930, %1, %cst_178 {dimension_numbers = #tpu.dot_dimension_numbers<[1], [0], [0], [1], [0, 0, 1, 1], [], []>} : vector<8x32xbf16>, vector<32x128xbf16>, vector<8x128xf32> -> vector<8x128xf32>
    %932 = arith.addf %789, %931 : vector<8x128xf32>
    %933 = arith.negf %932 : vector<8x128xf32>
    %934 = math.exp %933 : vector<8x128xf32>
    %cst_179 = arith.constant 1.000000e+00 : f32
    %935 = vector.broadcast %cst_179 : f32 to vector<8x128xf32>
    %936 = arith.addf %935, %934 : vector<8x128xf32>
    %937 = arith.divf %935, %936 : vector<8x128xf32>
    %938 = vector.extract_strided_slice %937 {offsets = [0, 0], sizes = [8, 32], strides = [1, 1]} : vector<8x128xf32> to vector<8x32xf32>
    %939 = vector.extract_strided_slice %937 {offsets = [0, 32], sizes = [8, 32], strides = [1, 1]} : vector<8x128xf32> to vector<8x32xf32>
    %940 = vector.extract_strided_slice %937 {offsets = [0, 64], sizes = [8, 32], strides = [1, 1]} : vector<8x128xf32> to vector<8x32xf32>
    %cst_180 = arith.constant 2.000000e+00 : f32
    %941 = vector.broadcast %cst_180 : f32 to vector<8x32xf32>
    %942 = arith.mulf %941, %940 : vector<8x32xf32>
    %cst_181 = arith.constant 1.000000e+00 : f32
    %943 = vector.broadcast %cst_181 : f32 to vector<8x32xf32>
    %944 = arith.subf %942, %943 : vector<8x32xf32>
    %945 = vector.extract_strided_slice %937 {offsets = [0, 96], sizes = [8, 32], strides = [1, 1]} : vector<8x128xf32> to vector<8x32xf32>
    %946 = arith.mulf %939, %904 : vector<8x32xf32>
    %947 = arith.mulf %938, %944 : vector<8x32xf32>
    %948 = arith.addf %946, %947 : vector<8x32xf32>
    %949 = math.tanh %948 : vector<8x32xf32>
    %950 = arith.mulf %945, %949 : vector<8x32xf32>
    %951 = tpu.concatenate %950, %929 in 1 : vector<8x32xf32>, vector<8x32xf32> -> vector<8x64xf32>
    %952 = arith.truncf %951 : vector<8x64xf32> to vector<8x64xbf16>
    %cst_182 = arith.constant dense<0.000000e+00> : vector<8x128xf32>
    %953 = tpu.matmul %952, %2, %cst_182 {dimension_numbers = #tpu.dot_dimension_numbers<[1], [0], [0], [1], [0, 0, 1, 1], [], []>} : vector<8x64xbf16>, vector<64x128xbf16>, vector<8x128xf32> -> vector<8x128xf32>
    %954 = vector.broadcast %6 : vector<1x128xf32> to vector<8x128xf32>
    %955 = arith.addf %953, %954 : vector<8x128xf32>
    %956 = arith.negf %955 : vector<8x128xf32>
    %957 = math.exp %956 : vector<8x128xf32>
    %cst_183 = arith.constant 1.000000e+00 : f32
    %958 = vector.broadcast %cst_183 : f32 to vector<8x128xf32>
    %959 = arith.addf %958, %957 : vector<8x128xf32>
    %960 = arith.divf %958, %959 : vector<8x128xf32>
    %961 = vector.extract_strided_slice %960 {offsets = [0, 0], sizes = [8, 32], strides = [1, 1]} : vector<8x128xf32> to vector<8x32xf32>
    %962 = vector.extract_strided_slice %960 {offsets = [0, 32], sizes = [8, 32], strides = [1, 1]} : vector<8x128xf32> to vector<8x32xf32>
    %963 = vector.extract_strided_slice %960 {offsets = [0, 64], sizes = [8, 32], strides = [1, 1]} : vector<8x128xf32> to vector<8x32xf32>
    %cst_184 = arith.constant 2.000000e+00 : f32
    %964 = vector.broadcast %cst_184 : f32 to vector<8x32xf32>
    %965 = arith.mulf %964, %963 : vector<8x32xf32>
    %cst_185 = arith.constant 1.000000e+00 : f32
    %966 = vector.broadcast %cst_185 : f32 to vector<8x32xf32>
    %967 = arith.subf %965, %966 : vector<8x32xf32>
    %968 = vector.extract_strided_slice %960 {offsets = [0, 96], sizes = [8, 32], strides = [1, 1]} : vector<8x128xf32> to vector<8x32xf32>
    %969 = arith.mulf %962, %927 : vector<8x32xf32>
    %970 = arith.mulf %961, %967 : vector<8x32xf32>
    %971 = arith.addf %969, %970 : vector<8x32xf32>
    %972 = math.tanh %971 : vector<8x32xf32>
    %973 = arith.mulf %968, %972 : vector<8x32xf32>
    %974 = arith.truncf %950 : vector<8x32xf32> to vector<8x32xbf16>
    %cst_186 = arith.constant dense<0.000000e+00> : vector<8x128xf32>
    %975 = tpu.matmul %974, %1, %cst_186 {dimension_numbers = #tpu.dot_dimension_numbers<[1], [0], [0], [1], [0, 0, 1, 1], [], []>} : vector<8x32xbf16>, vector<32x128xbf16>, vector<8x128xf32> -> vector<8x128xf32>
    %976 = arith.addf %790, %975 : vector<8x128xf32>
    %977 = arith.negf %976 : vector<8x128xf32>
    %978 = math.exp %977 : vector<8x128xf32>
    %cst_187 = arith.constant 1.000000e+00 : f32
    %979 = vector.broadcast %cst_187 : f32 to vector<8x128xf32>
    %980 = arith.addf %979, %978 : vector<8x128xf32>
    %981 = arith.divf %979, %980 : vector<8x128xf32>
    %982 = vector.extract_strided_slice %981 {offsets = [0, 0], sizes = [8, 32], strides = [1, 1]} : vector<8x128xf32> to vector<8x32xf32>
    %983 = vector.extract_strided_slice %981 {offsets = [0, 32], sizes = [8, 32], strides = [1, 1]} : vector<8x128xf32> to vector<8x32xf32>
    %984 = vector.extract_strided_slice %981 {offsets = [0, 64], sizes = [8, 32], strides = [1, 1]} : vector<8x128xf32> to vector<8x32xf32>
    %cst_188 = arith.constant 2.000000e+00 : f32
    %985 = vector.broadcast %cst_188 : f32 to vector<8x32xf32>
    %986 = arith.mulf %985, %984 : vector<8x32xf32>
    %cst_189 = arith.constant 1.000000e+00 : f32
    %987 = vector.broadcast %cst_189 : f32 to vector<8x32xf32>
    %988 = arith.subf %986, %987 : vector<8x32xf32>
    %989 = vector.extract_strided_slice %981 {offsets = [0, 96], sizes = [8, 32], strides = [1, 1]} : vector<8x128xf32> to vector<8x32xf32>
    %990 = arith.mulf %983, %948 : vector<8x32xf32>
    %991 = arith.mulf %982, %988 : vector<8x32xf32>
    %992 = arith.addf %990, %991 : vector<8x32xf32>
    %993 = math.tanh %992 : vector<8x32xf32>
    %994 = arith.mulf %989, %993 : vector<8x32xf32>
    %995 = tpu.concatenate %994, %973 in 1 : vector<8x32xf32>, vector<8x32xf32> -> vector<8x64xf32>
    %996 = arith.truncf %995 : vector<8x64xf32> to vector<8x64xbf16>
    %cst_190 = arith.constant dense<0.000000e+00> : vector<8x128xf32>
    %997 = tpu.matmul %996, %2, %cst_190 {dimension_numbers = #tpu.dot_dimension_numbers<[1], [0], [0], [1], [0, 0, 1, 1], [], []>} : vector<8x64xbf16>, vector<64x128xbf16>, vector<8x128xf32> -> vector<8x128xf32>
    %998 = vector.broadcast %6 : vector<1x128xf32> to vector<8x128xf32>
    %999 = arith.addf %997, %998 : vector<8x128xf32>
    %1000 = arith.negf %999 : vector<8x128xf32>
    %1001 = math.exp %1000 : vector<8x128xf32>
    %cst_191 = arith.constant 1.000000e+00 : f32
    %1002 = vector.broadcast %cst_191 : f32 to vector<8x128xf32>
    %1003 = arith.addf %1002, %1001 : vector<8x128xf32>
    %1004 = arith.divf %1002, %1003 : vector<8x128xf32>
    %1005 = vector.extract_strided_slice %1004 {offsets = [0, 0], sizes = [8, 32], strides = [1, 1]} : vector<8x128xf32> to vector<8x32xf32>
    %1006 = vector.extract_strided_slice %1004 {offsets = [0, 32], sizes = [8, 32], strides = [1, 1]} : vector<8x128xf32> to vector<8x32xf32>
    %1007 = vector.extract_strided_slice %1004 {offsets = [0, 64], sizes = [8, 32], strides = [1, 1]} : vector<8x128xf32> to vector<8x32xf32>
    %cst_192 = arith.constant 2.000000e+00 : f32
    %1008 = vector.broadcast %cst_192 : f32 to vector<8x32xf32>
    %1009 = arith.mulf %1008, %1007 : vector<8x32xf32>
    %cst_193 = arith.constant 1.000000e+00 : f32
    %1010 = vector.broadcast %cst_193 : f32 to vector<8x32xf32>
    %1011 = arith.subf %1009, %1010 : vector<8x32xf32>
    %1012 = vector.extract_strided_slice %1004 {offsets = [0, 96], sizes = [8, 32], strides = [1, 1]} : vector<8x128xf32> to vector<8x32xf32>
    %1013 = arith.mulf %1006, %971 : vector<8x32xf32>
    %1014 = arith.mulf %1005, %1011 : vector<8x32xf32>
    %1015 = arith.addf %1013, %1014 : vector<8x32xf32>
    %1016 = math.tanh %1015 : vector<8x32xf32>
    %1017 = arith.mulf %1012, %1016 : vector<8x32xf32>
    %1018 = arith.truncf %994 : vector<8x32xf32> to vector<8x32xbf16>
    %cst_194 = arith.constant dense<0.000000e+00> : vector<8x128xf32>
    %1019 = tpu.matmul %1018, %1, %cst_194 {dimension_numbers = #tpu.dot_dimension_numbers<[1], [0], [0], [1], [0, 0, 1, 1], [], []>} : vector<8x32xbf16>, vector<32x128xbf16>, vector<8x128xf32> -> vector<8x128xf32>
    %1020 = arith.addf %791, %1019 : vector<8x128xf32>
    %1021 = arith.negf %1020 : vector<8x128xf32>
    %1022 = math.exp %1021 : vector<8x128xf32>
    %cst_195 = arith.constant 1.000000e+00 : f32
    %1023 = vector.broadcast %cst_195 : f32 to vector<8x128xf32>
    %1024 = arith.addf %1023, %1022 : vector<8x128xf32>
    %1025 = arith.divf %1023, %1024 : vector<8x128xf32>
    %1026 = vector.extract_strided_slice %1025 {offsets = [0, 0], sizes = [8, 32], strides = [1, 1]} : vector<8x128xf32> to vector<8x32xf32>
    %1027 = vector.extract_strided_slice %1025 {offsets = [0, 32], sizes = [8, 32], strides = [1, 1]} : vector<8x128xf32> to vector<8x32xf32>
    %1028 = vector.extract_strided_slice %1025 {offsets = [0, 64], sizes = [8, 32], strides = [1, 1]} : vector<8x128xf32> to vector<8x32xf32>
    %cst_196 = arith.constant 2.000000e+00 : f32
    %1029 = vector.broadcast %cst_196 : f32 to vector<8x32xf32>
    %1030 = arith.mulf %1029, %1028 : vector<8x32xf32>
    %cst_197 = arith.constant 1.000000e+00 : f32
    %1031 = vector.broadcast %cst_197 : f32 to vector<8x32xf32>
    %1032 = arith.subf %1030, %1031 : vector<8x32xf32>
    %1033 = vector.extract_strided_slice %1025 {offsets = [0, 96], sizes = [8, 32], strides = [1, 1]} : vector<8x128xf32> to vector<8x32xf32>
    %1034 = arith.mulf %1027, %992 : vector<8x32xf32>
    %1035 = arith.mulf %1026, %1032 : vector<8x32xf32>
    %1036 = arith.addf %1034, %1035 : vector<8x32xf32>
    %1037 = math.tanh %1036 : vector<8x32xf32>
    %1038 = arith.mulf %1033, %1037 : vector<8x32xf32>
    %1039 = tpu.concatenate %1038, %1017 in 1 : vector<8x32xf32>, vector<8x32xf32> -> vector<8x64xf32>
    %1040 = arith.truncf %1039 : vector<8x64xf32> to vector<8x64xbf16>
    %cst_198 = arith.constant dense<0.000000e+00> : vector<8x128xf32>
    %1041 = tpu.matmul %1040, %2, %cst_198 {dimension_numbers = #tpu.dot_dimension_numbers<[1], [0], [0], [1], [0, 0, 1, 1], [], []>} : vector<8x64xbf16>, vector<64x128xbf16>, vector<8x128xf32> -> vector<8x128xf32>
    %1042 = vector.broadcast %6 : vector<1x128xf32> to vector<8x128xf32>
    %1043 = arith.addf %1041, %1042 : vector<8x128xf32>
    %1044 = arith.negf %1043 : vector<8x128xf32>
    %1045 = math.exp %1044 : vector<8x128xf32>
    %cst_199 = arith.constant 1.000000e+00 : f32
    %1046 = vector.broadcast %cst_199 : f32 to vector<8x128xf32>
    %1047 = arith.addf %1046, %1045 : vector<8x128xf32>
    %1048 = arith.divf %1046, %1047 : vector<8x128xf32>
    %1049 = vector.extract_strided_slice %1048 {offsets = [0, 0], sizes = [8, 32], strides = [1, 1]} : vector<8x128xf32> to vector<8x32xf32>
    %1050 = vector.extract_strided_slice %1048 {offsets = [0, 32], sizes = [8, 32], strides = [1, 1]} : vector<8x128xf32> to vector<8x32xf32>
    %1051 = vector.extract_strided_slice %1048 {offsets = [0, 64], sizes = [8, 32], strides = [1, 1]} : vector<8x128xf32> to vector<8x32xf32>
    %cst_200 = arith.constant 2.000000e+00 : f32
    %1052 = vector.broadcast %cst_200 : f32 to vector<8x32xf32>
    %1053 = arith.mulf %1052, %1051 : vector<8x32xf32>
    %cst_201 = arith.constant 1.000000e+00 : f32
    %1054 = vector.broadcast %cst_201 : f32 to vector<8x32xf32>
    %1055 = arith.subf %1053, %1054 : vector<8x32xf32>
    %1056 = vector.extract_strided_slice %1048 {offsets = [0, 96], sizes = [8, 32], strides = [1, 1]} : vector<8x128xf32> to vector<8x32xf32>
    %1057 = arith.mulf %1050, %1015 : vector<8x32xf32>
    %1058 = arith.mulf %1049, %1055 : vector<8x32xf32>
    %1059 = arith.addf %1057, %1058 : vector<8x32xf32>
    %1060 = math.tanh %1059 : vector<8x32xf32>
    %1061 = arith.mulf %1056, %1060 : vector<8x32xf32>
    %1062 = arith.truncf %1038 : vector<8x32xf32> to vector<8x32xbf16>
    %cst_202 = arith.constant dense<0.000000e+00> : vector<8x128xf32>
    %1063 = tpu.matmul %1062, %1, %cst_202 {dimension_numbers = #tpu.dot_dimension_numbers<[1], [0], [0], [1], [0, 0, 1, 1], [], []>} : vector<8x32xbf16>, vector<32x128xbf16>, vector<8x128xf32> -> vector<8x128xf32>
    %1064 = arith.addf %792, %1063 : vector<8x128xf32>
    %1065 = arith.negf %1064 : vector<8x128xf32>
    %1066 = math.exp %1065 : vector<8x128xf32>
    %cst_203 = arith.constant 1.000000e+00 : f32
    %1067 = vector.broadcast %cst_203 : f32 to vector<8x128xf32>
    %1068 = arith.addf %1067, %1066 : vector<8x128xf32>
    %1069 = arith.divf %1067, %1068 : vector<8x128xf32>
    %1070 = vector.extract_strided_slice %1069 {offsets = [0, 0], sizes = [8, 32], strides = [1, 1]} : vector<8x128xf32> to vector<8x32xf32>
    %1071 = vector.extract_strided_slice %1069 {offsets = [0, 32], sizes = [8, 32], strides = [1, 1]} : vector<8x128xf32> to vector<8x32xf32>
    %1072 = vector.extract_strided_slice %1069 {offsets = [0, 64], sizes = [8, 32], strides = [1, 1]} : vector<8x128xf32> to vector<8x32xf32>
    %cst_204 = arith.constant 2.000000e+00 : f32
    %1073 = vector.broadcast %cst_204 : f32 to vector<8x32xf32>
    %1074 = arith.mulf %1073, %1072 : vector<8x32xf32>
    %cst_205 = arith.constant 1.000000e+00 : f32
    %1075 = vector.broadcast %cst_205 : f32 to vector<8x32xf32>
    %1076 = arith.subf %1074, %1075 : vector<8x32xf32>
    %1077 = vector.extract_strided_slice %1069 {offsets = [0, 96], sizes = [8, 32], strides = [1, 1]} : vector<8x128xf32> to vector<8x32xf32>
    %1078 = arith.mulf %1071, %1036 : vector<8x32xf32>
    %1079 = arith.mulf %1070, %1076 : vector<8x32xf32>
    %1080 = arith.addf %1078, %1079 : vector<8x32xf32>
    %1081 = math.tanh %1080 : vector<8x32xf32>
    %1082 = arith.mulf %1077, %1081 : vector<8x32xf32>
    %1083 = tpu.concatenate %1082, %1061 in 1 : vector<8x32xf32>, vector<8x32xf32> -> vector<8x64xf32>
    %1084 = arith.truncf %1083 : vector<8x64xf32> to vector<8x64xbf16>
    %cst_206 = arith.constant dense<0.000000e+00> : vector<8x128xf32>
    %1085 = tpu.matmul %1084, %2, %cst_206 {dimension_numbers = #tpu.dot_dimension_numbers<[1], [0], [0], [1], [0, 0, 1, 1], [], []>} : vector<8x64xbf16>, vector<64x128xbf16>, vector<8x128xf32> -> vector<8x128xf32>
    %1086 = vector.broadcast %6 : vector<1x128xf32> to vector<8x128xf32>
    %1087 = arith.addf %1085, %1086 : vector<8x128xf32>
    %1088 = arith.negf %1087 : vector<8x128xf32>
    %1089 = math.exp %1088 : vector<8x128xf32>
    %cst_207 = arith.constant 1.000000e+00 : f32
    %1090 = vector.broadcast %cst_207 : f32 to vector<8x128xf32>
    %1091 = arith.addf %1090, %1089 : vector<8x128xf32>
    %1092 = arith.divf %1090, %1091 : vector<8x128xf32>
    %1093 = vector.extract_strided_slice %1092 {offsets = [0, 0], sizes = [8, 32], strides = [1, 1]} : vector<8x128xf32> to vector<8x32xf32>
    %1094 = vector.extract_strided_slice %1092 {offsets = [0, 32], sizes = [8, 32], strides = [1, 1]} : vector<8x128xf32> to vector<8x32xf32>
    %1095 = vector.extract_strided_slice %1092 {offsets = [0, 64], sizes = [8, 32], strides = [1, 1]} : vector<8x128xf32> to vector<8x32xf32>
    %cst_208 = arith.constant 2.000000e+00 : f32
    %1096 = vector.broadcast %cst_208 : f32 to vector<8x32xf32>
    %1097 = arith.mulf %1096, %1095 : vector<8x32xf32>
    %cst_209 = arith.constant 1.000000e+00 : f32
    %1098 = vector.broadcast %cst_209 : f32 to vector<8x32xf32>
    %1099 = arith.subf %1097, %1098 : vector<8x32xf32>
    %1100 = vector.extract_strided_slice %1092 {offsets = [0, 96], sizes = [8, 32], strides = [1, 1]} : vector<8x128xf32> to vector<8x32xf32>
    %1101 = arith.mulf %1094, %1059 : vector<8x32xf32>
    %1102 = arith.mulf %1093, %1099 : vector<8x32xf32>
    %1103 = arith.addf %1101, %1102 : vector<8x32xf32>
    %1104 = math.tanh %1103 : vector<8x32xf32>
    %1105 = arith.mulf %1100, %1104 : vector<8x32xf32>
    %1106 = arith.truncf %1082 : vector<8x32xf32> to vector<8x32xbf16>
    %cst_210 = arith.constant dense<0.000000e+00> : vector<8x128xf32>
    %1107 = tpu.matmul %1106, %1, %cst_210 {dimension_numbers = #tpu.dot_dimension_numbers<[1], [0], [0], [1], [0, 0, 1, 1], [], []>} : vector<8x32xbf16>, vector<32x128xbf16>, vector<8x128xf32> -> vector<8x128xf32>
    %1108 = arith.addf %793, %1107 : vector<8x128xf32>
    %1109 = arith.negf %1108 : vector<8x128xf32>
    %1110 = math.exp %1109 : vector<8x128xf32>
    %cst_211 = arith.constant 1.000000e+00 : f32
    %1111 = vector.broadcast %cst_211 : f32 to vector<8x128xf32>
    %1112 = arith.addf %1111, %1110 : vector<8x128xf32>
    %1113 = arith.divf %1111, %1112 : vector<8x128xf32>
    %1114 = vector.extract_strided_slice %1113 {offsets = [0, 0], sizes = [8, 32], strides = [1, 1]} : vector<8x128xf32> to vector<8x32xf32>
    %1115 = vector.extract_strided_slice %1113 {offsets = [0, 32], sizes = [8, 32], strides = [1, 1]} : vector<8x128xf32> to vector<8x32xf32>
    %1116 = vector.extract_strided_slice %1113 {offsets = [0, 64], sizes = [8, 32], strides = [1, 1]} : vector<8x128xf32> to vector<8x32xf32>
    %cst_212 = arith.constant 2.000000e+00 : f32
    %1117 = vector.broadcast %cst_212 : f32 to vector<8x32xf32>
    %1118 = arith.mulf %1117, %1116 : vector<8x32xf32>
    %cst_213 = arith.constant 1.000000e+00 : f32
    %1119 = vector.broadcast %cst_213 : f32 to vector<8x32xf32>
    %1120 = arith.subf %1118, %1119 : vector<8x32xf32>
    %1121 = vector.extract_strided_slice %1113 {offsets = [0, 96], sizes = [8, 32], strides = [1, 1]} : vector<8x128xf32> to vector<8x32xf32>
    %1122 = arith.mulf %1115, %1080 : vector<8x32xf32>
    %1123 = arith.mulf %1114, %1120 : vector<8x32xf32>
    %1124 = arith.addf %1122, %1123 : vector<8x32xf32>
    %1125 = math.tanh %1124 : vector<8x32xf32>
    %1126 = arith.mulf %1121, %1125 : vector<8x32xf32>
    %1127 = tpu.concatenate %1126, %1105 in 1 : vector<8x32xf32>, vector<8x32xf32> -> vector<8x64xf32>
    %1128 = arith.truncf %1127 : vector<8x64xf32> to vector<8x64xbf16>
    %cst_214 = arith.constant dense<0.000000e+00> : vector<8x128xf32>
    %1129 = tpu.matmul %1128, %2, %cst_214 {dimension_numbers = #tpu.dot_dimension_numbers<[1], [0], [0], [1], [0, 0, 1, 1], [], []>} : vector<8x64xbf16>, vector<64x128xbf16>, vector<8x128xf32> -> vector<8x128xf32>
    %1130 = vector.broadcast %6 : vector<1x128xf32> to vector<8x128xf32>
    %1131 = arith.addf %1129, %1130 : vector<8x128xf32>
    %1132 = arith.negf %1131 : vector<8x128xf32>
    %1133 = math.exp %1132 : vector<8x128xf32>
    %cst_215 = arith.constant 1.000000e+00 : f32
    %1134 = vector.broadcast %cst_215 : f32 to vector<8x128xf32>
    %1135 = arith.addf %1134, %1133 : vector<8x128xf32>
    %1136 = arith.divf %1134, %1135 : vector<8x128xf32>
    %1137 = vector.extract_strided_slice %1136 {offsets = [0, 0], sizes = [8, 32], strides = [1, 1]} : vector<8x128xf32> to vector<8x32xf32>
    %1138 = vector.extract_strided_slice %1136 {offsets = [0, 32], sizes = [8, 32], strides = [1, 1]} : vector<8x128xf32> to vector<8x32xf32>
    %1139 = vector.extract_strided_slice %1136 {offsets = [0, 64], sizes = [8, 32], strides = [1, 1]} : vector<8x128xf32> to vector<8x32xf32>
    %cst_216 = arith.constant 2.000000e+00 : f32
    %1140 = vector.broadcast %cst_216 : f32 to vector<8x32xf32>
    %1141 = arith.mulf %1140, %1139 : vector<8x32xf32>
    %cst_217 = arith.constant 1.000000e+00 : f32
    %1142 = vector.broadcast %cst_217 : f32 to vector<8x32xf32>
    %1143 = arith.subf %1141, %1142 : vector<8x32xf32>
    %1144 = vector.extract_strided_slice %1136 {offsets = [0, 96], sizes = [8, 32], strides = [1, 1]} : vector<8x128xf32> to vector<8x32xf32>
    %1145 = arith.mulf %1138, %1103 : vector<8x32xf32>
    %1146 = arith.mulf %1137, %1143 : vector<8x32xf32>
    %1147 = arith.addf %1145, %1146 : vector<8x32xf32>
    %1148 = math.tanh %1147 : vector<8x32xf32>
    %1149 = arith.mulf %1144, %1148 : vector<8x32xf32>
    %1150 = arith.truncf %1126 : vector<8x32xf32> to vector<8x32xbf16>
    %cst_218 = arith.constant dense<0.000000e+00> : vector<8x128xf32>
    %1151 = tpu.matmul %1150, %1, %cst_218 {dimension_numbers = #tpu.dot_dimension_numbers<[1], [0], [0], [1], [0, 0, 1, 1], [], []>} : vector<8x32xbf16>, vector<32x128xbf16>, vector<8x128xf32> -> vector<8x128xf32>
    %1152 = arith.addf %797, %1151 : vector<8x128xf32>
    %1153 = arith.negf %1152 : vector<8x128xf32>
    %1154 = math.exp %1153 : vector<8x128xf32>
    %cst_219 = arith.constant 1.000000e+00 : f32
    %1155 = vector.broadcast %cst_219 : f32 to vector<8x128xf32>
    %1156 = arith.addf %1155, %1154 : vector<8x128xf32>
    %1157 = arith.divf %1155, %1156 : vector<8x128xf32>
    %1158 = vector.extract_strided_slice %1157 {offsets = [0, 0], sizes = [8, 32], strides = [1, 1]} : vector<8x128xf32> to vector<8x32xf32>
    %1159 = vector.extract_strided_slice %1157 {offsets = [0, 32], sizes = [8, 32], strides = [1, 1]} : vector<8x128xf32> to vector<8x32xf32>
    %1160 = vector.extract_strided_slice %1157 {offsets = [0, 64], sizes = [8, 32], strides = [1, 1]} : vector<8x128xf32> to vector<8x32xf32>
    %cst_220 = arith.constant 2.000000e+00 : f32
    %1161 = vector.broadcast %cst_220 : f32 to vector<8x32xf32>
    %1162 = arith.mulf %1161, %1160 : vector<8x32xf32>
    %cst_221 = arith.constant 1.000000e+00 : f32
    %1163 = vector.broadcast %cst_221 : f32 to vector<8x32xf32>
    %1164 = arith.subf %1162, %1163 : vector<8x32xf32>
    %1165 = vector.extract_strided_slice %1157 {offsets = [0, 96], sizes = [8, 32], strides = [1, 1]} : vector<8x128xf32> to vector<8x32xf32>
    %1166 = arith.mulf %1159, %1124 : vector<8x32xf32>
    %1167 = arith.mulf %1158, %1164 : vector<8x32xf32>
    %1168 = arith.addf %1166, %1167 : vector<8x32xf32>
    %1169 = math.tanh %1168 : vector<8x32xf32>
    %1170 = arith.mulf %1165, %1169 : vector<8x32xf32>
    %1171 = tpu.concatenate %1170, %1149 in 1 : vector<8x32xf32>, vector<8x32xf32> -> vector<8x64xf32>
    %1172 = arith.truncf %1171 : vector<8x64xf32> to vector<8x64xbf16>
    %cst_222 = arith.constant dense<0.000000e+00> : vector<8x128xf32>
    %1173 = tpu.matmul %1172, %2, %cst_222 {dimension_numbers = #tpu.dot_dimension_numbers<[1], [0], [0], [1], [0, 0, 1, 1], [], []>} : vector<8x64xbf16>, vector<64x128xbf16>, vector<8x128xf32> -> vector<8x128xf32>
    %1174 = vector.broadcast %6 : vector<1x128xf32> to vector<8x128xf32>
    %1175 = arith.addf %1173, %1174 : vector<8x128xf32>
    %1176 = arith.negf %1175 : vector<8x128xf32>
    %1177 = math.exp %1176 : vector<8x128xf32>
    %cst_223 = arith.constant 1.000000e+00 : f32
    %1178 = vector.broadcast %cst_223 : f32 to vector<8x128xf32>
    %1179 = arith.addf %1178, %1177 : vector<8x128xf32>
    %1180 = arith.divf %1178, %1179 : vector<8x128xf32>
    %1181 = vector.extract_strided_slice %1180 {offsets = [0, 0], sizes = [8, 32], strides = [1, 1]} : vector<8x128xf32> to vector<8x32xf32>
    %1182 = vector.extract_strided_slice %1180 {offsets = [0, 32], sizes = [8, 32], strides = [1, 1]} : vector<8x128xf32> to vector<8x32xf32>
    %1183 = vector.extract_strided_slice %1180 {offsets = [0, 64], sizes = [8, 32], strides = [1, 1]} : vector<8x128xf32> to vector<8x32xf32>
    %cst_224 = arith.constant 2.000000e+00 : f32
    %1184 = vector.broadcast %cst_224 : f32 to vector<8x32xf32>
    %1185 = arith.mulf %1184, %1183 : vector<8x32xf32>
    %cst_225 = arith.constant 1.000000e+00 : f32
    %1186 = vector.broadcast %cst_225 : f32 to vector<8x32xf32>
    %1187 = arith.subf %1185, %1186 : vector<8x32xf32>
    %1188 = vector.extract_strided_slice %1180 {offsets = [0, 96], sizes = [8, 32], strides = [1, 1]} : vector<8x128xf32> to vector<8x32xf32>
    %1189 = arith.mulf %1182, %1147 : vector<8x32xf32>
    %1190 = arith.mulf %1181, %1187 : vector<8x32xf32>
    %1191 = arith.addf %1189, %1190 : vector<8x32xf32>
    %1192 = math.tanh %1191 : vector<8x32xf32>
    %1193 = arith.mulf %1188, %1192 : vector<8x32xf32>
    %1194 = tpu.concatenate %377, %785, %1193 in 0 : vector<8x32xf32>, vector<8x32xf32>, vector<8x32xf32> -> vector<24x32xf32>
    %1195 = arith.truncf %1194 : vector<24x32xf32> to vector<24x32xbf16>
    %cst_226 = arith.constant dense<0.000000e+00> : vector<24x128xf32>
    %1196 = tpu.matmul %1195, %4, %cst_226 {dimension_numbers = #tpu.dot_dimension_numbers<[1], [0], [0], [1], [0, 0, 1, 1], [], []>} : vector<24x32xbf16>, vector<32x128xbf16>, vector<24x128xf32> -> vector<24x128xf32>
    %1197 = vector.broadcast %8 : vector<1x128xf32> to vector<24x128xf32>
    %1198 = arith.addf %1196, %1197 : vector<24x128xf32>
    %1199 = vector.shape_cast %1198 : vector<24x128xf32> to vector<3x8x128xf32>
    %c0_227 = arith.constant 0 : index
    %c0_228 = arith.constant 0 : index
    %c0_229 = arith.constant 0 : index
    %1200 = vector.load %arg3[%c0_227, %c0_228, %c0_229] : memref<3x8x128xf32, #tpu.memory_space<vmem>>, vector<3x8x128xf32>
    tpu.vector_store %arg3[%c0_227, %c0_228, %c0_229], %1199 {strides = array<i32>} : memref<3x8x128xf32, #tpu.memory_space<vmem>>, vector<3x8x128xf32>,
    return
  }
}

</mosaic_0001>

<llo_original>
// kernel: lstm_model_v2_forward.1
$region0: #{lstm_model_v2_forward.1}
  #allocation0 [shape = 'u32[]', space=smem, size = 0x4, offset = 0x4, fixed_abs, tag = 'smem constant byte address 0x4 - core index']
  #allocation1 [shape = 'u32[144,128]{1,0:T(1,128)}', space=vmem, size = 0x12000, scoped, tag = 'internal scratch']
  %s0 = inlined_call_operand.vmem [shape: f32[64,16], index: 0, kind: input, shape index: {}]
  %s1 = inlined_call_operand.vmem [shape: bf16[176,128], index: 1, kind: input, shape index: {}]
  %s2 = inlined_call_operand.vmem [shape: f32[8,128], index: 2, kind: input, shape index: {}]
  %s3 = inlined_call_operand.vmem [shape: f32[3,8,128], index: 3, kind: output, shape index: {}]
  %s4 = sld [smem:[#allocation0]]
  $region22: #{lstm_model_v2_forward.1} parent=0
    _
  %s6 = ssub.s32 1, %s4
  %s7 = scalar_select 0, %s6, %s4
  // Predicated region
  $region2: #{lstm_model_v2_forward.1} parent=0 // pred_check
    _
  $region3: #{lstm_model_v2_forward.1} parent=0 // pred_check_branch
    %9 = sbr.rel (0) target = $region5
  $region4: #{lstm_model_v2_forward.1} parent=0 // pred_region
    _
  $region5: #{lstm_model_v2_forward.1} parent=0 // pred_fallthru
    _
  // Predicated region
  $region6: #{lstm_model_v2_forward.1} parent=0 // pred_check
    _
  $region7: #{lstm_model_v2_forward.1} parent=0 // pred_check_branch
    %11 = sbr.rel (0) target = $region9
  $region8: #{lstm_model_v2_forward.1} parent=0 // pred_region
    _
  $region9: #{lstm_model_v2_forward.1} parent=0 // pred_fallthru
    _
  // Predicated region
  $region10: #{lstm_model_v2_forward.1} parent=0 // pred_check
    _
  $region11: #{lstm_model_v2_forward.1} parent=0 // pred_check_branch
    %13 = sbr.rel (0) target = $region13
  $region12: #{lstm_model_v2_forward.1} parent=0 // pred_region
    _
  $region13: #{lstm_model_v2_forward.1} parent=0 // pred_fallthru
    _
  %v15 = vld [vmem:[%s1] sm:$0xf]
  %v16 = vld [vmem:[%s1 + $0x4] sm:$0xf]
  %v17 = vld [vmem:[%s1 + $0x8] sm:$0xf]
  %v18 = vld [vmem:[%s1 + $0xc] sm:$0xf]
  %v19 = vld [vmem:[%s1 + $0x10] sm:$0xf]
  %v20 = vld [vmem:[%s1 + $0x14] sm:$0xf]
  %v21 = vld [vmem:[%s1 + $0x18] sm:$0xf]
  %v22 = vld [vmem:[%s1 + $0x1c] sm:$0xf]
  %v23 = vld [vmem:[%s1 + $0x20] sm:$0xf]
  %v24 = vld [vmem:[%s1 + $0x24] sm:$0xf]
  %v25 = vld [vmem:[%s1 + $0x28] sm:$0xf]
  %v26 = vld [vmem:[%s1 + $0x2c] sm:$0xf]
  %v27 = vld [vmem:[%s1 + $0x30] sm:$0xf]
  %v28 = vld [vmem:[%s1 + $0x34] sm:$0xf]
  %v29 = vld [vmem:[%s1 + $0x38] sm:$0xf]
  %v30 = vld [vmem:[%s1 + $0x3c] sm:$0xf]
  %v31 = vld [vmem:[%s1 + $0x40] sm:$0xf]
  %v32 = vld [vmem:[%s1 + $0x44] sm:$0xf]
  %v33 = vld [vmem:[%s1 + $0x48] sm:$0xf]
  %v34 = vld [vmem:[%s1 + $0x4c] sm:$0xf]
  %v35 = vld [vmem:[%s1 + $0x50] sm:$0xf]
  %v36 = vld [vmem:[%s1 + $0x54] sm:$0xf]
  %v37 = vld [vmem:[%s2] sm:$0x1]
  %v38 = vld [vmem:[%s2 + $0x1] sm:$0x1]
  %v39 = vld [vmem:[%s2 + $0x2] sm:$0x1]
  %v40 = vld [vmem:[%s2 + $0x3] sm:$0x1]
  %v41 = vld [vmem:[%s0] sm:$0xff]
  %v42 = vld [vmem:[%s0 + $0x8] sm:$0xff]
  %v43 = vld [vmem:[%s0 + $0x10] sm:$0xff]
  %v44 = vld [vmem:[%s0 + $0x18] sm:$0xff]
  %v45 = vld [vmem:[%s0 + $0x20] sm:$0xff]
  %v46 = vld [vmem:[%s0 + $0x28] sm:$0xff]
  %v47 = vld [vmem:[%s0 + $0x30] sm:$0xff]
  %v48 = vld [vmem:[%s0 + $0x38] sm:$0xff]
  %v49 = vpack.c.bf16 %v42, %v41
  %v50 = vpack.c.bf16 %v44, %v43
  %v51 = vpack.c.bf16 %v46, %v45
  %v52 = vpack.c.bf16 %v48, %v47
  %v53 = vlaneseq
  %v54 = vshrl.u32 %v53, 7
  %v55 = vsub.s32 0, %v54
  %v56 = vrot.slane %v37, %v55
  %v59 = vunpack.c.l.b16 %v15
  %v60 = vunpack.c.l.b16 %v16
  %v61 = vpack.c.b16 %v60, %v59
  %vm63 = vcmask 130048
  %v65 = vsel %vm63, %v49, 0
  %v68 = vsel %vm63, %v50, 0
  %v71 = vsel %vm63, %v51, 0
  %v74 = vsel %vm63, %v52, 0
  %76 = vmatprep.subr.bf16.mxu0 0
  %77 = vmatpush1.bf16.msra.mxu0 %v61
  %78 = vmatprep.subr.bf16.mxu0 0
  %79 = vmatpush1.bf16.msra.mxu0 0
  %80 = vmatprep.subr.bf16.mxu0 0
  %81 = vmatpush1.bf16.msra.mxu0 0
  %82 = vmatprep.subr.bf16.mxu0 0
  %83 = vmatpush1.bf16.msra.mxu0 0
  %84 = vmatprep.subr.bf16.mxu0 0
  %85 = vmatpush1.bf16.msra.mxu0 0
  %86 = vmatprep.subr.bf16.mxu0 0
  %87 = vmatpush1.bf16.msra.mxu0 0
  %88 = vmatprep.subr.bf16.mxu0 0
  %89 = vmatpush1.bf16.msra.mxu0 0
  %90 = vmatprep.subr.bf16.mxu0 0
  %91 = vmatpush1.bf16.msra.mxu0 0
  %92 = vmatprep.subr.bf16.mxu0 0
  %93 = vmatpush1.bf16.msra.mxu0 0
  %94 = vmatprep.subr.bf16.mxu0 0
  %95 = vmatpush1.bf16.msra.mxu0 0
  %96 = vmatprep.subr.bf16.mxu0 0
  %97 = vmatpush1.bf16.msra.mxu0 0
  %98 = vmatprep.subr.bf16.mxu0 0
  %99 = vmatpush1.bf16.msra.mxu0 0
  %100 = vmatprep.subr.bf16.mxu0 0
  %101 = vmatpush1.bf16.msra.mxu0 0
  %102 = vmatprep.subr.bf16.mxu0 0
  %103 = vmatpush1.bf16.msra.mxu0 0
  %104 = vmatprep.subr.bf16.mxu0 0
  %105 = vmatpush1.bf16.msra.mxu0 0
  %106 = vmatprep.subr.bf16.mxu0 0
  %107 = vmatpush1.bf16.msra.mxu0 0
  %108 = vmatprep.mubr.bf16.mxu0 0
  %109 = vmatmul.mubr.bf16.gmra.mrb[0].mxu0 %v65
  %v110 = vpop.f32.mrb[0].mxu0
  %v111 = vadd.f32 %v56, %v110
  %v112 = vpop.f32.mrb[0].mxu0
  %v113 = vpop.f32.mrb[0].mxu0
  %v114 = vadd.f32 %v56, %v113
  %v115 = vpop.f32.mrb[0].mxu0
  %116 = vmatprep.mubr.bf16.mxu0 0
  %117 = vmatmul.mubr.bf16.gmra.mrb[0].mxu0 %v68
  %v118 = vpop.f32.mrb[0].mxu0
  %v119 = vadd.f32 %v56, %v118
  %v120 = vpop.f32.mrb[0].mxu0
  %v121 = vpop.f32.mrb[0].mxu0
  %v122 = vadd.f32 %v56, %v121
  %v123 = vpop.f32.mrb[0].mxu0
  %124 = vmatprep.mubr.bf16.mxu0 0
  %125 = vmatmul.mubr.bf16.gmra.mrb[0].mxu0 %v71
  %v126 = vpop.f32.mrb[0].mxu0
  %v127 = vadd.f32 %v56, %v126
  %v128 = vpop.f32.mrb[0].mxu0
  %v129 = vpop.f32.mrb[0].mxu0
  %v130 = vadd.f32 %v56, %v129
  %v131 = vpop.f32.mrb[0].mxu0
  %132 = vmatprep.mubr.bf16.mxu0 0
  %133 = vmatmul.mubr.bf16.gmra.mrb[0].mxu0 %v74
  %v134 = vpop.f32.mrb[0].mxu0
  %v135 = vadd.f32 %v56, %v134
  %v136 = vpop.f32.mrb[0].mxu0
  %v137 = vpop.f32.mrb[0].mxu0
  %v138 = vadd.f32 %v56, %v137
  %v139 = vpop.f32.mrb[0].mxu0
  %140 = vdwg.mxu0
  %v145 = vunpack.c.l.b16 %v17
  %v146 = vunpack.c.l.b16 %v18
  %v147 = vunpack.c.l.b16 %v19
  %v148 = vunpack.c.l.b16 %v20
  %v149 = vpack.c.b16 %v146, %v145
  %v150 = vpack.c.b16 %v148, %v147
  %vm153 = vcmask 261120
  %v155 = vsel %vm153, 0, 0
  %157 = vmatprep.subr.bf16.mxu0 0
  %158 = vmatpush1.bf16.msra.mxu0 %v149
  %159 = vmatprep.subr.bf16.mxu0 0
  %160 = vmatpush1.bf16.msra.mxu0 %v150
  %161 = vmatprep.subr.bf16.mxu0 0
  %162 = vmatpush1.bf16.msra.mxu0 0
  %163 = vmatprep.subr.bf16.mxu0 0
  %164 = vmatpush1.bf16.msra.mxu0 0
  %165 = vmatprep.subr.bf16.mxu0 0
  %166 = vmatpush1.bf16.msra.mxu0 0
  %167 = vmatprep.subr.bf16.mxu0 0
  %168 = vmatpush1.bf16.msra.mxu0 0
  %169 = vmatprep.subr.bf16.mxu0 0
  %170 = vmatpush1.bf16.msra.mxu0 0
  %171 = vmatprep.subr.bf16.mxu0 0
  %172 = vmatpush1.bf16.msra.mxu0 0
  %173 = vmatprep.subr.bf16.mxu0 0
  %174 = vmatpush1.bf16.msra.mxu0 0
  %175 = vmatprep.subr.bf16.mxu0 0
  %176 = vmatpush1.bf16.msra.mxu0 0
  %177 = vmatprep.subr.bf16.mxu0 0
  %178 = vmatpush1.bf16.msra.mxu0 0
  %179 = vmatprep.subr.bf16.mxu0 0
  %180 = vmatpush1.bf16.msra.mxu0 0
  %181 = vmatprep.subr.bf16.mxu0 0
  %182 = vmatpush1.bf16.msra.mxu0 0
  %183 = vmatprep.subr.bf16.mxu0 0
  %184 = vmatpush1.bf16.msra.mxu0 0
  %185 = vmatprep.subr.bf16.mxu0 0
  %186 = vmatpush1.bf16.msra.mxu0 0
  %187 = vmatprep.subr.bf16.mxu0 0
  %188 = vmatpush1.bf16.msra.mxu0 0
  %189 = vmatprep.mubr.bf16.mxu0 0
  %190 = vmatmul.mubr.bf16.gmra.mrb[0].mxu0 %v155
  %v191 = vpop.f32.mrb[0].mxu0
  %v192 = vadd.f32 0.0, %v191
  %v193 = vpop.f32.mrb[0].mxu0
  %v194 = vpop.f32.mrb[0].mxu0
  %v195 = vpop.f32.mrb[0].mxu0
  %196 = vdwg.mxu0
  %v197 = vadd.f32 %v111, %v192
  %v198 = vxor.u32 %v197, 2147483648
  %v199 = vmul.f32 %v198, 1.442695
  %v200 = vpow.pop %v199
  %v201 = vadd.f32 %v200, 1.0
  %v202 = vrcp.pop %v201
  %v203 = vmul.f32 1.0, %v202
  %v204 = vmul.f32 %v203, 2.0
  %v205 = vsub.f32 %v204, 1.0
  %v206 = vmul.f32 %v203, 0.0
  %208 = vrot.lane.b32.xlu0 %v205, 64
  %v209 = vpop.permute.xlu0 %208
  %v211 = vmul.f32 %v203, %v209
  %213 = vrot.lane.b32.xlu0 %v211, 32
  %v214 = vpop.permute.xlu0 %213
  %v216 = vadd.f32 %v206, %v214
  %v217 = vtanh.pop %v216
  %219 = vrot.lane.b32.xlu0 %v217, 64
  %v220 = vpop.permute.xlu0 %219
  %v222 = vmul.f32 %v203, %v220
  %224 = vrot.lane.b32.xlu0 %v222, 32
  %v225 = vpop.permute.xlu0 %224
  %v227 = vsel %vm153, %v225, 0.0
  %v228 = vpack.c.bf16 %v227, %v227
  %v229 = vlaneseq
  %v230 = vshrl.u32 %v229, 7
  %v231 = vsub.s32 0, %v230
  %v232 = vrot.slane %v38, %v231
  %v241 = vunpack.c.l.b16 %v21
  %v242 = vunpack.c.l.b16 %v22
  %v243 = vunpack.c.l.b16 %v23
  %v244 = vunpack.c.l.b16 %v24
  %v245 = vunpack.c.l.b16 %v25
  %v246 = vunpack.c.l.b16 %v26
  %v247 = vunpack.c.l.b16 %v27
  %v248 = vunpack.c.l.b16 %v28
  %v249 = vpack.c.b16 %v242, %v241
  %v250 = vpack.c.b16 %v244, %v243
  %v251 = vpack.c.b16 %v246, %v245
  %v252 = vpack.c.b16 %v248, %v247
  %vm257 = vcmask 523264
  %v259 = vsel %vm257, %v228, 0
  %261 = vmatprep.subr.bf16.mxu0 0
  %262 = vmatpush1.bf16.msra.mxu0 %v249
  %263 = vmatprep.subr.bf16.mxu0 0
  %264 = vmatpush1.bf16.msra.mxu0 %v250
  %265 = vmatprep.subr.bf16.mxu0 0
  %266 = vmatpush1.bf16.msra.mxu0 %v251
  %267 = vmatprep.subr.bf16.mxu0 0
  %268 = vmatpush1.bf16.msra.mxu0 %v252
  %269 = vmatprep.subr.bf16.mxu0 0
  %270 = vmatpush1.bf16.msra.mxu0 0
  %271 = vmatprep.subr.bf16.mxu0 0
  %272 = vmatpush1.bf16.msra.mxu0 0
  %273 = vmatprep.subr.bf16.mxu0 0
  %274 = vmatpush1.bf16.msra.mxu0 0
  %275 = vmatprep.subr.bf16.mxu0 0
  %276 = vmatpush1.bf16.msra.mxu0 0
  %277 = vmatprep.subr.bf16.mxu0 0
  %278 = vmatpush1.bf16.msra.mxu0 0
  %279 = vmatprep.subr.bf16.mxu0 0
  %280 = vmatpush1.bf16.msra.mxu0 0
  %281 = vmatprep.subr.bf16.mxu0 0
  %282 = vmatpush1.bf16.msra.mxu0 0
  %283 = vmatprep.subr.bf16.mxu0 0
  %284 = vmatpush1.bf16.msra.mxu0 0
  %285 = vmatprep.subr.bf16.mxu0 0
  %286 = vmatpush1.bf16.msra.mxu0 0
  %287 = vmatprep.subr.bf16.mxu0 0
  %288 = vmatpush1.bf16.msra.mxu0 0
  %289 = vmatprep.subr.bf16.mxu0 0
  %290 = vmatpush1.bf16.msra.mxu0 0
  %291 = vmatprep.subr.bf16.mxu0 0
  %292 = vmatpush1.bf16.msra.mxu0 0
  %293 = vmatprep.mubr.bf16.mxu0 0
  %294 = vmatmul.mubr.bf16.gmra.mrb[0].mxu0 %v259
  %v295 = vpop.f32.mrb[0].mxu0
  %v296 = vadd.f32 %v232, %v295
  %v297 = vpop.f32.mrb[0].mxu0
  %v298 = vpop.f32.mrb[0].mxu0
  %v299 = vpop.f32.mrb[0].mxu0
  %300 = vdwg.mxu0
  %v301 = vxor.u32 %v296, 2147483648
  %v302 = vmul.f32 %v301, 1.442695
  %v303 = vpow.pop %v302
  %v304 = vadd.f32 %v303, 1.0
  %v305 = vrcp.pop %v304
  %v306 = vmul.f32 1.0, %v305
  %v307 = vmul.f32 %v306, 2.0
  %v308 = vsub.f32 %v307, 1.0
  %v309 = vmul.f32 %v306, 0.0
  %311 = vrot.lane.b32.xlu0 %v308, 64
  %v312 = vpop.permute.xlu0 %311
  %v314 = vmul.f32 %v306, %v312
  %316 = vrot.lane.b32.xlu0 %v314, 32
  %v317 = vpop.permute.xlu0 %316
  %v319 = vadd.f32 %v309, %v317
  %v320 = vtanh.pop %v319
  %322 = vrot.lane.b32.xlu0 %v320, 64
  %v323 = vpop.permute.xlu0 %322
  %v325 = vmul.f32 %v306, %v323
  %v326 = vpack.c.bf16 %v222, %v222
  %328 = vrot.lane.b32.xlu0 %v326, 32
  %v329 = vpop.permute.xlu0 %328
  %v331 = vsel %vm153, %v329, 0
  %333 = vmatprep.subr.bf16.mxu0 0
  %334 = vmatpush1.bf16.msra.mxu0 %v149
  %335 = vmatprep.subr.bf16.mxu0 0
  %336 = vmatpush1.bf16.msra.mxu0 %v150
  %337 = vmatprep.subr.bf16.mxu0 0
  %338 = vmatpush1.bf16.msra.mxu0 0
  %339 = vmatprep.subr.bf16.mxu0 0
  %340 = vmatpush1.bf16.msra.mxu0 0
  %341 = vmatprep.subr.bf16.mxu0 0
  %342 = vmatpush1.bf16.msra.mxu0 0
  %343 = vmatprep.subr.bf16.mxu0 0
  %344 = vmatpush1.bf16.msra.mxu0 0
  %345 = vmatprep.subr.bf16.mxu0 0
  %346 = vmatpush1.bf16.msra.mxu0 0
  %347 = vmatprep.subr.bf16.mxu0 0
  %348 = vmatpush1.bf16.msra.mxu0 0
  %349 = vmatprep.subr.bf16.mxu0 0
  %350 = vmatpush1.bf16.msra.mxu0 0
  %351 = vmatprep.subr.bf16.mxu0 0
  %352 = vmatpush1.bf16.msra.mxu0 0
  %353 = vmatprep.subr.bf16.mxu0 0
  %354 = vmatpush1.bf16.msra.mxu0 0
  %355 = vmatprep.subr.bf16.mxu0 0
  %356 = vmatpush1.bf16.msra.mxu0 0
  %357 = vmatprep.subr.bf16.mxu0 0
  %358 = vmatpush1.bf16.msra.mxu0 0
  %359 = vmatprep.subr.bf16.mxu0 0
  %360 = vmatpush1.bf16.msra.mxu0 0
  %361 = vmatprep.subr.bf16.mxu0 0
  %362 = vmatpush1.bf16.msra.mxu0 0
  %363 = vmatprep.subr.bf16.mxu0 0
  %364 = vmatpush1.bf16.msra.mxu0 0
  %365 = vmatprep.mubr.bf16.mxu0 0
  %366 = vmatmul.mubr.bf16.gmra.mrb[0].mxu0 %v331
  %v367 = vpop.f32.mrb[0].mxu0
  %v368 = vadd.f32 0.0, %v367
  %v369 = vpop.f32.mrb[0].mxu0
  %v370 = vpop.f32.mrb[0].mxu0
  %v371 = vpop.f32.mrb[0].mxu0
  %372 = vdwg.mxu0
  %v373 = vadd.f32 %v114, %v368
  %v374 = vxor.u32 %v373, 2147483648
  %v375 = vmul.f32 %v374, 1.442695
  %v376 = vpow.pop %v375
  %v377 = vadd.f32 %v376, 1.0
  %v378 = vrcp.pop %v377
  %v379 = vmul.f32 1.0, %v378
  %v380 = vmul.f32 %v379, 2.0
  %v381 = vsub.f32 %v380, 1.0
  %v382 = vmul.f32 %v379, %v216
  %384 = vrot.lane.b32.xlu0 %v381, 64
  %v385 = vpop.permute.xlu0 %384
  %v387 = vmul.f32 %v379, %v385
  %389 = vrot.lane.b32.xlu0 %v387, 32
  %v390 = vpop.permute.xlu0 %389
  %v392 = vadd.f32 %v382, %v390
  %v393 = vtanh.pop %v392
  %395 = vrot.lane.b32.xlu0 %v393, 64
  %v396 = vpop.permute.xlu0 %395
  %v398 = vmul.f32 %v379, %v396
  %400 = vrot.lane.b32.xlu0 %v398, 32
  %v401 = vpop.permute.xlu0 %400
  %404 = vrot.lane.b32.xlu0 %v325, 64
  %v405 = vpop.permute.xlu0 %404
  %v407 = vsel %vm153, %v401, %v405
  %v408 = vpack.c.bf16 %v407, %v407
  %v410 = vsel %vm257, %v408, 0
  %412 = vmatprep.subr.bf16.mxu0 0
  %413 = vmatpush1.bf16.msra.mxu0 %v249
  %414 = vmatprep.subr.bf16.mxu0 0
  %415 = vmatpush1.bf16.msra.mxu0 %v250
  %416 = vmatprep.subr.bf16.mxu0 0
  %417 = vmatpush1.bf16.msra.mxu0 %v251
  %418 = vmatprep.subr.bf16.mxu0 0
  %419 = vmatpush1.bf16.msra.mxu0 %v252
  %420 = vmatprep.subr.bf16.mxu0 0
  %421 = vmatpush1.bf16.msra.mxu0 0
  %422 = vmatprep.subr.bf16.mxu0 0
  %423 = vmatpush1.bf16.msra.mxu0 0
  %424 = vmatprep.subr.bf16.mxu0 0
  %425 = vmatpush1.bf16.msra.mxu0 0
  %426 = vmatprep.subr.bf16.mxu0 0
  %427 = vmatpush1.bf16.msra.mxu0 0
  %428 = vmatprep.subr.bf16.mxu0 0
  %429 = vmatpush1.bf16.msra.mxu0 0
  %430 = vmatprep.subr.bf16.mxu0 0
  %431 = vmatpush1.bf16.msra.mxu0 0
  %432 = vmatprep.subr.bf16.mxu0 0
  %433 = vmatpush1.bf16.msra.mxu0 0
  %434 = vmatprep.subr.bf16.mxu0 0
  %435 = vmatpush1.bf16.msra.mxu0 0
  %436 = vmatprep.subr.bf16.mxu0 0
  %437 = vmatpush1.bf16.msra.mxu0 0
  %438 = vmatprep.subr.bf16.mxu0 0
  %439 = vmatpush1.bf16.msra.mxu0 0
  %440 = vmatprep.subr.bf16.mxu0 0
  %441 = vmatpush1.bf16.msra.mxu0 0
  %442 = vmatprep.subr.bf16.mxu0 0
  %443 = vmatpush1.bf16.msra.mxu0 0
  %444 = vmatprep.mubr.bf16.mxu0 0
  %445 = vmatmul.mubr.bf16.gmra.mrb[0].mxu0 %v410
  %v446 = vpop.f32.mrb[0].mxu0
  %v447 = vadd.f32 %v232, %v446
  %v448 = vpop.f32.mrb[0].mxu0
  %v449 = vpop.f32.mrb[0].mxu0
  %v450 = vpop.f32.mrb[0].mxu0
  %451 = vdwg.mxu0
  %v452 = vxor.u32 %v447, 2147483648
  %v453 = vmul.f32 %v452, 1.442695
  %v454 = vpow.pop %v453
  %v455 = vadd.f32 %v454, 1.0
  %v456 = vrcp.pop %v455
  %v457 = vmul.f32 1.0, %v456
  %v458 = vmul.f32 %v457, 2.0
  %v459 = vsub.f32 %v458, 1.0
  %v460 = vmul.f32 %v457, %v319
  %462 = vrot.lane.b32.xlu0 %v459, 64
  %v463 = vpop.permute.xlu0 %462
  %v465 = vmul.f32 %v457, %v463
  %467 = vrot.lane.b32.xlu0 %v465, 32
  %v468 = vpop.permute.xlu0 %467
  %v470 = vadd.f32 %v460, %v468
  %v471 = vtanh.pop %v470
  %473 = vrot.lane.b32.xlu0 %v471, 64
  %v474 = vpop.permute.xlu0 %473
  %v476 = vmul.f32 %v457, %v474
  %v477 = vpack.c.bf16 %v398, %v398
  %479 = vrot.lane.b32.xlu0 %v477, 32
  %v480 = vpop.permute.xlu0 %479
  %v482 = vsel %vm153, %v480, 0
  %484 = vmatprep.subr.bf16.mxu0 0
  %485 = vmatpush1.bf16.msra.mxu0 %v149
  %486 = vmatprep.subr.bf16.mxu0 0
  %487 = vmatpush1.bf16.msra.mxu0 %v150
  %488 = vmatprep.subr.bf16.mxu0 0
  %489 = vmatpush1.bf16.msra.mxu0 0
  %490 = vmatprep.subr.bf16.mxu0 0
  %491 = vmatpush1.bf16.msra.mxu0 0
  %492 = vmatprep.subr.bf16.mxu0 0
  %493 = vmatpush1.bf16.msra.mxu0 0
  %494 = vmatprep.subr.bf16.mxu0 0
  %495 = vmatpush1.bf16.msra.mxu0 0
  %496 = vmatprep.subr.bf16.mxu0 0
  %497 = vmatpush1.bf16.msra.mxu0 0
  %498 = vmatprep.subr.bf16.mxu0 0
  %499 = vmatpush1.bf16.msra.mxu0 0
  %500 = vmatprep.subr.bf16.mxu0 0
  %501 = vmatpush1.bf16.msra.mxu0 0
  %502 = vmatprep.subr.bf16.mxu0 0
  %503 = vmatpush1.bf16.msra.mxu0 0
  %504 = vmatprep.subr.bf16.mxu0 0
  %505 = vmatpush1.bf16.msra.mxu0 0
  %506 = vmatprep.subr.bf16.mxu0 0
  %507 = vmatpush1.bf16.msra.mxu0 0
  %508 = vmatprep.subr.bf16.mxu0 0
  %509 = vmatpush1.bf16.msra.mxu0 0
  %510 = vmatprep.subr.bf16.mxu0 0
  %511 = vmatpush1.bf16.msra.mxu0 0
  %512 = vmatprep.subr.bf16.mxu0 0
  %513 = vmatpush1.bf16.msra.mxu0 0
  %514 = vmatprep.subr.bf16.mxu0 0
  %515 = vmatpush1.bf16.msra.mxu0 0
  %516 = vmatprep.mubr.bf16.mxu0 0
  %517 = vmatmul.mubr.bf16.gmra.mrb[0].mxu0 %v482
  %v518 = vpop.f32.mrb[0].mxu0
  %v519 = vadd.f32 0.0, %v518
  %v520 = vpop.f32.mrb[0].mxu0
  %v521 = vpop.f32.mrb[0].mxu0
  %v522 = vpop.f32.mrb[0].mxu0
  %523 = vdwg.mxu0
  %v524 = vadd.f32 %v119, %v519
  %v525 = vxor.u32 %v524, 2147483648
  %v526 = vmul.f32 %v525, 1.442695
  %v527 = vpow.pop %v526
  %v528 = vadd.f32 %v527, 1.0
  %v529 = vrcp.pop %v528
  %v530 = vmul.f32 1.0, %v529
  %v531 = vmul.f32 %v530, 2.0
  %v532 = vsub.f32 %v531, 1.0
  %v533 = vmul.f32 %v530, %v392
  %535 = vrot.lane.b32.xlu0 %v532, 64
  %v536 = vpop.permute.xlu0 %535
  %v538 = vmul.f32 %v530, %v536
  %540 = vrot.lane.b32.xlu0 %v538, 32
  %v541 = vpop.permute.xlu0 %540
  %v543 = vadd.f32 %v533, %v541
  %v544 = vtanh.pop %v543
  %546 = vrot.lane.b32.xlu0 %v544, 64
  %v547 = vpop.permute.xlu0 %546
  %v549 = vmul.f32 %v530, %v547
  %551 = vrot.lane.b32.xlu0 %v549, 32
  %v552 = vpop.permute.xlu0 %551
  %555 = vrot.lane.b32.xlu0 %v476, 64
  %v556 = vpop.permute.xlu0 %555
  %v558 = vsel %vm153, %v552, %v556
  %v559 = vpack.c.bf16 %v558, %v558
  %v561 = vsel %vm257, %v559, 0
  %563 = vmatprep.subr.bf16.mxu0 0
  %564 = vmatpush1.bf16.msra.mxu0 %v249
  %565 = vmatprep.subr.bf16.mxu0 0
  %566 = vmatpush1.bf16.msra.mxu0 %v250
  %567 = vmatprep.subr.bf16.mxu0 0
  %568 = vmatpush1.bf16.msra.mxu0 %v251
  %569 = vmatprep.subr.bf16.mxu0 0
  %570 = vmatpush1.bf16.msra.mxu0 %v252
  %571 = vmatprep.subr.bf16.mxu0 0
  %572 = vmatpush1.bf16.msra.mxu0 0
  %573 = vmatprep.subr.bf16.mxu0 0
  %574 = vmatpush1.bf16.msra.mxu0 0
  %575 = vmatprep.subr.bf16.mxu0 0
  %576 = vmatpush1.bf16.msra.mxu0 0
  %577 = vmatprep.subr.bf16.mxu0 0
  %578 = vmatpush1.bf16.msra.mxu0 0
  %579 = vmatprep.subr.bf16.mxu0 0
  %580 = vmatpush1.bf16.msra.mxu0 0
  %581 = vmatprep.subr.bf16.mxu0 0
  %582 = vmatpush1.bf16.msra.mxu0 0
  %583 = vmatprep.subr.bf16.mxu0 0
  %584 = vmatpush1.bf16.msra.mxu0 0
  %585 = vmatprep.subr.bf16.mxu0 0
  %586 = vmatpush1.bf16.msra.mxu0 0
  %587 = vmatprep.subr.bf16.mxu0 0
  %588 = vmatpush1.bf16.msra.mxu0 0
  %589 = vmatprep.subr.bf16.mxu0 0
  %590 = vmatpush1.bf16.msra.mxu0 0
  %591 = vmatprep.subr.bf16.mxu0 0
  %592 = vmatpush1.bf16.msra.mxu0 0
  %593 = vmatprep.subr.bf16.mxu0 0
  %594 = vmatpush1.bf16.msra.mxu0 0
  %595 = vmatprep.mubr.bf16.mxu0 0
  %596 = vmatmul.mubr.bf16.gmra.mrb[0].mxu0 %v561
  %v597 = vpop.f32.mrb[0].mxu0
  %v598 = vadd.f32 %v232, %v597
  %v599 = vpop.f32.mrb[0].mxu0
  %v600 = vpop.f32.mrb[0].mxu0
  %v601 = vpop.f32.mrb[0].mxu0
  %602 = vdwg.mxu0
  %v603 = vxor.u32 %v598, 2147483648
  %v604 = vmul.f32 %v603, 1.442695
  %v605 = vpow.pop %v604
  %v606 = vadd.f32 %v605, 1.0
  %v607 = vrcp.pop %v606
  %v608 = vmul.f32 1.0, %v607
  %v609 = vmul.f32 %v608, 2.0
  %v610 = vsub.f32 %v609, 1.0
  %v611 = vmul.f32 %v608, %v470
  %613 = vrot.lane.b32.xlu0 %v610, 64
  %v614 = vpop.permute.xlu0 %613
  %v616 = vmul.f32 %v608, %v614
  %618 = vrot.lane.b32.xlu0 %v616, 32
  %v619 = vpop.permute.xlu0 %618
  %v621 = vadd.f32 %v611, %v619
  %v622 = vtanh.pop %v621
  %624 = vrot.lane.b32.xlu0 %v622, 64
  %v625 = vpop.permute.xlu0 %624
  %v627 = vmul.f32 %v608, %v625
  %v628 = vpack.c.bf16 %v549, %v549
  %630 = vrot.lane.b32.xlu0 %v628, 32
  %v631 = vpop.permute.xlu0 %630
  %v633 = vsel %vm153, %v631, 0
  %635 = vmatprep.subr.bf16.mxu0 0
  %636 = vmatpush1.bf16.msra.mxu0 %v149
  %637 = vmatprep.subr.bf16.mxu0 0
  %638 = vmatpush1.bf16.msra.mxu0 %v150
  %639 = vmatprep.subr.bf16.mxu0 0
  %640 = vmatpush1.bf16.msra.mxu0 0
  %641 = vmatprep.subr.bf16.mxu0 0
  %642 = vmatpush1.bf16.msra.mxu0 0
  %643 = vmatprep.subr.bf16.mxu0 0
  %644 = vmatpush1.bf16.msra.mxu0 0
  %645 = vmatprep.subr.bf16.mxu0 0
  %646 = vmatpush1.bf16.msra.mxu0 0
  %647 = vmatprep.subr.bf16.mxu0 0
  %648 = vmatpush1.bf16.msra.mxu0 0
  %649 = vmatprep.subr.bf16.mxu0 0
  %650 = vmatpush1.bf16.msra.mxu0 0
  %651 = vmatprep.subr.bf16.mxu0 0
  %652 = vmatpush1.bf16.msra.mxu0 0
  %653 = vmatprep.subr.bf16.mxu0 0
  %654 = vmatpush1.bf16.msra.mxu0 0
  %655 = vmatprep.subr.bf16.mxu0 0
  %656 = vmatpush1.bf16.msra.mxu0 0
  %657 = vmatprep.subr.bf16.mxu0 0
  %658 = vmatpush1.bf16.msra.mxu0 0
  %659 = vmatprep.subr.bf16.mxu0 0
  %660 = vmatpush1.bf16.msra.mxu0 0
  %661 = vmatprep.subr.bf16.mxu0 0
  %662 = vmatpush1.bf16.msra.mxu0 0
  %663 = vmatprep.subr.bf16.mxu0 0
  %664 = vmatpush1.bf16.msra.mxu0 0
  %665 = vmatprep.subr.bf16.mxu0 0
  %666 = vmatpush1.bf16.msra.mxu0 0
  %667 = vmatprep.mubr.bf16.mxu0 0
  %668 = vmatmul.mubr.bf16.gmra.mrb[0].mxu0 %v633
  %v669 = vpop.f32.mrb[0].mxu0
  %v670 = vadd.f32 0.0, %v669
  %v671 = vpop.f32.mrb[0].mxu0
  %v672 = vpop.f32.mrb[0].mxu0
  %v673 = vpop.f32.mrb[0].mxu0
  %674 = vdwg.mxu0
  %v675 = vadd.f32 %v122, %v670
  %v676 = vxor.u32 %v675, 2147483648
  %v677 = vmul.f32 %v676, 1.442695
  %v678 = vpow.pop %v677
  %v679 = vadd.f32 %v678, 1.0
  %v680 = vrcp.pop %v679
  %v681 = vmul.f32 1.0, %v680
  %v682 = vmul.f32 %v681, 2.0
  %v683 = vsub.f32 %v682, 1.0
  %v684 = vmul.f32 %v681, %v543
  %686 = vrot.lane.b32.xlu0 %v683, 64
  %v687 = vpop.permute.xlu0 %686
  %v689 = vmul.f32 %v681, %v687
  %691 = vrot.lane.b32.xlu0 %v689, 32
  %v692 = vpop.permute.xlu0 %691
  %v694 = vadd.f32 %v684, %v692
  %v695 = vtanh.pop %v694
  %697 = vrot.lane.b32.xlu0 %v695, 64
  %v698 = vpop.permute.xlu0 %697
  %v700 = vmul.f32 %v681, %v698
  %702 = vrot.lane.b32.xlu0 %v700, 32
  %v703 = vpop.permute.xlu0 %702
  %706 = vrot.lane.b32.xlu0 %v627, 64
  %v707 = vpop.permute.xlu0 %706
  %v709 = vsel %vm153, %v703, %v707
  %v710 = vpack.c.bf16 %v709, %v709
  %v712 = vsel %vm257, %v710, 0
  %714 = vmatprep.subr.bf16.mxu0 0
  %715 = vmatpush1.bf16.msra.mxu0 %v249
  %716 = vmatprep.subr.bf16.mxu0 0
  %717 = vmatpush1.bf16.msra.mxu0 %v250
  %718 = vmatprep.subr.bf16.mxu0 0
  %719 = vmatpush1.bf16.msra.mxu0 %v251
  %720 = vmatprep.subr.bf16.mxu0 0
  %721 = vmatpush1.bf16.msra.mxu0 %v252
  %722 = vmatprep.subr.bf16.mxu0 0
  %723 = vmatpush1.bf16.msra.mxu0 0
  %724 = vmatprep.subr.bf16.mxu0 0
  %725 = vmatpush1.bf16.msra.mxu0 0
  %726 = vmatprep.subr.bf16.mxu0 0
  %727 = vmatpush1.bf16.msra.mxu0 0
  %728 = vmatprep.subr.bf16.mxu0 0
  %729 = vmatpush1.bf16.msra.mxu0 0
  %730 = vmatprep.subr.bf16.mxu0 0
  %731 = vmatpush1.bf16.msra.mxu0 0
  %732 = vmatprep.subr.bf16.mxu0 0
  %733 = vmatpush1.bf16.msra.mxu0 0
  %734 = vmatprep.subr.bf16.mxu0 0
  %735 = vmatpush1.bf16.msra.mxu0 0
  %736 = vmatprep.subr.bf16.mxu0 0
  %737 = vmatpush1.bf16.msra.mxu0 0
  %738 = vmatprep.subr.bf16.mxu0 0
  %739 = vmatpush1.bf16.msra.mxu0 0
  %740 = vmatprep.subr.bf16.mxu0 0
  %741 = vmatpush1.bf16.msra.mxu0 0
  %742 = vmatprep.subr.bf16.mxu0 0
  %743 = vmatpush1.bf16.msra.mxu0 0
  %744 = vmatprep.subr.bf16.mxu0 0
  %745 = vmatpush1.bf16.msra.mxu0 0
  %746 = vmatprep.mubr.bf16.mxu0 0
  %747 = vmatmul.mubr.bf16.gmra.mrb[0].mxu0 %v712
  %v748 = vpop.f32.mrb[0].mxu0
  %v749 = vadd.f32 %v232, %v748
  %v750 = vpop.f32.mrb[0].mxu0
  %v751 = vpop.f32.mrb[0].mxu0
  %v752 = vpop.f32.mrb[0].mxu0
  %753 = vdwg.mxu0
  %v754 = vxor.u32 %v749, 2147483648
  %v755 = vmul.f32 %v754, 1.442695
  %v756 = vpow.pop %v755
  %v757 = vadd.f32 %v756, 1.0
  %v758 = vrcp.pop %v757
  %v759 = vmul.f32 1.0, %v758
  %v760 = vmul.f32 %v759, 2.0
  %v761 = vsub.f32 %v760, 1.0
  %v762 = vmul.f32 %v759, %v621
  %764 = vrot.lane.b32.xlu0 %v761, 64
  %v765 = vpop.permute.xlu0 %764
  %v767 = vmul.f32 %v759, %v765
  %769 = vrot.lane.b32.xlu0 %v767, 32
  %v770 = vpop.permute.xlu0 %769
  %v772 = vadd.f32 %v762, %v770
  %v773 = vtanh.pop %v772
  %775 = vrot.lane.b32.xlu0 %v773, 64
  %v776 = vpop.permute.xlu0 %775
  %v778 = vmul.f32 %v759, %v776
  %v779 = vpack.c.bf16 %v700, %v700
  %781 = vrot.lane.b32.xlu0 %v779, 32
  %v782 = vpop.permute.xlu0 %781
  %v784 = vsel %vm153, %v782, 0
  %786 = vmatprep.subr.bf16.mxu0 0
  %787 = vmatpush1.bf16.msra.mxu0 %v149
  %788 = vmatprep.subr.bf16.mxu0 0
  %789 = vmatpush1.bf16.msra.mxu0 %v150
  %790 = vmatprep.subr.bf16.mxu0 0
  %791 = vmatpush1.bf16.msra.mxu0 0
  %792 = vmatprep.subr.bf16.mxu0 0
  %793 = vmatpush1.bf16.msra.mxu0 0
  %794 = vmatprep.subr.bf16.mxu0 0
  %795 = vmatpush1.bf16.msra.mxu0 0
  %796 = vmatprep.subr.bf16.mxu0 0
  %797 = vmatpush1.bf16.msra.mxu0 0
  %798 = vmatprep.subr.bf16.mxu0 0
  %799 = vmatpush1.bf16.msra.mxu0 0
  %800 = vmatprep.subr.bf16.mxu0 0
  %801 = vmatpush1.bf16.msra.mxu0 0
  %802 = vmatprep.subr.bf16.mxu0 0
  %803 = vmatpush1.bf16.msra.mxu0 0
  %804 = vmatprep.subr.bf16.mxu0 0
  %805 = vmatpush1.bf16.msra.mxu0 0
  %806 = vmatprep.subr.bf16.mxu0 0
  %807 = vmatpush1.bf16.msra.mxu0 0
  %808 = vmatprep.subr.bf16.mxu0 0
  %809 = vmatpush1.bf16.msra.mxu0 0
  %810 = vmatprep.subr.bf16.mxu0 0
  %811 = vmatpush1.bf16.msra.mxu0 0
  %812 = vmatprep.subr.bf16.mxu0 0
  %813 = vmatpush1.bf16.msra.mxu0 0
  %814 = vmatprep.subr.bf16.mxu0 0
  %815 = vmatpush1.bf16.msra.mxu0 0
  %816 = vmatprep.subr.bf16.mxu0 0
  %817 = vmatpush1.bf16.msra.mxu0 0
  %818 = vmatprep.mubr.bf16.mxu0 0
  %819 = vmatmul.mubr.bf16.gmra.mrb[0].mxu0 %v784
  %v820 = vpop.f32.mrb[0].mxu0
  %v821 = vadd.f32 0.0, %v820
  %v822 = vpop.f32.mrb[0].mxu0
  %v823 = vpop.f32.mrb[0].mxu0
  %v824 = vpop.f32.mrb[0].mxu0
  %825 = vdwg.mxu0
  %v826 = vadd.f32 %v127, %v821
  %v827 = vxor.u32 %v826, 2147483648
  %v828 = vmul.f32 %v827, 1.442695
  %v829 = vpow.pop %v828
  %v830 = vadd.f32 %v829, 1.0
  %v831 = vrcp.pop %v830
  %v832 = vmul.f32 1.0, %v831
  %v833 = vmul.f32 %v832, 2.0
  %v834 = vsub.f32 %v833, 1.0
  %v835 = vmul.f32 %v832, %v694
  %837 = vrot.lane.b32.xlu0 %v834, 64
  %v838 = vpop.permute.xlu0 %837
  %v840 = vmul.f32 %v832, %v838
  %842 = vrot.lane.b32.xlu0 %v840, 32
  %v843 = vpop.permute.xlu0 %842
  %v845 = vadd.f32 %v835, %v843
  %v846 = vtanh.pop %v845
  %848 = vrot.lane.b32.xlu0 %v846, 64
  %v849 = vpop.permute.xlu0 %848
  %v851 = vmul.f32 %v832, %v849
  %853 = vrot.lane.b32.xlu0 %v851, 32
  %v854 = vpop.permute.xlu0 %853
  %857 = vrot.lane.b32.xlu0 %v778, 64
  %v858 = vpop.permute.xlu0 %857
  %v860 = vsel %vm153, %v854, %v858
  %v861 = vpack.c.bf16 %v860, %v860
  %v863 = vsel %vm257, %v861, 0
  %865 = vmatprep.subr.bf16.mxu0 0
  %866 = vmatpush1.bf16.msra.mxu0 %v249
  %867 = vmatprep.subr.bf16.mxu0 0
  %868 = vmatpush1.bf16.msra.mxu0 %v250
  %869 = vmatprep.subr.bf16.mxu0 0
  %870 = vmatpush1.bf16.msra.mxu0 %v251
  %871 = vmatprep.subr.bf16.mxu0 0
  %872 = vmatpush1.bf16.msra.mxu0 %v252
  %873 = vmatprep.subr.bf16.mxu0 0
  %874 = vmatpush1.bf16.msra.mxu0 0
  %875 = vmatprep.subr.bf16.mxu0 0
  %876 = vmatpush1.bf16.msra.mxu0 0
  %877 = vmatprep.subr.bf16.mxu0 0
  %878 = vmatpush1.bf16.msra.mxu0 0
  %879 = vmatprep.subr.bf16.mxu0 0
  %880 = vmatpush1.bf16.msra.mxu0 0
  %881 = vmatprep.subr.bf16.mxu0 0
  %882 = vmatpush1.bf16.msra.mxu0 0
  %883 = vmatprep.subr.bf16.mxu0 0
  %884 = vmatpush1.bf16.msra.mxu0 0
  %885 = vmatprep.subr.bf16.mxu0 0
  %886 = vmatpush1.bf16.msra.mxu0 0
  %887 = vmatprep.subr.bf16.mxu0 0
  %888 = vmatpush1.bf16.msra.mxu0 0
  %889 = vmatprep.subr.bf16.mxu0 0
  %890 = vmatpush1.bf16.msra.mxu0 0
  %891 = vmatprep.subr.bf16.mxu0 0
  %892 = vmatpush1.bf16.msra.mxu0 0
  %893 = vmatprep.subr.bf16.mxu0 0
  %894 = vmatpush1.bf16.msra.mxu0 0
  %895 = vmatprep.subr.bf16.mxu0 0
  %896 = vmatpush1.bf16.msra.mxu0 0
  %897 = vmatprep.mubr.bf16.mxu0 0
  %898 = vmatmul.mubr.bf16.gmra.mrb[0].mxu0 %v863
  %v899 = vpop.f32.mrb[0].mxu0
  %v900 = vadd.f32 %v232, %v899
  %v901 = vpop.f32.mrb[0].mxu0
  %v902 = vpop.f32.mrb[0].mxu0
  %v903 = vpop.f32.mrb[0].mxu0
  %904 = vdwg.mxu0
  %v905 = vxor.u32 %v900, 2147483648
  %v906 = vmul.f32 %v905, 1.442695
  %v907 = vpow.pop %v906
  %v908 = vadd.f32 %v907, 1.0
  %v909 = vrcp.pop %v908
  %v910 = vmul.f32 1.0, %v909
  %v911 = vmul.f32 %v910, 2.0
  %v912 = vsub.f32 %v911, 1.0
  %v913 = vmul.f32 %v910, %v772
  %915 = vrot.lane.b32.xlu0 %v912, 64
  %v916 = vpop.permute.xlu0 %915
  %v918 = vmul.f32 %v910, %v916
  %920 = vrot.lane.b32.xlu0 %v918, 32
  %v921 = vpop.permute.xlu0 %920
  %v923 = vadd.f32 %v913, %v921
  %v924 = vtanh.pop %v923
  %926 = vrot.lane.b32.xlu0 %v924, 64
  %v927 = vpop.permute.xlu0 %926
  %v929 = vmul.f32 %v910, %v927
  %v930 = vpack.c.bf16 %v851, %v851
  %932 = vrot.lane.b32.xlu0 %v930, 32
  %v933 = vpop.permute.xlu0 %932
  %v935 = vsel %vm153, %v933, 0
  %937 = vmatprep.subr.bf16.mxu0 0
  %938 = vmatpush1.bf16.msra.mxu0 %v149
  %939 = vmatprep.subr.bf16.mxu0 0
  %940 = vmatpush1.bf16.msra.mxu0 %v150
  %941 = vmatprep.subr.bf16.mxu0 0
  %942 = vmatpush1.bf16.msra.mxu0 0
  %943 = vmatprep.subr.bf16.mxu0 0
  %944 = vmatpush1.bf16.msra.mxu0 0
  %945 = vmatprep.subr.bf16.mxu0 0
  %946 = vmatpush1.bf16.msra.mxu0 0
  %947 = vmatprep.subr.bf16.mxu0 0
  %948 = vmatpush1.bf16.msra.mxu0 0
  %949 = vmatprep.subr.bf16.mxu0 0
  %950 = vmatpush1.bf16.msra.mxu0 0
  %951 = vmatprep.subr.bf16.mxu0 0
  %952 = vmatpush1.bf16.msra.mxu0 0
  %953 = vmatprep.subr.bf16.mxu0 0
  %954 = vmatpush1.bf16.msra.mxu0 0
  %955 = vmatprep.subr.bf16.mxu0 0
  %956 = vmatpush1.bf16.msra.mxu0 0
  %957 = vmatprep.subr.bf16.mxu0 0
  %958 = vmatpush1.bf16.msra.mxu0 0
  %959 = vmatprep.subr.bf16.mxu0 0
  %960 = vmatpush1.bf16.msra.mxu0 0
  %961 = vmatprep.subr.bf16.mxu0 0
  %962 = vmatpush1.bf16.msra.mxu0 0
  %963 = vmatprep.subr.bf16.mxu0 0
  %964 = vmatpush1.bf16.msra.mxu0 0
  %965 = vmatprep.subr.bf16.mxu0 0
  %966 = vmatpush1.bf16.msra.mxu0 0
  %967 = vmatprep.subr.bf16.mxu0 0
  %968 = vmatpush1.bf16.msra.mxu0 0
  %969 = vmatprep.mubr.bf16.mxu0 0
  %970 = vmatmul.mubr.bf16.gmra.mrb[0].mxu0 %v935
  %v971 = vpop.f32.mrb[0].mxu0
  %v972 = vadd.f32 0.0, %v971
  %v973 = vpop.f32.mrb[0].mxu0
  %v974 = vpop.f32.mrb[0].mxu0
  %v975 = vpop.f32.mrb[0].mxu0
  %976 = vdwg.mxu0
  %v977 = vadd.f32 %v130, %v972
  %v978 = vxor.u32 %v977, 2147483648
  %v979 = vmul.f32 %v978, 1.442695
  %v980 = vpow.pop %v979
  %v981 = vadd.f32 %v980, 1.0
  %v982 = vrcp.pop %v981
  %v983 = vmul.f32 1.0, %v982
  %v984 = vmul.f32 %v983, 2.0
  %v985 = vsub.f32 %v984, 1.0
  %v986 = vmul.f32 %v983, %v845
  %988 = vrot.lane.b32.xlu0 %v985, 64
  %v989 = vpop.permute.xlu0 %988
  %v991 = vmul.f32 %v983, %v989
  %993 = vrot.lane.b32.xlu0 %v991, 32
  %v994 = vpop.permute.xlu0 %993
  %v996 = vadd.f32 %v986, %v994
  %v997 = vtanh.pop %v996
  %999 = vrot.lane.b32.xlu0 %v997, 64
  %v1000 = vpop.permute.xlu0 %999
  %v1002 = vmul.f32 %v983, %v1000
  %1004 = vrot.lane.b32.xlu0 %v1002, 32
  %v1005 = vpop.permute.xlu0 %1004
  %1008 = vrot.lane.b32.xlu0 %v929, 64
  %v1009 = vpop.permute.xlu0 %1008
  %v1011 = vsel %vm153, %v1005, %v1009
  %v1012 = vpack.c.bf16 %v1011, %v1011
  %v1014 = vsel %vm257, %v1012, 0
  %1016 = vmatprep.subr.bf16.mxu0 0
  %1017 = vmatpush1.bf16.msra.mxu0 %v249
  %1018 = vmatprep.subr.bf16.mxu0 0
  %1019 = vmatpush1.bf16.msra.mxu0 %v250
  %1020 = vmatprep.subr.bf16.mxu0 0
  %1021 = vmatpush1.bf16.msra.mxu0 %v251
  %1022 = vmatprep.subr.bf16.mxu0 0
  %1023 = vmatpush1.bf16.msra.mxu0 %v252
  %1024 = vmatprep.subr.bf16.mxu0 0
  %1025 = vmatpush1.bf16.msra.mxu0 0
  %1026 = vmatprep.subr.bf16.mxu0 0
  %1027 = vmatpush1.bf16.msra.mxu0 0
  %1028 = vmatprep.subr.bf16.mxu0 0
  %1029 = vmatpush1.bf16.msra.mxu0 0
  %1030 = vmatprep.subr.bf16.mxu0 0
  %1031 = vmatpush1.bf16.msra.mxu0 0
  %1032 = vmatprep.subr.bf16.mxu0 0
  %1033 = vmatpush1.bf16.msra.mxu0 0
  %1034 = vmatprep.subr.bf16.mxu0 0
  %1035 = vmatpush1.bf16.msra.mxu0 0
  %1036 = vmatprep.subr.bf16.mxu0 0
  %1037 = vmatpush1.bf16.msra.mxu0 0
  %1038 = vmatprep.subr.bf16.mxu0 0
  %1039 = vmatpush1.bf16.msra.mxu0 0
  %1040 = vmatprep.subr.bf16.mxu0 0
  %1041 = vmatpush1.bf16.msra.mxu0 0
  %1042 = vmatprep.subr.bf16.mxu0 0
  %1043 = vmatpush1.bf16.msra.mxu0 0
  %1044 = vmatprep.subr.bf16.mxu0 0
  %1045 = vmatpush1.bf16.msra.mxu0 0
  %1046 = vmatprep.subr.bf16.mxu0 0
  %1047 = vmatpush1.bf16.msra.mxu0 0
  %1048 = vmatprep.mubr.bf16.mxu0 0
  %1049 = vmatmul.mubr.bf16.gmra.mrb[0].mxu0 %v1014
  %v1050 = vpop.f32.mrb[0].mxu0
  %v1051 = vadd.f32 %v232, %v1050
  %v1052 = vpop.f32.mrb[0].mxu0
  %v1053 = vpop.f32.mrb[0].mxu0
  %v1054 = vpop.f32.mrb[0].mxu0
  %1055 = vdwg.mxu0
  %v1056 = vxor.u32 %v1051, 2147483648
  %v1057 = vmul.f32 %v1056, 1.442695
  %v1058 = vpow.pop %v1057
  %v1059 = vadd.f32 %v1058, 1.0
  %v1060 = vrcp.pop %v1059
  %v1061 = vmul.f32 1.0, %v1060
  %v1062 = vmul.f32 %v1061, 2.0
  %v1063 = vsub.f32 %v1062, 1.0
  %v1064 = vmul.f32 %v1061, %v923
  %1066 = vrot.lane.b32.xlu0 %v1063, 64
  %v1067 = vpop.permute.xlu0 %1066
  %v1069 = vmul.f32 %v1061, %v1067
  %1071 = vrot.lane.b32.xlu0 %v1069, 32
  %v1072 = vpop.permute.xlu0 %1071
  %v1074 = vadd.f32 %v1064, %v1072
  %v1075 = vtanh.pop %v1074
  %1077 = vrot.lane.b32.xlu0 %v1075, 64
  %v1078 = vpop.permute.xlu0 %1077
  %v1080 = vmul.f32 %v1061, %v1078
  %v1081 = vpack.c.bf16 %v1002, %v1002
  %1083 = vrot.lane.b32.xlu0 %v1081, 32
  %v1084 = vpop.permute.xlu0 %1083
  %v1086 = vsel %vm153, %v1084, 0
  %1088 = vmatprep.subr.bf16.mxu0 0
  %1089 = vmatpush1.bf16.msra.mxu0 %v149
  %1090 = vmatprep.subr.bf16.mxu0 0
  %1091 = vmatpush1.bf16.msra.mxu0 %v150
  %1092 = vmatprep.subr.bf16.mxu0 0
  %1093 = vmatpush1.bf16.msra.mxu0 0
  %1094 = vmatprep.subr.bf16.mxu0 0
  %1095 = vmatpush1.bf16.msra.mxu0 0
  %1096 = vmatprep.subr.bf16.mxu0 0
  %1097 = vmatpush1.bf16.msra.mxu0 0
  %1098 = vmatprep.subr.bf16.mxu0 0
  %1099 = vmatpush1.bf16.msra.mxu0 0
  %1100 = vmatprep.subr.bf16.mxu0 0
  %1101 = vmatpush1.bf16.msra.mxu0 0
  %1102 = vmatprep.subr.bf16.mxu0 0
  %1103 = vmatpush1.bf16.msra.mxu0 0
  %1104 = vmatprep.subr.bf16.mxu0 0
  %1105 = vmatpush1.bf16.msra.mxu0 0
  %1106 = vmatprep.subr.bf16.mxu0 0
  %1107 = vmatpush1.bf16.msra.mxu0 0
  %1108 = vmatprep.subr.bf16.mxu0 0
  %1109 = vmatpush1.bf16.msra.mxu0 0
  %1110 = vmatprep.subr.bf16.mxu0 0
  %1111 = vmatpush1.bf16.msra.mxu0 0
  %1112 = vmatprep.subr.bf16.mxu0 0
  %1113 = vmatpush1.bf16.msra.mxu0 0
  %1114 = vmatprep.subr.bf16.mxu0 0
  %1115 = vmatpush1.bf16.msra.mxu0 0
  %1116 = vmatprep.subr.bf16.mxu0 0
  %1117 = vmatpush1.bf16.msra.mxu0 0
  %1118 = vmatprep.subr.bf16.mxu0 0
  %1119 = vmatpush1.bf16.msra.mxu0 0
  %1120 = vmatprep.mubr.bf16.mxu0 0
  %1121 = vmatmul.mubr.bf16.gmra.mrb[0].mxu0 %v1086
  %v1122 = vpop.f32.mrb[0].mxu0
  %v1123 = vadd.f32 0.0, %v1122
  %v1124 = vpop.f32.mrb[0].mxu0
  %v1125 = vpop.f32.mrb[0].mxu0
  %v1126 = vpop.f32.mrb[0].mxu0
  %1127 = vdwg.mxu0
  %v1128 = vadd.f32 %v135, %v1123
  %v1129 = vxor.u32 %v1128, 2147483648
  %v1130 = vmul.f32 %v1129, 1.442695
  %v1131 = vpow.pop %v1130
  %v1132 = vadd.f32 %v1131, 1.0
  %v1133 = vrcp.pop %v1132
  %v1134 = vmul.f32 1.0, %v1133
  %v1135 = vmul.f32 %v1134, 2.0
  %v1136 = vsub.f32 %v1135, 1.0
  %v1137 = vmul.f32 %v1134, %v996
  %1139 = vrot.lane.b32.xlu0 %v1136, 64
  %v1140 = vpop.permute.xlu0 %1139
  %v1142 = vmul.f32 %v1134, %v1140
  %1144 = vrot.lane.b32.xlu0 %v1142, 32
  %v1145 = vpop.permute.xlu0 %1144
  %v1147 = vadd.f32 %v1137, %v1145
  %v1148 = vtanh.pop %v1147
  %1150 = vrot.lane.b32.xlu0 %v1148, 64
  %v1151 = vpop.permute.xlu0 %1150
  %v1153 = vmul.f32 %v1134, %v1151
  %1155 = vrot.lane.b32.xlu0 %v1153, 32
  %v1156 = vpop.permute.xlu0 %1155
  %1159 = vrot.lane.b32.xlu0 %v1080, 64
  %v1160 = vpop.permute.xlu0 %1159
  %v1162 = vsel %vm153, %v1156, %v1160
  %v1163 = vpack.c.bf16 %v1162, %v1162
  %v1165 = vsel %vm257, %v1163, 0
  %1167 = vmatprep.subr.bf16.mxu0 0
  %1168 = vmatpush1.bf16.msra.mxu0 %v249
  %1169 = vmatprep.subr.bf16.mxu0 0
  %1170 = vmatpush1.bf16.msra.mxu0 %v250
  %1171 = vmatprep.subr.bf16.mxu0 0
  %1172 = vmatpush1.bf16.msra.mxu0 %v251
  %1173 = vmatprep.subr.bf16.mxu0 0
  %1174 = vmatpush1.bf16.msra.mxu0 %v252
  %1175 = vmatprep.subr.bf16.mxu0 0
  %1176 = vmatpush1.bf16.msra.mxu0 0
  %1177 = vmatprep.subr.bf16.mxu0 0
  %1178 = vmatpush1.bf16.msra.mxu0 0
  %1179 = vmatprep.subr.bf16.mxu0 0
  %1180 = vmatpush1.bf16.msra.mxu0 0
  %1181 = vmatprep.subr.bf16.mxu0 0
  %1182 = vmatpush1.bf16.msra.mxu0 0
  %1183 = vmatprep.subr.bf16.mxu0 0
  %1184 = vmatpush1.bf16.msra.mxu0 0
  %1185 = vmatprep.subr.bf16.mxu0 0
  %1186 = vmatpush1.bf16.msra.mxu0 0
  %1187 = vmatprep.subr.bf16.mxu0 0
  %1188 = vmatpush1.bf16.msra.mxu0 0
  %1189 = vmatprep.subr.bf16.mxu0 0
  %1190 = vmatpush1.bf16.msra.mxu0 0
  %1191 = vmatprep.subr.bf16.mxu0 0
  %1192 = vmatpush1.bf16.msra.mxu0 0
  %1193 = vmatprep.subr.bf16.mxu0 0
  %1194 = vmatpush1.bf16.msra.mxu0 0
  %1195 = vmatprep.subr.bf16.mxu0 0
  %1196 = vmatpush1.bf16.msra.mxu0 0
  %1197 = vmatprep.subr.bf16.mxu0 0
  %1198 = vmatpush1.bf16.msra.mxu0 0
  %1199 = vmatprep.mubr.bf16.mxu0 0
  %1200 = vmatmul.mubr.bf16.gmra.mrb[0].mxu0 %v1165
  %v1201 = vpop.f32.mrb[0].mxu0
  %v1202 = vadd.f32 %v232, %v1201
  %v1203 = vpop.f32.mrb[0].mxu0
  %v1204 = vpop.f32.mrb[0].mxu0
  %v1205 = vpop.f32.mrb[0].mxu0
  %1206 = vdwg.mxu0
  %v1207 = vxor.u32 %v1202, 2147483648
  %v1208 = vmul.f32 %v1207, 1.442695
  %v1209 = vpow.pop %v1208
  %v1210 = vadd.f32 %v1209, 1.0
  %v1211 = vrcp.pop %v1210
  %v1212 = vmul.f32 1.0, %v1211
  %v1213 = vmul.f32 %v1212, 2.0
  %v1214 = vsub.f32 %v1213, 1.0
  %v1215 = vmul.f32 %v1212, %v1074
  %1217 = vrot.lane.b32.xlu0 %v1214, 64
  %v1218 = vpop.permute.xlu0 %1217
  %v1220 = vmul.f32 %v1212, %v1218
  %1222 = vrot.lane.b32.xlu0 %v1220, 32
  %v1223 = vpop.permute.xlu0 %1222
  %v1225 = vadd.f32 %v1215, %v1223
  %v1226 = vtanh.pop %v1225
  %1228 = vrot.lane.b32.xlu0 %v1226, 64
  %v1229 = vpop.permute.xlu0 %1228
  %v1231 = vmul.f32 %v1212, %v1229
  %v1232 = vpack.c.bf16 %v1153, %v1153
  %1234 = vrot.lane.b32.xlu0 %v1232, 32
  %v1235 = vpop.permute.xlu0 %1234
  %v1237 = vsel %vm153, %v1235, 0
  %1239 = vmatprep.subr.bf16.mxu0 0
  %1240 = vmatpush1.bf16.msra.mxu0 %v149
  %1241 = vmatprep.subr.bf16.mxu0 0
  %1242 = vmatpush1.bf16.msra.mxu0 %v150
  %1243 = vmatprep.subr.bf16.mxu0 0
  %1244 = vmatpush1.bf16.msra.mxu0 0
  %1245 = vmatprep.subr.bf16.mxu0 0
  %1246 = vmatpush1.bf16.msra.mxu0 0
  %1247 = vmatprep.subr.bf16.mxu0 0
  %1248 = vmatpush1.bf16.msra.mxu0 0
  %1249 = vmatprep.subr.bf16.mxu0 0
  %1250 = vmatpush1.bf16.msra.mxu0 0
  %1251 = vmatprep.subr.bf16.mxu0 0
  %1252 = vmatpush1.bf16.msra.mxu0 0
  %1253 = vmatprep.subr.bf16.mxu0 0
  %1254 = vmatpush1.bf16.msra.mxu0 0
  %1255 = vmatprep.subr.bf16.mxu0 0
  %1256 = vmatpush1.bf16.msra.mxu0 0
  %1257 = vmatprep.subr.bf16.mxu0 0
  %1258 = vmatpush1.bf16.msra.mxu0 0
  %1259 = vmatprep.subr.bf16.mxu0 0
  %1260 = vmatpush1.bf16.msra.mxu0 0
  %1261 = vmatprep.subr.bf16.mxu0 0
  %1262 = vmatpush1.bf16.msra.mxu0 0
  %1263 = vmatprep.subr.bf16.mxu0 0
  %1264 = vmatpush1.bf16.msra.mxu0 0
  %1265 = vmatprep.subr.bf16.mxu0 0
  %1266 = vmatpush1.bf16.msra.mxu0 0
  %1267 = vmatprep.subr.bf16.mxu0 0
  %1268 = vmatpush1.bf16.msra.mxu0 0
  %1269 = vmatprep.subr.bf16.mxu0 0
  %1270 = vmatpush1.bf16.msra.mxu0 0
  %1271 = vmatprep.mubr.bf16.mxu0 0
  %1272 = vmatmul.mubr.bf16.gmra.mrb[0].mxu0 %v1237
  %v1273 = vpop.f32.mrb[0].mxu0
  %v1274 = vadd.f32 0.0, %v1273
  %v1275 = vpop.f32.mrb[0].mxu0
  %v1276 = vpop.f32.mrb[0].mxu0
  %v1277 = vpop.f32.mrb[0].mxu0
  %1278 = vdwg.mxu0
  %v1279 = vadd.f32 %v138, %v1274
  %v1280 = vxor.u32 %v1279, 2147483648
  %v1281 = vmul.f32 %v1280, 1.442695
  %v1282 = vpow.pop %v1281
  %v1283 = vadd.f32 %v1282, 1.0
  %v1284 = vrcp.pop %v1283
  %v1285 = vmul.f32 1.0, %v1284
  %v1286 = vmul.f32 %v1285, 2.0
  %v1287 = vsub.f32 %v1286, 1.0
  %v1288 = vmul.f32 %v1285, %v1147
  %1290 = vrot.lane.b32.xlu0 %v1287, 64
  %v1291 = vpop.permute.xlu0 %1290
  %v1293 = vmul.f32 %v1285, %v1291
  %1295 = vrot.lane.b32.xlu0 %v1293, 32
  %v1296 = vpop.permute.xlu0 %1295
  %v1298 = vadd.f32 %v1288, %v1296
  %v1299 = vtanh.pop %v1298
  %1301 = vrot.lane.b32.xlu0 %v1299, 64
  %v1302 = vpop.permute.xlu0 %1301
  %v1304 = vmul.f32 %v1285, %v1302
  %1306 = vrot.lane.b32.xlu0 %v1304, 32
  %v1307 = vpop.permute.xlu0 %1306
  %1310 = vrot.lane.b32.xlu0 %v1231, 64
  %v1311 = vpop.permute.xlu0 %1310
  %v1313 = vsel %vm153, %v1307, %v1311
  %v1314 = vpack.c.bf16 %v1313, %v1313
  %v1316 = vsel %vm257, %v1314, 0
  %1318 = vmatprep.subr.bf16.mxu0 0
  %1319 = vmatpush1.bf16.msra.mxu0 %v249
  %1320 = vmatprep.subr.bf16.mxu0 0
  %1321 = vmatpush1.bf16.msra.mxu0 %v250
  %1322 = vmatprep.subr.bf16.mxu0 0
  %1323 = vmatpush1.bf16.msra.mxu0 %v251
  %1324 = vmatprep.subr.bf16.mxu0 0
  %1325 = vmatpush1.bf16.msra.mxu0 %v252
  %1326 = vmatprep.subr.bf16.mxu0 0
  %1327 = vmatpush1.bf16.msra.mxu0 0
  %1328 = vmatprep.subr.bf16.mxu0 0
  %1329 = vmatpush1.bf16.msra.mxu0 0
  %1330 = vmatprep.subr.bf16.mxu0 0
  %1331 = vmatpush1.bf16.msra.mxu0 0
  %1332 = vmatprep.subr.bf16.mxu0 0
  %1333 = vmatpush1.bf16.msra.mxu0 0
  %1334 = vmatprep.subr.bf16.mxu0 0
  %1335 = vmatpush1.bf16.msra.mxu0 0
  %1336 = vmatprep.subr.bf16.mxu0 0
  %1337 = vmatpush1.bf16.msra.mxu0 0
  %1338 = vmatprep.subr.bf16.mxu0 0
  %1339 = vmatpush1.bf16.msra.mxu0 0
  %1340 = vmatprep.subr.bf16.mxu0 0
  %1341 = vmatpush1.bf16.msra.mxu0 0
  %1342 = vmatprep.subr.bf16.mxu0 0
  %1343 = vmatpush1.bf16.msra.mxu0 0
  %1344 = vmatprep.subr.bf16.mxu0 0
  %1345 = vmatpush1.bf16.msra.mxu0 0
  %1346 = vmatprep.subr.bf16.mxu0 0
  %1347 = vmatpush1.bf16.msra.mxu0 0
  %1348 = vmatprep.subr.bf16.mxu0 0
  %1349 = vmatpush1.bf16.msra.mxu0 0
  %1350 = vmatprep.mubr.bf16.mxu0 0
  %1351 = vmatmul.mubr.bf16.gmra.mrb[0].mxu0 %v1316
  %v1352 = vpop.f32.mrb[0].mxu0
  %v1353 = vadd.f32 %v232, %v1352
  %v1354 = vpop.f32.mrb[0].mxu0
  %v1355 = vpop.f32.mrb[0].mxu0
  %v1356 = vpop.f32.mrb[0].mxu0
  %1357 = vdwg.mxu0
  %v1358 = vxor.u32 %v1353, 2147483648
  %v1359 = vmul.f32 %v1358, 1.442695
  %v1360 = vpow.pop %v1359
  %v1361 = vadd.f32 %v1360, 1.0
  %v1362 = vrcp.pop %v1361
  %v1363 = vmul.f32 1.0, %v1362
  %v1364 = vmul.f32 %v1363, 2.0
  %v1365 = vsub.f32 %v1364, 1.0
  %v1366 = vmul.f32 %v1363, %v1225
  %1368 = vrot.lane.b32.xlu0 %v1365, 64
  %v1369 = vpop.permute.xlu0 %1368
  %v1371 = vmul.f32 %v1363, %v1369
  %1373 = vrot.lane.b32.xlu0 %v1371, 32
  %v1374 = vpop.permute.xlu0 %1373
  %v1376 = vadd.f32 %v1366, %v1374
  %v1377 = vtanh.pop %v1376
  %1379 = vrot.lane.b32.xlu0 %v1377, 64
  %v1380 = vpop.permute.xlu0 %1379
  %v1382 = vmul.f32 %v1363, %v1380
  %v1383 = vpack.c.bf16 %v1382, %v1382
  %v1384 = vlaneseq
  %v1385 = vshrl.u32 %v1384, 7
  %v1386 = vsub.s32 0, %v1385
  %v1387 = vrot.slane %v39, %v1386
  %1389 = vrot.lane.b32.xlu0 %v1383, 32
  %v1390 = vpop.permute.xlu0 %1389
  %v1395 = vunpack.c.l.b16 %v29
  %v1396 = vunpack.c.l.b16 %v30
  %v1397 = vunpack.c.l.b16 %v31
  %v1398 = vunpack.c.l.b16 %v32
  %v1399 = vpack.c.b16 %v1396, %v1395
  %v1400 = vpack.c.b16 %v1398, %v1397
  %v1404 = vsel %vm153, %v1390, 0
  %1406 = vmatprep.subr.bf16.mxu0 0
  %1407 = vmatpush1.bf16.msra.mxu0 %v1399
  %1408 = vmatprep.subr.bf16.mxu0 0
  %1409 = vmatpush1.bf16.msra.mxu0 %v1400
  %1410 = vmatprep.subr.bf16.mxu0 0
  %1411 = vmatpush1.bf16.msra.mxu0 0
  %1412 = vmatprep.subr.bf16.mxu0 0
  %1413 = vmatpush1.bf16.msra.mxu0 0
  %1414 = vmatprep.subr.bf16.mxu0 0
  %1415 = vmatpush1.bf16.msra.mxu0 0
  %1416 = vmatprep.subr.bf16.mxu0 0
  %1417 = vmatpush1.bf16.msra.mxu0 0
  %1418 = vmatprep.subr.bf16.mxu0 0
  %1419 = vmatpush1.bf16.msra.mxu0 0
  %1420 = vmatprep.subr.bf16.mxu0 0
  %1421 = vmatpush1.bf16.msra.mxu0 0
  %1422 = vmatprep.subr.bf16.mxu0 0
  %1423 = vmatpush1.bf16.msra.mxu0 0
  %1424 = vmatprep.subr.bf16.mxu0 0
  %1425 = vmatpush1.bf16.msra.mxu0 0
  %1426 = vmatprep.subr.bf16.mxu0 0
  %1427 = vmatpush1.bf16.msra.mxu0 0
  %1428 = vmatprep.subr.bf16.mxu0 0
  %1429 = vmatpush1.bf16.msra.mxu0 0
  %1430 = vmatprep.subr.bf16.mxu0 0
  %1431 = vmatpush1.bf16.msra.mxu0 0
  %1432 = vmatprep.subr.bf16.mxu0 0
  %1433 = vmatpush1.bf16.msra.mxu0 0
  %1434 = vmatprep.subr.bf16.mxu0 0
  %1435 = vmatpush1.bf16.msra.mxu0 0
  %1436 = vmatprep.subr.bf16.mxu0 0
  %1437 = vmatpush1.bf16.msra.mxu0 0
  %1438 = vmatprep.mubr.bf16.mxu0 0
  %1439 = vmatmul.mubr.bf16.gmra.mrb[0].mxu0 %v1404
  %v1440 = vpop.f32.mrb[0].mxu0
  %v1441 = vadd.f32 %v1387, %v1440
  %v1442 = vpop.f32.mrb[0].mxu0
  %v1443 = vpop.f32.mrb[0].mxu0
  %v1444 = vpop.f32.mrb[0].mxu0
  %1445 = vdwg.mxu0
  %v1446 = vpack.c.bf16 %v1304, %v1304
  %1448 = vrot.lane.b32.xlu0 %v1446, 32
  %v1449 = vpop.permute.xlu0 %1448
  %v1451 = vsel %vm153, %v1449, 0
  %1453 = vmatprep.subr.bf16.mxu0 0
  %1454 = vmatpush1.bf16.msra.mxu0 %v149
  %1455 = vmatprep.subr.bf16.mxu0 0
  %1456 = vmatpush1.bf16.msra.mxu0 %v150
  %1457 = vmatprep.subr.bf16.mxu0 0
  %1458 = vmatpush1.bf16.msra.mxu0 0
  %1459 = vmatprep.subr.bf16.mxu0 0
  %1460 = vmatpush1.bf16.msra.mxu0 0
  %1461 = vmatprep.subr.bf16.mxu0 0
  %1462 = vmatpush1.bf16.msra.mxu0 0
  %1463 = vmatprep.subr.bf16.mxu0 0
  %1464 = vmatpush1.bf16.msra.mxu0 0
  %1465 = vmatprep.subr.bf16.mxu0 0
  %1466 = vmatpush1.bf16.msra.mxu0 0
  %1467 = vmatprep.subr.bf16.mxu0 0
  %1468 = vmatpush1.bf16.msra.mxu0 0
  %1469 = vmatprep.subr.bf16.mxu0 0
  %1470 = vmatpush1.bf16.msra.mxu0 0
  %1471 = vmatprep.subr.bf16.mxu0 0
  %1472 = vmatpush1.bf16.msra.mxu0 0
  %1473 = vmatprep.subr.bf16.mxu0 0
  %1474 = vmatpush1.bf16.msra.mxu0 0
  %1475 = vmatprep.subr.bf16.mxu0 0
  %1476 = vmatpush1.bf16.msra.mxu0 0
  %1477 = vmatprep.subr.bf16.mxu0 0
  %1478 = vmatpush1.bf16.msra.mxu0 0
  %1479 = vmatprep.subr.bf16.mxu0 0
  %1480 = vmatpush1.bf16.msra.mxu0 0
  %1481 = vmatprep.subr.bf16.mxu0 0
  %1482 = vmatpush1.bf16.msra.mxu0 0
  %1483 = vmatprep.subr.bf16.mxu0 0
  %1484 = vmatpush1.bf16.msra.mxu0 0
  %1485 = vmatprep.mubr.bf16.mxu0 0
  %1486 = vmatmul.mubr.bf16.gmra.mrb[0].mxu0 %v1451
  %v1487 = vpop.f32.mrb[0].mxu0
  %v1488 = vadd.f32 0.0, %v1487
  %v1489 = vpop.f32.mrb[0].mxu0
  %v1490 = vpop.f32.mrb[0].mxu0
  %v1491 = vpop.f32.mrb[0].mxu0
  %1492 = vdwg.mxu0
  %v1493 = vadd.f32 %v111, %v1488
  %v1494 = vxor.u32 %v1493, 2147483648
  %v1495 = vmul.f32 %v1494, 1.442695
  %v1496 = vpow.pop %v1495
  %v1497 = vadd.f32 %v1496, 1.0
  %v1498 = vrcp.pop %v1497
  %v1499 = vmul.f32 1.0, %v1498
  %v1500 = vmul.f32 %v1499, 2.0
  %v1501 = vsub.f32 %v1500, 1.0
  %v1502 = vmul.f32 %v1499, %v1298
  %1504 = vrot.lane.b32.xlu0 %v1501, 64
  %v1505 = vpop.permute.xlu0 %1504
  %v1507 = vmul.f32 %v1499, %v1505
  %1509 = vrot.lane.b32.xlu0 %v1507, 32
  %v1510 = vpop.permute.xlu0 %1509
  %v1512 = vadd.f32 %v1502, %v1510
  %v1513 = vtanh.pop %v1512
  %1515 = vrot.lane.b32.xlu0 %v1513, 64
  %v1516 = vpop.permute.xlu0 %1515
  %v1518 = vmul.f32 %v1499, %v1516
  %1520 = vrot.lane.b32.xlu0 %v1518, 32
  %v1521 = vpop.permute.xlu0 %1520
  %1524 = vrot.lane.b32.xlu0 %v1382, 64
  %v1525 = vpop.permute.xlu0 %1524
  %v1527 = vsel %vm153, %v1521, %v1525
  %v1528 = vpack.c.bf16 %v1527, %v1527
  %v1530 = vsel %vm257, %v1528, 0
  %1532 = vmatprep.subr.bf16.mxu0 0
  %1533 = vmatpush1.bf16.msra.mxu0 %v249
  %1534 = vmatprep.subr.bf16.mxu0 0
  %1535 = vmatpush1.bf16.msra.mxu0 %v250
  %1536 = vmatprep.subr.bf16.mxu0 0
  %1537 = vmatpush1.bf16.msra.mxu0 %v251
  %1538 = vmatprep.subr.bf16.mxu0 0
  %1539 = vmatpush1.bf16.msra.mxu0 %v252
  %1540 = vmatprep.subr.bf16.mxu0 0
  %1541 = vmatpush1.bf16.msra.mxu0 0
  %1542 = vmatprep.subr.bf16.mxu0 0
  %1543 = vmatpush1.bf16.msra.mxu0 0
  %1544 = vmatprep.subr.bf16.mxu0 0
  %1545 = vmatpush1.bf16.msra.mxu0 0
  %1546 = vmatprep.subr.bf16.mxu0 0
  %1547 = vmatpush1.bf16.msra.mxu0 0
  %1548 = vmatprep.subr.bf16.mxu0 0
  %1549 = vmatpush1.bf16.msra.mxu0 0
  %1550 = vmatprep.subr.bf16.mxu0 0
  %1551 = vmatpush1.bf16.msra.mxu0 0
  %1552 = vmatprep.subr.bf16.mxu0 0
  %1553 = vmatpush1.bf16.msra.mxu0 0
  %1554 = vmatprep.subr.bf16.mxu0 0
  %1555 = vmatpush1.bf16.msra.mxu0 0
  %1556 = vmatprep.subr.bf16.mxu0 0
  %1557 = vmatpush1.bf16.msra.mxu0 0
  %1558 = vmatprep.subr.bf16.mxu0 0
  %1559 = vmatpush1.bf16.msra.mxu0 0
  %1560 = vmatprep.subr.bf16.mxu0 0
  %1561 = vmatpush1.bf16.msra.mxu0 0
  %1562 = vmatprep.subr.bf16.mxu0 0
  %1563 = vmatpush1.bf16.msra.mxu0 0
  %1564 = vmatprep.mubr.bf16.mxu0 0
  %1565 = vmatmul.mubr.bf16.gmra.mrb[0].mxu0 %v1530
  %v1566 = vpop.f32.mrb[0].mxu0
  %v1567 = vadd.f32 %v232, %v1566
  %v1568 = vpop.f32.mrb[0].mxu0
  %v1569 = vpop.f32.mrb[0].mxu0
  %v1570 = vpop.f32.mrb[0].mxu0
  %1571 = vdwg.mxu0
  %v1572 = vxor.u32 %v1567, 2147483648
  %v1573 = vmul.f32 %v1572, 1.442695
  %v1574 = vpow.pop %v1573
  %v1575 = vadd.f32 %v1574, 1.0
  %v1576 = vrcp.pop %v1575
  %v1577 = vmul.f32 1.0, %v1576
  %v1578 = vmul.f32 %v1577, 2.0
  %v1579 = vsub.f32 %v1578, 1.0
  %v1580 = vmul.f32 %v1577, %v1376
  %1582 = vrot.lane.b32.xlu0 %v1579, 64
  %v1583 = vpop.permute.xlu0 %1582
  %v1585 = vmul.f32 %v1577, %v1583
  %1587 = vrot.lane.b32.xlu0 %v1585, 32
  %v1588 = vpop.permute.xlu0 %1587
  %v1590 = vadd.f32 %v1580, %v1588
  %v1591 = vtanh.pop %v1590
  %1593 = vrot.lane.b32.xlu0 %v1591, 64
  %v1594 = vpop.permute.xlu0 %1593
  %v1596 = vmul.f32 %v1577, %v1594
  %v1597 = vpack.c.bf16 %v1518, %v1518
  %1599 = vrot.lane.b32.xlu0 %v1597, 32
  %v1600 = vpop.permute.xlu0 %1599
  %v1602 = vsel %vm153, %v1600, 0
  %1604 = vmatprep.subr.bf16.mxu0 0
  %1605 = vmatpush1.bf16.msra.mxu0 %v149
  %1606 = vmatprep.subr.bf16.mxu0 0
  %1607 = vmatpush1.bf16.msra.mxu0 %v150
  %1608 = vmatprep.subr.bf16.mxu0 0
  %1609 = vmatpush1.bf16.msra.mxu0 0
  %1610 = vmatprep.subr.bf16.mxu0 0
  %1611 = vmatpush1.bf16.msra.mxu0 0
  %1612 = vmatprep.subr.bf16.mxu0 0
  %1613 = vmatpush1.bf16.msra.mxu0 0
  %1614 = vmatprep.subr.bf16.mxu0 0
  %1615 = vmatpush1.bf16.msra.mxu0 0
  %1616 = vmatprep.subr.bf16.mxu0 0
  %1617 = vmatpush1.bf16.msra.mxu0 0
  %1618 = vmatprep.subr.bf16.mxu0 0
  %1619 = vmatpush1.bf16.msra.mxu0 0
  %1620 = vmatprep.subr.bf16.mxu0 0
  %1621 = vmatpush1.bf16.msra.mxu0 0
  %1622 = vmatprep.subr.bf16.mxu0 0
  %1623 = vmatpush1.bf16.msra.mxu0 0
  %1624 = vmatprep.subr.bf16.mxu0 0
  %1625 = vmatpush1.bf16.msra.mxu0 0
  %1626 = vmatprep.subr.bf16.mxu0 0
  %1627 = vmatpush1.bf16.msra.mxu0 0
  %1628 = vmatprep.subr.bf16.mxu0 0
  %1629 = vmatpush1.bf16.msra.mxu0 0
  %1630 = vmatprep.subr.bf16.mxu0 0
  %1631 = vmatpush1.bf16.msra.mxu0 0
  %1632 = vmatprep.subr.bf16.mxu0 0
  %1633 = vmatpush1.bf16.msra.mxu0 0
  %1634 = vmatprep.subr.bf16.mxu0 0
  %1635 = vmatpush1.bf16.msra.mxu0 0
  %1636 = vmatprep.mubr.bf16.mxu0 0
  %1637 = vmatmul.mubr.bf16.gmra.mrb[0].mxu0 %v1602
  %v1638 = vpop.f32.mrb[0].mxu0
  %v1639 = vadd.f32 0.0, %v1638
  %v1640 = vpop.f32.mrb[0].mxu0
  %v1641 = vpop.f32.mrb[0].mxu0
  %v1642 = vpop.f32.mrb[0].mxu0
  %1643 = vdwg.mxu0
  %v1644 = vadd.f32 %v114, %v1639
  %v1645 = vxor.u32 %v1644, 2147483648
  %v1646 = vmul.f32 %v1645, 1.442695
  %v1647 = vpow.pop %v1646
  %v1648 = vadd.f32 %v1647, 1.0
  %v1649 = vrcp.pop %v1648
  %v1650 = vmul.f32 1.0, %v1649
  %v1651 = vmul.f32 %v1650, 2.0
  %v1652 = vsub.f32 %v1651, 1.0
  %v1653 = vmul.f32 %v1650, %v1512
  %1655 = vrot.lane.b32.xlu0 %v1652, 64
  %v1656 = vpop.permute.xlu0 %1655
  %v1658 = vmul.f32 %v1650, %v1656
  %1660 = vrot.lane.b32.xlu0 %v1658, 32
  %v1661 = vpop.permute.xlu0 %1660
  %v1663 = vadd.f32 %v1653, %v1661
  %v1664 = vtanh.pop %v1663
  %1666 = vrot.lane.b32.xlu0 %v1664, 64
  %v1667 = vpop.permute.xlu0 %1666
  %v1669 = vmul.f32 %v1650, %v1667
  %1671 = vrot.lane.b32.xlu0 %v1669, 32
  %v1672 = vpop.permute.xlu0 %1671
  %1675 = vrot.lane.b32.xlu0 %v1596, 64
  %v1676 = vpop.permute.xlu0 %1675
  %v1678 = vsel %vm153, %v1672, %v1676
  %v1679 = vpack.c.bf16 %v1678, %v1678
  %v1681 = vsel %vm257, %v1679, 0
  %1683 = vmatprep.subr.bf16.mxu0 0
  %1684 = vmatpush1.bf16.msra.mxu0 %v249
  %1685 = vmatprep.subr.bf16.mxu0 0
  %1686 = vmatpush1.bf16.msra.mxu0 %v250
  %1687 = vmatprep.subr.bf16.mxu0 0
  %1688 = vmatpush1.bf16.msra.mxu0 %v251
  %1689 = vmatprep.subr.bf16.mxu0 0
  %1690 = vmatpush1.bf16.msra.mxu0 %v252
  %1691 = vmatprep.subr.bf16.mxu0 0
  %1692 = vmatpush1.bf16.msra.mxu0 0
  %1693 = vmatprep.subr.bf16.mxu0 0
  %1694 = vmatpush1.bf16.msra.mxu0 0
  %1695 = vmatprep.subr.bf16.mxu0 0
  %1696 = vmatpush1.bf16.msra.mxu0 0
  %1697 = vmatprep.subr.bf16.mxu0 0
  %1698 = vmatpush1.bf16.msra.mxu0 0
  %1699 = vmatprep.subr.bf16.mxu0 0
  %1700 = vmatpush1.bf16.msra.mxu0 0
  %1701 = vmatprep.subr.bf16.mxu0 0
  %1702 = vmatpush1.bf16.msra.mxu0 0
  %1703 = vmatprep.subr.bf16.mxu0 0
  %1704 = vmatpush1.bf16.msra.mxu0 0
  %1705 = vmatprep.subr.bf16.mxu0 0
  %1706 = vmatpush1.bf16.msra.mxu0 0
  %1707 = vmatprep.subr.bf16.mxu0 0
  %1708 = vmatpush1.bf16.msra.mxu0 0
  %1709 = vmatprep.subr.bf16.mxu0 0
  %1710 = vmatpush1.bf16.msra.mxu0 0
  %1711 = vmatprep.subr.bf16.mxu0 0
  %1712 = vmatpush1.bf16.msra.mxu0 0
  %1713 = vmatprep.subr.bf16.mxu0 0
  %1714 = vmatpush1.bf16.msra.mxu0 0
  %1715 = vmatprep.mubr.bf16.mxu0 0
  %1716 = vmatmul.mubr.bf16.gmra.mrb[0].mxu0 %v1681
  %v1717 = vpop.f32.mrb[0].mxu0
  %v1718 = vadd.f32 %v232, %v1717
  %v1719 = vpop.f32.mrb[0].mxu0
  %v1720 = vpop.f32.mrb[0].mxu0
  %v1721 = vpop.f32.mrb[0].mxu0
  %1722 = vdwg.mxu0
  %v1723 = vxor.u32 %v1718, 2147483648
  %v1724 = vmul.f32 %v1723, 1.442695
  %v1725 = vpow.pop %v1724
  %v1726 = vadd.f32 %v1725, 1.0
  %v1727 = vrcp.pop %v1726
  %v1728 = vmul.f32 1.0, %v1727
  %v1729 = vmul.f32 %v1728, 2.0
  %v1730 = vsub.f32 %v1729, 1.0
  %v1731 = vmul.f32 %v1728, %v1590
  %1733 = vrot.lane.b32.xlu0 %v1730, 64
  %v1734 = vpop.permute.xlu0 %1733
  %v1736 = vmul.f32 %v1728, %v1734
  %1738 = vrot.lane.b32.xlu0 %v1736, 32
  %v1739 = vpop.permute.xlu0 %1738
  %v1741 = vadd.f32 %v1731, %v1739
  %v1742 = vtanh.pop %v1741
  %1744 = vrot.lane.b32.xlu0 %v1742, 64
  %v1745 = vpop.permute.xlu0 %1744
  %v1747 = vmul.f32 %v1728, %v1745
  %v1748 = vpack.c.bf16 %v1669, %v1669
  %1750 = vrot.lane.b32.xlu0 %v1748, 32
  %v1751 = vpop.permute.xlu0 %1750
  %v1753 = vsel %vm153, %v1751, 0
  %1755 = vmatprep.subr.bf16.mxu0 0
  %1756 = vmatpush1.bf16.msra.mxu0 %v149
  %1757 = vmatprep.subr.bf16.mxu0 0
  %1758 = vmatpush1.bf16.msra.mxu0 %v150
  %1759 = vmatprep.subr.bf16.mxu0 0
  %1760 = vmatpush1.bf16.msra.mxu0 0
  %1761 = vmatprep.subr.bf16.mxu0 0
  %1762 = vmatpush1.bf16.msra.mxu0 0
  %1763 = vmatprep.subr.bf16.mxu0 0
  %1764 = vmatpush1.bf16.msra.mxu0 0
  %1765 = vmatprep.subr.bf16.mxu0 0
  %1766 = vmatpush1.bf16.msra.mxu0 0
  %1767 = vmatprep.subr.bf16.mxu0 0
  %1768 = vmatpush1.bf16.msra.mxu0 0
  %1769 = vmatprep.subr.bf16.mxu0 0
  %1770 = vmatpush1.bf16.msra.mxu0 0
  %1771 = vmatprep.subr.bf16.mxu0 0
  %1772 = vmatpush1.bf16.msra.mxu0 0
  %1773 = vmatprep.subr.bf16.mxu0 0
  %1774 = vmatpush1.bf16.msra.mxu0 0
  %1775 = vmatprep.subr.bf16.mxu0 0
  %1776 = vmatpush1.bf16.msra.mxu0 0
  %1777 = vmatprep.subr.bf16.mxu0 0
  %1778 = vmatpush1.bf16.msra.mxu0 0
  %1779 = vmatprep.subr.bf16.mxu0 0
  %1780 = vmatpush1.bf16.msra.mxu0 0
  %1781 = vmatprep.subr.bf16.mxu0 0
  %1782 = vmatpush1.bf16.msra.mxu0 0
  %1783 = vmatprep.subr.bf16.mxu0 0
  %1784 = vmatpush1.bf16.msra.mxu0 0
  %1785 = vmatprep.subr.bf16.mxu0 0
  %1786 = vmatpush1.bf16.msra.mxu0 0
  %1787 = vmatprep.mubr.bf16.mxu0 0
  %1788 = vmatmul.mubr.bf16.gmra.mrb[0].mxu0 %v1753
  %v1789 = vpop.f32.mrb[0].mxu0
  %v1790 = vadd.f32 0.0, %v1789
  %v1791 = vpop.f32.mrb[0].mxu0
  %v1792 = vpop.f32.mrb[0].mxu0
  %v1793 = vpop.f32.mrb[0].mxu0
  %1794 = vdwg.mxu0
  %v1795 = vadd.f32 %v119, %v1790
  %v1796 = vxor.u32 %v1795, 2147483648
  %v1797 = vmul.f32 %v1796, 1.442695
  %v1798 = vpow.pop %v1797
  %v1799 = vadd.f32 %v1798, 1.0
  %v1800 = vrcp.pop %v1799
  %v1801 = vmul.f32 1.0, %v1800
  %v1802 = vmul.f32 %v1801, 2.0
  %v1803 = vsub.f32 %v1802, 1.0
  %v1804 = vmul.f32 %v1801, %v1663
  %1806 = vrot.lane.b32.xlu0 %v1803, 64
  %v1807 = vpop.permute.xlu0 %1806
  %v1809 = vmul.f32 %v1801, %v1807
  %1811 = vrot.lane.b32.xlu0 %v1809, 32
  %v1812 = vpop.permute.xlu0 %1811
  %v1814 = vadd.f32 %v1804, %v1812
  %v1815 = vtanh.pop %v1814
  %1817 = vrot.lane.b32.xlu0 %v1815, 64
  %v1818 = vpop.permute.xlu0 %1817
  %v1820 = vmul.f32 %v1801, %v1818
  %1822 = vrot.lane.b32.xlu0 %v1820, 32
  %v1823 = vpop.permute.xlu0 %1822
  %1826 = vrot.lane.b32.xlu0 %v1747, 64
  %v1827 = vpop.permute.xlu0 %1826
  %v1829 = vsel %vm153, %v1823, %v1827
  %v1830 = vpack.c.bf16 %v1829, %v1829
  %v1832 = vsel %vm257, %v1830, 0
  %1834 = vmatprep.subr.bf16.mxu0 0
  %1835 = vmatpush1.bf16.msra.mxu0 %v249
  %1836 = vmatprep.subr.bf16.mxu0 0
  %1837 = vmatpush1.bf16.msra.mxu0 %v250
  %1838 = vmatprep.subr.bf16.mxu0 0
  %1839 = vmatpush1.bf16.msra.mxu0 %v251
  %1840 = vmatprep.subr.bf16.mxu0 0
  %1841 = vmatpush1.bf16.msra.mxu0 %v252
  %1842 = vmatprep.subr.bf16.mxu0 0
  %1843 = vmatpush1.bf16.msra.mxu0 0
  %1844 = vmatprep.subr.bf16.mxu0 0
  %1845 = vmatpush1.bf16.msra.mxu0 0
  %1846 = vmatprep.subr.bf16.mxu0 0
  %1847 = vmatpush1.bf16.msra.mxu0 0
  %1848 = vmatprep.subr.bf16.mxu0 0
  %1849 = vmatpush1.bf16.msra.mxu0 0
  %1850 = vmatprep.subr.bf16.mxu0 0
  %1851 = vmatpush1.bf16.msra.mxu0 0
  %1852 = vmatprep.subr.bf16.mxu0 0
  %1853 = vmatpush1.bf16.msra.mxu0 0
  %1854 = vmatprep.subr.bf16.mxu0 0
  %1855 = vmatpush1.bf16.msra.mxu0 0
  %1856 = vmatprep.subr.bf16.mxu0 0
  %1857 = vmatpush1.bf16.msra.mxu0 0
  %1858 = vmatprep.subr.bf16.mxu0 0
  %1859 = vmatpush1.bf16.msra.mxu0 0
  %1860 = vmatprep.subr.bf16.mxu0 0
  %1861 = vmatpush1.bf16.msra.mxu0 0
  %1862 = vmatprep.subr.bf16.mxu0 0
  %1863 = vmatpush1.bf16.msra.mxu0 0
  %1864 = vmatprep.subr.bf16.mxu0 0
  %1865 = vmatpush1.bf16.msra.mxu0 0
  %1866 = vmatprep.mubr.bf16.mxu0 0
  %1867 = vmatmul.mubr.bf16.gmra.mrb[0].mxu0 %v1832
  %v1868 = vpop.f32.mrb[0].mxu0
  %v1869 = vadd.f32 %v232, %v1868
  %v1870 = vpop.f32.mrb[0].mxu0
  %v1871 = vpop.f32.mrb[0].mxu0
  %v1872 = vpop.f32.mrb[0].mxu0
  %1873 = vdwg.mxu0
  %v1874 = vxor.u32 %v1869, 2147483648
  %v1875 = vmul.f32 %v1874, 1.442695
  %v1876 = vpow.pop %v1875
  %v1877 = vadd.f32 %v1876, 1.0
  %v1878 = vrcp.pop %v1877
  %v1879 = vmul.f32 1.0, %v1878
  %v1880 = vmul.f32 %v1879, 2.0
  %v1881 = vsub.f32 %v1880, 1.0
  %v1882 = vmul.f32 %v1879, %v1741
  %1884 = vrot.lane.b32.xlu0 %v1881, 64
  %v1885 = vpop.permute.xlu0 %1884
  %v1887 = vmul.f32 %v1879, %v1885
  %1889 = vrot.lane.b32.xlu0 %v1887, 32
  %v1890 = vpop.permute.xlu0 %1889
  %v1892 = vadd.f32 %v1882, %v1890
  %v1893 = vtanh.pop %v1892
  %1895 = vrot.lane.b32.xlu0 %v1893, 64
  %v1896 = vpop.permute.xlu0 %1895
  %v1898 = vmul.f32 %v1879, %v1896
  %v1899 = vpack.c.bf16 %v1820, %v1820
  %1901 = vrot.lane.b32.xlu0 %v1899, 32
  %v1902 = vpop.permute.xlu0 %1901
  %v1904 = vsel %vm153, %v1902, 0
  %1906 = vmatprep.subr.bf16.mxu0 0
  %1907 = vmatpush1.bf16.msra.mxu0 %v149
  %1908 = vmatprep.subr.bf16.mxu0 0
  %1909 = vmatpush1.bf16.msra.mxu0 %v150
  %1910 = vmatprep.subr.bf16.mxu0 0
  %1911 = vmatpush1.bf16.msra.mxu0 0
  %1912 = vmatprep.subr.bf16.mxu0 0
  %1913 = vmatpush1.bf16.msra.mxu0 0
  %1914 = vmatprep.subr.bf16.mxu0 0
  %1915 = vmatpush1.bf16.msra.mxu0 0
  %1916 = vmatprep.subr.bf16.mxu0 0
  %1917 = vmatpush1.bf16.msra.mxu0 0
  %1918 = vmatprep.subr.bf16.mxu0 0
  %1919 = vmatpush1.bf16.msra.mxu0 0
  %1920 = vmatprep.subr.bf16.mxu0 0
  %1921 = vmatpush1.bf16.msra.mxu0 0
  %1922 = vmatprep.subr.bf16.mxu0 0
  %1923 = vmatpush1.bf16.msra.mxu0 0
  %1924 = vmatprep.subr.bf16.mxu0 0
  %1925 = vmatpush1.bf16.msra.mxu0 0
  %1926 = vmatprep.subr.bf16.mxu0 0
  %1927 = vmatpush1.bf16.msra.mxu0 0
  %1928 = vmatprep.subr.bf16.mxu0 0
  %1929 = vmatpush1.bf16.msra.mxu0 0
  %1930 = vmatprep.subr.bf16.mxu0 0
  %1931 = vmatpush1.bf16.msra.mxu0 0
  %1932 = vmatprep.subr.bf16.mxu0 0
  %1933 = vmatpush1.bf16.msra.mxu0 0
  %1934 = vmatprep.subr.bf16.mxu0 0
  %1935 = vmatpush1.bf16.msra.mxu0 0
  %1936 = vmatprep.subr.bf16.mxu0 0
  %1937 = vmatpush1.bf16.msra.mxu0 0
  %1938 = vmatprep.mubr.bf16.mxu0 0
  %1939 = vmatmul.mubr.bf16.gmra.mrb[0].mxu0 %v1904
  %v1940 = vpop.f32.mrb[0].mxu0
  %v1941 = vadd.f32 0.0, %v1940
  %v1942 = vpop.f32.mrb[0].mxu0
  %v1943 = vpop.f32.mrb[0].mxu0
  %v1944 = vpop.f32.mrb[0].mxu0
  %1945 = vdwg.mxu0
  %v1946 = vadd.f32 %v122, %v1941
  %v1947 = vxor.u32 %v1946, 2147483648
  %v1948 = vmul.f32 %v1947, 1.442695
  %v1949 = vpow.pop %v1948
  %v1950 = vadd.f32 %v1949, 1.0
  %v1951 = vrcp.pop %v1950
  %v1952 = vmul.f32 1.0, %v1951
  %v1953 = vmul.f32 %v1952, 2.0
  %v1954 = vsub.f32 %v1953, 1.0
  %v1955 = vmul.f32 %v1952, %v1814
  %1957 = vrot.lane.b32.xlu0 %v1954, 64
  %v1958 = vpop.permute.xlu0 %1957
  %v1960 = vmul.f32 %v1952, %v1958
  %1962 = vrot.lane.b32.xlu0 %v1960, 32
  %v1963 = vpop.permute.xlu0 %1962
  %v1965 = vadd.f32 %v1955, %v1963
  %v1966 = vtanh.pop %v1965
  %1968 = vrot.lane.b32.xlu0 %v1966, 64
  %v1969 = vpop.permute.xlu0 %1968
  %v1971 = vmul.f32 %v1952, %v1969
  %1973 = vrot.lane.b32.xlu0 %v1971, 32
  %v1974 = vpop.permute.xlu0 %1973
  %1977 = vrot.lane.b32.xlu0 %v1898, 64
  %v1978 = vpop.permute.xlu0 %1977
  %v1980 = vsel %vm153, %v1974, %v1978
  %v1981 = vpack.c.bf16 %v1980, %v1980
  %v1983 = vsel %vm257, %v1981, 0
  %1985 = vmatprep.subr.bf16.mxu0 0
  %1986 = vmatpush1.bf16.msra.mxu0 %v249
  %1987 = vmatprep.subr.bf16.mxu0 0
  %1988 = vmatpush1.bf16.msra.mxu0 %v250
  %1989 = vmatprep.subr.bf16.mxu0 0
  %1990 = vmatpush1.bf16.msra.mxu0 %v251
  %1991 = vmatprep.subr.bf16.mxu0 0
  %1992 = vmatpush1.bf16.msra.mxu0 %v252
  %1993 = vmatprep.subr.bf16.mxu0 0
  %1994 = vmatpush1.bf16.msra.mxu0 0
  %1995 = vmatprep.subr.bf16.mxu0 0
  %1996 = vmatpush1.bf16.msra.mxu0 0
  %1997 = vmatprep.subr.bf16.mxu0 0
  %1998 = vmatpush1.bf16.msra.mxu0 0
  %1999 = vmatprep.subr.bf16.mxu0 0
  %2000 = vmatpush1.bf16.msra.mxu0 0
  %2001 = vmatprep.subr.bf16.mxu0 0
  %2002 = vmatpush1.bf16.msra.mxu0 0
  %2003 = vmatprep.subr.bf16.mxu0 0
  %2004 = vmatpush1.bf16.msra.mxu0 0
  %2005 = vmatprep.subr.bf16.mxu0 0
  %2006 = vmatpush1.bf16.msra.mxu0 0
  %2007 = vmatprep.subr.bf16.mxu0 0
  %2008 = vmatpush1.bf16.msra.mxu0 0
  %2009 = vmatprep.subr.bf16.mxu0 0
  %2010 = vmatpush1.bf16.msra.mxu0 0
  %2011 = vmatprep.subr.bf16.mxu0 0
  %2012 = vmatpush1.bf16.msra.mxu0 0
  %2013 = vmatprep.subr.bf16.mxu0 0
  %2014 = vmatpush1.bf16.msra.mxu0 0
  %2015 = vmatprep.subr.bf16.mxu0 0
  %2016 = vmatpush1.bf16.msra.mxu0 0
  %2017 = vmatprep.mubr.bf16.mxu0 0
  %2018 = vmatmul.mubr.bf16.gmra.mrb[0].mxu0 %v1983
  %v2019 = vpop.f32.mrb[0].mxu0
  %v2020 = vadd.f32 %v232, %v2019
  %v2021 = vpop.f32.mrb[0].mxu0
  %v2022 = vpop.f32.mrb[0].mxu0
  %v2023 = vpop.f32.mrb[0].mxu0
  %2024 = vdwg.mxu0
  %v2025 = vxor.u32 %v2020, 2147483648
  %v2026 = vmul.f32 %v2025, 1.442695
  %v2027 = vpow.pop %v2026
  %v2028 = vadd.f32 %v2027, 1.0
  %v2029 = vrcp.pop %v2028
  %v2030 = vmul.f32 1.0, %v2029
  %v2031 = vmul.f32 %v2030, 2.0
  %v2032 = vsub.f32 %v2031, 1.0
  %v2033 = vmul.f32 %v2030, %v1892
  %2035 = vrot.lane.b32.xlu0 %v2032, 64
  %v2036 = vpop.permute.xlu0 %2035
  %v2038 = vmul.f32 %v2030, %v2036
  %2040 = vrot.lane.b32.xlu0 %v2038, 32
  %v2041 = vpop.permute.xlu0 %2040
  %v2043 = vadd.f32 %v2033, %v2041
  %v2044 = vtanh.pop %v2043
  %2046 = vrot.lane.b32.xlu0 %v2044, 64
  %v2047 = vpop.permute.xlu0 %2046
  %v2049 = vmul.f32 %v2030, %v2047
  %v2050 = vpack.c.bf16 %v1971, %v1971
  %2052 = vrot.lane.b32.xlu0 %v2050, 32
  %v2053 = vpop.permute.xlu0 %2052
  %v2055 = vsel %vm153, %v2053, 0
  %2057 = vmatprep.subr.bf16.mxu0 0
  %2058 = vmatpush1.bf16.msra.mxu0 %v149
  %2059 = vmatprep.subr.bf16.mxu0 0
  %2060 = vmatpush1.bf16.msra.mxu0 %v150
  %2061 = vmatprep.subr.bf16.mxu0 0
  %2062 = vmatpush1.bf16.msra.mxu0 0
  %2063 = vmatprep.subr.bf16.mxu0 0
  %2064 = vmatpush1.bf16.msra.mxu0 0
  %2065 = vmatprep.subr.bf16.mxu0 0
  %2066 = vmatpush1.bf16.msra.mxu0 0
  %2067 = vmatprep.subr.bf16.mxu0 0
  %2068 = vmatpush1.bf16.msra.mxu0 0
  %2069 = vmatprep.subr.bf16.mxu0 0
  %2070 = vmatpush1.bf16.msra.mxu0 0
  %2071 = vmatprep.subr.bf16.mxu0 0
  %2072 = vmatpush1.bf16.msra.mxu0 0
  %2073 = vmatprep.subr.bf16.mxu0 0
  %2074 = vmatpush1.bf16.msra.mxu0 0
  %2075 = vmatprep.subr.bf16.mxu0 0
  %2076 = vmatpush1.bf16.msra.mxu0 0
  %2077 = vmatprep.subr.bf16.mxu0 0
  %2078 = vmatpush1.bf16.msra.mxu0 0
  %2079 = vmatprep.subr.bf16.mxu0 0
  %2080 = vmatpush1.bf16.msra.mxu0 0
  %2081 = vmatprep.subr.bf16.mxu0 0
  %2082 = vmatpush1.bf16.msra.mxu0 0
  %2083 = vmatprep.subr.bf16.mxu0 0
  %2084 = vmatpush1.bf16.msra.mxu0 0
  %2085 = vmatprep.subr.bf16.mxu0 0
  %2086 = vmatpush1.bf16.msra.mxu0 0
  %2087 = vmatprep.subr.bf16.mxu0 0
  %2088 = vmatpush1.bf16.msra.mxu0 0
  %2089 = vmatprep.mubr.bf16.mxu0 0
  %2090 = vmatmul.mubr.bf16.gmra.mrb[0].mxu0 %v2055
  %v2091 = vpop.f32.mrb[0].mxu0
  %v2092 = vadd.f32 0.0, %v2091
  %v2093 = vpop.f32.mrb[0].mxu0
  %v2094 = vpop.f32.mrb[0].mxu0
  %v2095 = vpop.f32.mrb[0].mxu0
  %2096 = vdwg.mxu0
  %v2097 = vadd.f32 %v127, %v2092
  %v2098 = vxor.u32 %v2097, 2147483648
  %v2099 = vmul.f32 %v2098, 1.442695
  %v2100 = vpow.pop %v2099
  %v2101 = vadd.f32 %v2100, 1.0
  %v2102 = vrcp.pop %v2101
  %v2103 = vmul.f32 1.0, %v2102
  %v2104 = vmul.f32 %v2103, 2.0
  %v2105 = vsub.f32 %v2104, 1.0
  %v2106 = vmul.f32 %v2103, %v1965
  %2108 = vrot.lane.b32.xlu0 %v2105, 64
  %v2109 = vpop.permute.xlu0 %2108
  %v2111 = vmul.f32 %v2103, %v2109
  %2113 = vrot.lane.b32.xlu0 %v2111, 32
  %v2114 = vpop.permute.xlu0 %2113
  %v2116 = vadd.f32 %v2106, %v2114
  %v2117 = vtanh.pop %v2116
  %2119 = vrot.lane.b32.xlu0 %v2117, 64
  %v2120 = vpop.permute.xlu0 %2119
  %v2122 = vmul.f32 %v2103, %v2120
  %2124 = vrot.lane.b32.xlu0 %v2122, 32
  %v2125 = vpop.permute.xlu0 %2124
  %2128 = vrot.lane.b32.xlu0 %v2049, 64
  %v2129 = vpop.permute.xlu0 %2128
  %v2131 = vsel %vm153, %v2125, %v2129
  %v2132 = vpack.c.bf16 %v2131, %v2131
  %v2134 = vsel %vm257, %v2132, 0
  %2136 = vmatprep.subr.bf16.mxu0 0
  %2137 = vmatpush1.bf16.msra.mxu0 %v249
  %2138 = vmatprep.subr.bf16.mxu0 0
  %2139 = vmatpush1.bf16.msra.mxu0 %v250
  %2140 = vmatprep.subr.bf16.mxu0 0
  %2141 = vmatpush1.bf16.msra.mxu0 %v251
  %2142 = vmatprep.subr.bf16.mxu0 0
  %2143 = vmatpush1.bf16.msra.mxu0 %v252
  %2144 = vmatprep.subr.bf16.mxu0 0
  %2145 = vmatpush1.bf16.msra.mxu0 0
  %2146 = vmatprep.subr.bf16.mxu0 0
  %2147 = vmatpush1.bf16.msra.mxu0 0
  %2148 = vmatprep.subr.bf16.mxu0 0
  %2149 = vmatpush1.bf16.msra.mxu0 0
  %2150 = vmatprep.subr.bf16.mxu0 0
  %2151 = vmatpush1.bf16.msra.mxu0 0
  %2152 = vmatprep.subr.bf16.mxu0 0
  %2153 = vmatpush1.bf16.msra.mxu0 0
  %2154 = vmatprep.subr.bf16.mxu0 0
  %2155 = vmatpush1.bf16.msra.mxu0 0
  %2156 = vmatprep.subr.bf16.mxu0 0
  %2157 = vmatpush1.bf16.msra.mxu0 0
  %2158 = vmatprep.subr.bf16.mxu0 0
  %2159 = vmatpush1.bf16.msra.mxu0 0
  %2160 = vmatprep.subr.bf16.mxu0 0
  %2161 = vmatpush1.bf16.msra.mxu0 0
  %2162 = vmatprep.subr.bf16.mxu0 0
  %2163 = vmatpush1.bf16.msra.mxu0 0
  %2164 = vmatprep.subr.bf16.mxu0 0
  %2165 = vmatpush1.bf16.msra.mxu0 0
  %2166 = vmatprep.subr.bf16.mxu0 0
  %2167 = vmatpush1.bf16.msra.mxu0 0
  %2168 = vmatprep.mubr.bf16.mxu0 0
  %2169 = vmatmul.mubr.bf16.gmra.mrb[0].mxu0 %v2134
  %v2170 = vpop.f32.mrb[0].mxu0
  %v2171 = vadd.f32 %v232, %v2170
  %v2172 = vpop.f32.mrb[0].mxu0
  %v2173 = vpop.f32.mrb[0].mxu0
  %v2174 = vpop.f32.mrb[0].mxu0
  %2175 = vdwg.mxu0
  %v2176 = vxor.u32 %v2171, 2147483648
  %v2177 = vmul.f32 %v2176, 1.442695
  %v2178 = vpow.pop %v2177
  %v2179 = vadd.f32 %v2178, 1.0
  %v2180 = vrcp.pop %v2179
  %v2181 = vmul.f32 1.0, %v2180
  %v2182 = vmul.f32 %v2181, 2.0
  %v2183 = vsub.f32 %v2182, 1.0
  %v2184 = vmul.f32 %v2181, %v2043
  %2186 = vrot.lane.b32.xlu0 %v2183, 64
  %v2187 = vpop.permute.xlu0 %2186
  %v2189 = vmul.f32 %v2181, %v2187
  %2191 = vrot.lane.b32.xlu0 %v2189, 32
  %v2192 = vpop.permute.xlu0 %2191
  %v2194 = vadd.f32 %v2184, %v2192
  %v2195 = vtanh.pop %v2194
  %2197 = vrot.lane.b32.xlu0 %v2195, 64
  %v2198 = vpop.permute.xlu0 %2197
  %v2200 = vmul.f32 %v2181, %v2198
  %v2201 = vpack.c.bf16 %v2122, %v2122
  %2203 = vrot.lane.b32.xlu0 %v2201, 32
  %v2204 = vpop.permute.xlu0 %2203
  %v2206 = vsel %vm153, %v2204, 0
  %2208 = vmatprep.subr.bf16.mxu0 0
  %2209 = vmatpush1.bf16.msra.mxu0 %v149
  %2210 = vmatprep.subr.bf16.mxu0 0
  %2211 = vmatpush1.bf16.msra.mxu0 %v150
  %2212 = vmatprep.subr.bf16.mxu0 0
  %2213 = vmatpush1.bf16.msra.mxu0 0
  %2214 = vmatprep.subr.bf16.mxu0 0
  %2215 = vmatpush1.bf16.msra.mxu0 0
  %2216 = vmatprep.subr.bf16.mxu0 0
  %2217 = vmatpush1.bf16.msra.mxu0 0
  %2218 = vmatprep.subr.bf16.mxu0 0
  %2219 = vmatpush1.bf16.msra.mxu0 0
  %2220 = vmatprep.subr.bf16.mxu0 0
  %2221 = vmatpush1.bf16.msra.mxu0 0
  %2222 = vmatprep.subr.bf16.mxu0 0
  %2223 = vmatpush1.bf16.msra.mxu0 0
  %2224 = vmatprep.subr.bf16.mxu0 0
  %2225 = vmatpush1.bf16.msra.mxu0 0
  %2226 = vmatprep.subr.bf16.mxu0 0
  %2227 = vmatpush1.bf16.msra.mxu0 0
  %2228 = vmatprep.subr.bf16.mxu0 0
  %2229 = vmatpush1.bf16.msra.mxu0 0
  %2230 = vmatprep.subr.bf16.mxu0 0
  %2231 = vmatpush1.bf16.msra.mxu0 0
  %2232 = vmatprep.subr.bf16.mxu0 0
  %2233 = vmatpush1.bf16.msra.mxu0 0
  %2234 = vmatprep.subr.bf16.mxu0 0
  %2235 = vmatpush1.bf16.msra.mxu0 0
  %2236 = vmatprep.subr.bf16.mxu0 0
  %2237 = vmatpush1.bf16.msra.mxu0 0
  %2238 = vmatprep.subr.bf16.mxu0 0
  %2239 = vmatpush1.bf16.msra.mxu0 0
  %2240 = vmatprep.mubr.bf16.mxu0 0
  %2241 = vmatmul.mubr.bf16.gmra.mrb[0].mxu0 %v2206
  %v2242 = vpop.f32.mrb[0].mxu0
  %v2243 = vadd.f32 0.0, %v2242
  %v2244 = vpop.f32.mrb[0].mxu0
  %v2245 = vpop.f32.mrb[0].mxu0
  %v2246 = vpop.f32.mrb[0].mxu0
  %2247 = vdwg.mxu0
  %v2248 = vadd.f32 %v130, %v2243
  %v2249 = vxor.u32 %v2248, 2147483648
  %v2250 = vmul.f32 %v2249, 1.442695
  %v2251 = vpow.pop %v2250
  %v2252 = vadd.f32 %v2251, 1.0
  %v2253 = vrcp.pop %v2252
  %v2254 = vmul.f32 1.0, %v2253
  %v2255 = vmul.f32 %v2254, 2.0
  %v2256 = vsub.f32 %v2255, 1.0
  %v2257 = vmul.f32 %v2254, %v2116
  %2259 = vrot.lane.b32.xlu0 %v2256, 64
  %v2260 = vpop.permute.xlu0 %2259
  %v2262 = vmul.f32 %v2254, %v2260
  %2264 = vrot.lane.b32.xlu0 %v2262, 32
  %v2265 = vpop.permute.xlu0 %2264
  %v2267 = vadd.f32 %v2257, %v2265
  %v2268 = vtanh.pop %v2267
  %2270 = vrot.lane.b32.xlu0 %v2268, 64
  %v2271 = vpop.permute.xlu0 %2270
  %v2273 = vmul.f32 %v2254, %v2271
  %2275 = vrot.lane.b32.xlu0 %v2273, 32
  %v2276 = vpop.permute.xlu0 %2275
  %2279 = vrot.lane.b32.xlu0 %v2200, 64
  %v2280 = vpop.permute.xlu0 %2279
  %v2282 = vsel %vm153, %v2276, %v2280
  %v2283 = vpack.c.bf16 %v2282, %v2282
  %v2285 = vsel %vm257, %v2283, 0
  %2287 = vmatprep.subr.bf16.mxu0 0
  %2288 = vmatpush1.bf16.msra.mxu0 %v249
  %2289 = vmatprep.subr.bf16.mxu0 0
  %2290 = vmatpush1.bf16.msra.mxu0 %v250
  %2291 = vmatprep.subr.bf16.mxu0 0
  %2292 = vmatpush1.bf16.msra.mxu0 %v251
  %2293 = vmatprep.subr.bf16.mxu0 0
  %2294 = vmatpush1.bf16.msra.mxu0 %v252
  %2295 = vmatprep.subr.bf16.mxu0 0
  %2296 = vmatpush1.bf16.msra.mxu0 0
  %2297 = vmatprep.subr.bf16.mxu0 0
  %2298 = vmatpush1.bf16.msra.mxu0 0
  %2299 = vmatprep.subr.bf16.mxu0 0
  %2300 = vmatpush1.bf16.msra.mxu0 0
  %2301 = vmatprep.subr.bf16.mxu0 0
  %2302 = vmatpush1.bf16.msra.mxu0 0
  %2303 = vmatprep.subr.bf16.mxu0 0
  %2304 = vmatpush1.bf16.msra.mxu0 0
  %2305 = vmatprep.subr.bf16.mxu0 0
  %2306 = vmatpush1.bf16.msra.mxu0 0
  %2307 = vmatprep.subr.bf16.mxu0 0
  %2308 = vmatpush1.bf16.msra.mxu0 0
  %2309 = vmatprep.subr.bf16.mxu0 0
  %2310 = vmatpush1.bf16.msra.mxu0 0
  %2311 = vmatprep.subr.bf16.mxu0 0
  %2312 = vmatpush1.bf16.msra.mxu0 0
  %2313 = vmatprep.subr.bf16.mxu0 0
  %2314 = vmatpush1.bf16.msra.mxu0 0
  %2315 = vmatprep.subr.bf16.mxu0 0
  %2316 = vmatpush1.bf16.msra.mxu0 0
  %2317 = vmatprep.subr.bf16.mxu0 0
  %2318 = vmatpush1.bf16.msra.mxu0 0
  %2319 = vmatprep.mubr.bf16.mxu0 0
  %2320 = vmatmul.mubr.bf16.gmra.mrb[0].mxu0 %v2285
  %v2321 = vpop.f32.mrb[0].mxu0
  %v2322 = vadd.f32 %v232, %v2321
  %v2323 = vpop.f32.mrb[0].mxu0
  %v2324 = vpop.f32.mrb[0].mxu0
  %v2325 = vpop.f32.mrb[0].mxu0
  %2326 = vdwg.mxu0
  %v2327 = vxor.u32 %v2322, 2147483648
  %v2328 = vmul.f32 %v2327, 1.442695
  %v2329 = vpow.pop %v2328
  %v2330 = vadd.f32 %v2329, 1.0
  %v2331 = vrcp.pop %v2330
  %v2332 = vmul.f32 1.0, %v2331
  %v2333 = vmul.f32 %v2332, 2.0
  %v2334 = vsub.f32 %v2333, 1.0
  %v2335 = vmul.f32 %v2332, %v2194
  %2337 = vrot.lane.b32.xlu0 %v2334, 64
  %v2338 = vpop.permute.xlu0 %2337
  %v2340 = vmul.f32 %v2332, %v2338
  %2342 = vrot.lane.b32.xlu0 %v2340, 32
  %v2343 = vpop.permute.xlu0 %2342
  %v2345 = vadd.f32 %v2335, %v2343
  %v2346 = vtanh.pop %v2345
  %2348 = vrot.lane.b32.xlu0 %v2346, 64
  %v2349 = vpop.permute.xlu0 %2348
  %v2351 = vmul.f32 %v2332, %v2349
  %v2352 = vpack.c.bf16 %v2273, %v2273
  %2354 = vrot.lane.b32.xlu0 %v2352, 32
  %v2355 = vpop.permute.xlu0 %2354
  %v2357 = vsel %vm153, %v2355, 0
  %2359 = vmatprep.subr.bf16.mxu0 0
  %2360 = vmatpush1.bf16.msra.mxu0 %v149
  %2361 = vmatprep.subr.bf16.mxu0 0
  %2362 = vmatpush1.bf16.msra.mxu0 %v150
  %2363 = vmatprep.subr.bf16.mxu0 0
  %2364 = vmatpush1.bf16.msra.mxu0 0
  %2365 = vmatprep.subr.bf16.mxu0 0
  %2366 = vmatpush1.bf16.msra.mxu0 0
  %2367 = vmatprep.subr.bf16.mxu0 0
  %2368 = vmatpush1.bf16.msra.mxu0 0
  %2369 = vmatprep.subr.bf16.mxu0 0
  %2370 = vmatpush1.bf16.msra.mxu0 0
  %2371 = vmatprep.subr.bf16.mxu0 0
  %2372 = vmatpush1.bf16.msra.mxu0 0
  %2373 = vmatprep.subr.bf16.mxu0 0
  %2374 = vmatpush1.bf16.msra.mxu0 0
  %2375 = vmatprep.subr.bf16.mxu0 0
  %2376 = vmatpush1.bf16.msra.mxu0 0
  %2377 = vmatprep.subr.bf16.mxu0 0
  %2378 = vmatpush1.bf16.msra.mxu0 0
  %2379 = vmatprep.subr.bf16.mxu0 0
  %2380 = vmatpush1.bf16.msra.mxu0 0
  %2381 = vmatprep.subr.bf16.mxu0 0
  %2382 = vmatpush1.bf16.msra.mxu0 0
  %2383 = vmatprep.subr.bf16.mxu0 0
  %2384 = vmatpush1.bf16.msra.mxu0 0
  %2385 = vmatprep.subr.bf16.mxu0 0
  %2386 = vmatpush1.bf16.msra.mxu0 0
  %2387 = vmatprep.subr.bf16.mxu0 0
  %2388 = vmatpush1.bf16.msra.mxu0 0
  %2389 = vmatprep.subr.bf16.mxu0 0
  %2390 = vmatpush1.bf16.msra.mxu0 0
  %2391 = vmatprep.mubr.bf16.mxu0 0
  %2392 = vmatmul.mubr.bf16.gmra.mrb[0].mxu0 %v2357
  %v2393 = vpop.f32.mrb[0].mxu0
  %v2394 = vadd.f32 0.0, %v2393
  %v2395 = vpop.f32.mrb[0].mxu0
  %v2396 = vpop.f32.mrb[0].mxu0
  %v2397 = vpop.f32.mrb[0].mxu0
  %2398 = vdwg.mxu0
  %v2399 = vadd.f32 %v135, %v2394
  %v2400 = vxor.u32 %v2399, 2147483648
  %v2401 = vmul.f32 %v2400, 1.442695
  %v2402 = vpow.pop %v2401
  %v2403 = vadd.f32 %v2402, 1.0
  %v2404 = vrcp.pop %v2403
  %v2405 = vmul.f32 1.0, %v2404
  %v2406 = vmul.f32 %v2405, 2.0
  %v2407 = vsub.f32 %v2406, 1.0
  %v2408 = vmul.f32 %v2405, %v2267
  %2410 = vrot.lane.b32.xlu0 %v2407, 64
  %v2411 = vpop.permute.xlu0 %2410
  %v2413 = vmul.f32 %v2405, %v2411
  %2415 = vrot.lane.b32.xlu0 %v2413, 32
  %v2416 = vpop.permute.xlu0 %2415
  %v2418 = vadd.f32 %v2408, %v2416
  %v2419 = vtanh.pop %v2418
  %2421 = vrot.lane.b32.xlu0 %v2419, 64
  %v2422 = vpop.permute.xlu0 %2421
  %v2424 = vmul.f32 %v2405, %v2422
  %2426 = vrot.lane.b32.xlu0 %v2424, 32
  %v2427 = vpop.permute.xlu0 %2426
  %2430 = vrot.lane.b32.xlu0 %v2351, 64
  %v2431 = vpop.permute.xlu0 %2430
  %v2433 = vsel %vm153, %v2427, %v2431
  %v2434 = vpack.c.bf16 %v2433, %v2433
  %v2436 = vsel %vm257, %v2434, 0
  %2438 = vmatprep.subr.bf16.mxu0 0
  %2439 = vmatpush1.bf16.msra.mxu0 %v249
  %2440 = vmatprep.subr.bf16.mxu0 0
  %2441 = vmatpush1.bf16.msra.mxu0 %v250
  %2442 = vmatprep.subr.bf16.mxu0 0
  %2443 = vmatpush1.bf16.msra.mxu0 %v251
  %2444 = vmatprep.subr.bf16.mxu0 0
  %2445 = vmatpush1.bf16.msra.mxu0 %v252
  %2446 = vmatprep.subr.bf16.mxu0 0
  %2447 = vmatpush1.bf16.msra.mxu0 0
  %2448 = vmatprep.subr.bf16.mxu0 0
  %2449 = vmatpush1.bf16.msra.mxu0 0
  %2450 = vmatprep.subr.bf16.mxu0 0
  %2451 = vmatpush1.bf16.msra.mxu0 0
  %2452 = vmatprep.subr.bf16.mxu0 0
  %2453 = vmatpush1.bf16.msra.mxu0 0
  %2454 = vmatprep.subr.bf16.mxu0 0
  %2455 = vmatpush1.bf16.msra.mxu0 0
  %2456 = vmatprep.subr.bf16.mxu0 0
  %2457 = vmatpush1.bf16.msra.mxu0 0
  %2458 = vmatprep.subr.bf16.mxu0 0
  %2459 = vmatpush1.bf16.msra.mxu0 0
  %2460 = vmatprep.subr.bf16.mxu0 0
  %2461 = vmatpush1.bf16.msra.mxu0 0
  %2462 = vmatprep.subr.bf16.mxu0 0
  %2463 = vmatpush1.bf16.msra.mxu0 0
  %2464 = vmatprep.subr.bf16.mxu0 0
  %2465 = vmatpush1.bf16.msra.mxu0 0
  %2466 = vmatprep.subr.bf16.mxu0 0
  %2467 = vmatpush1.bf16.msra.mxu0 0
  %2468 = vmatprep.subr.bf16.mxu0 0
  %2469 = vmatpush1.bf16.msra.mxu0 0
  %2470 = vmatprep.mubr.bf16.mxu0 0
  %2471 = vmatmul.mubr.bf16.gmra.mrb[0].mxu0 %v2436
  %v2472 = vpop.f32.mrb[0].mxu0
  %v2473 = vadd.f32 %v232, %v2472
  %v2474 = vpop.f32.mrb[0].mxu0
  %v2475 = vpop.f32.mrb[0].mxu0
  %v2476 = vpop.f32.mrb[0].mxu0
  %2477 = vdwg.mxu0
  %v2478 = vxor.u32 %v2473, 2147483648
  %v2479 = vmul.f32 %v2478, 1.442695
  %v2480 = vpow.pop %v2479
  %v2481 = vadd.f32 %v2480, 1.0
  %v2482 = vrcp.pop %v2481
  %v2483 = vmul.f32 1.0, %v2482
  %v2484 = vmul.f32 %v2483, 2.0
  %v2485 = vsub.f32 %v2484, 1.0
  %v2486 = vmul.f32 %v2483, %v2345
  %2488 = vrot.lane.b32.xlu0 %v2485, 64
  %v2489 = vpop.permute.xlu0 %2488
  %v2491 = vmul.f32 %v2483, %v2489
  %2493 = vrot.lane.b32.xlu0 %v2491, 32
  %v2494 = vpop.permute.xlu0 %2493
  %v2496 = vadd.f32 %v2486, %v2494
  %v2497 = vtanh.pop %v2496
  %2499 = vrot.lane.b32.xlu0 %v2497, 64
  %v2500 = vpop.permute.xlu0 %2499
  %v2502 = vmul.f32 %v2483, %v2500
  %v2503 = vpack.c.bf16 %v2424, %v2424
  %2505 = vrot.lane.b32.xlu0 %v2503, 32
  %v2506 = vpop.permute.xlu0 %2505
  %v2508 = vsel %vm153, %v2506, 0
  %2510 = vmatprep.subr.bf16.mxu0 0
  %2511 = vmatpush1.bf16.msra.mxu0 %v149
  %2512 = vmatprep.subr.bf16.mxu0 0
  %2513 = vmatpush1.bf16.msra.mxu0 %v150
  %2514 = vmatprep.subr.bf16.mxu0 0
  %2515 = vmatpush1.bf16.msra.mxu0 0
  %2516 = vmatprep.subr.bf16.mxu0 0
  %2517 = vmatpush1.bf16.msra.mxu0 0
  %2518 = vmatprep.subr.bf16.mxu0 0
  %2519 = vmatpush1.bf16.msra.mxu0 0
  %2520 = vmatprep.subr.bf16.mxu0 0
  %2521 = vmatpush1.bf16.msra.mxu0 0
  %2522 = vmatprep.subr.bf16.mxu0 0
  %2523 = vmatpush1.bf16.msra.mxu0 0
  %2524 = vmatprep.subr.bf16.mxu0 0
  %2525 = vmatpush1.bf16.msra.mxu0 0
  %2526 = vmatprep.subr.bf16.mxu0 0
  %2527 = vmatpush1.bf16.msra.mxu0 0
  %2528 = vmatprep.subr.bf16.mxu0 0
  %2529 = vmatpush1.bf16.msra.mxu0 0
  %2530 = vmatprep.subr.bf16.mxu0 0
  %2531 = vmatpush1.bf16.msra.mxu0 0
  %2532 = vmatprep.subr.bf16.mxu0 0
  %2533 = vmatpush1.bf16.msra.mxu0 0
  %2534 = vmatprep.subr.bf16.mxu0 0
  %2535 = vmatpush1.bf16.msra.mxu0 0
  %2536 = vmatprep.subr.bf16.mxu0 0
  %2537 = vmatpush1.bf16.msra.mxu0 0
  %2538 = vmatprep.subr.bf16.mxu0 0
  %2539 = vmatpush1.bf16.msra.mxu0 0
  %2540 = vmatprep.subr.bf16.mxu0 0
  %2541 = vmatpush1.bf16.msra.mxu0 0
  %2542 = vmatprep.mubr.bf16.mxu0 0
  %2543 = vmatmul.mubr.bf16.gmra.mrb[0].mxu0 %v2508
  %v2544 = vpop.f32.mrb[0].mxu0
  %v2545 = vadd.f32 0.0, %v2544
  %v2546 = vpop.f32.mrb[0].mxu0
  %v2547 = vpop.f32.mrb[0].mxu0
  %v2548 = vpop.f32.mrb[0].mxu0
  %2549 = vdwg.mxu0
  %v2550 = vadd.f32 %v138, %v2545
  %v2551 = vxor.u32 %v2550, 2147483648
  %v2552 = vmul.f32 %v2551, 1.442695
  %v2553 = vpow.pop %v2552
  %v2554 = vadd.f32 %v2553, 1.0
  %v2555 = vrcp.pop %v2554
  %v2556 = vmul.f32 1.0, %v2555
  %v2557 = vmul.f32 %v2556, 2.0
  %v2558 = vsub.f32 %v2557, 1.0
  %v2559 = vmul.f32 %v2556, %v2418
  %2561 = vrot.lane.b32.xlu0 %v2558, 64
  %v2562 = vpop.permute.xlu0 %2561
  %v2564 = vmul.f32 %v2556, %v2562
  %2566 = vrot.lane.b32.xlu0 %v2564, 32
  %v2567 = vpop.permute.xlu0 %2566
  %v2569 = vadd.f32 %v2559, %v2567
  %v2570 = vtanh.pop %v2569
  %2572 = vrot.lane.b32.xlu0 %v2570, 64
  %v2573 = vpop.permute.xlu0 %2572
  %v2575 = vmul.f32 %v2556, %v2573
  %2577 = vrot.lane.b32.xlu0 %v2575, 32
  %v2578 = vpop.permute.xlu0 %2577
  %2581 = vrot.lane.b32.xlu0 %v2502, 64
  %v2582 = vpop.permute.xlu0 %2581
  %v2584 = vsel %vm153, %v2578, %v2582
  %v2585 = vpack.c.bf16 %v2584, %v2584
  %v2587 = vsel %vm257, %v2585, 0
  %2589 = vmatprep.subr.bf16.mxu0 0
  %2590 = vmatpush1.bf16.msra.mxu0 %v249
  %2591 = vmatprep.subr.bf16.mxu0 0
  %2592 = vmatpush1.bf16.msra.mxu0 %v250
  %2593 = vmatprep.subr.bf16.mxu0 0
  %2594 = vmatpush1.bf16.msra.mxu0 %v251
  %2595 = vmatprep.subr.bf16.mxu0 0
  %2596 = vmatpush1.bf16.msra.mxu0 %v252
  %2597 = vmatprep.subr.bf16.mxu0 0
  %2598 = vmatpush1.bf16.msra.mxu0 0
  %2599 = vmatprep.subr.bf16.mxu0 0
  %2600 = vmatpush1.bf16.msra.mxu0 0
  %2601 = vmatprep.subr.bf16.mxu0 0
  %2602 = vmatpush1.bf16.msra.mxu0 0
  %2603 = vmatprep.subr.bf16.mxu0 0
  %2604 = vmatpush1.bf16.msra.mxu0 0
  %2605 = vmatprep.subr.bf16.mxu0 0
  %2606 = vmatpush1.bf16.msra.mxu0 0
  %2607 = vmatprep.subr.bf16.mxu0 0
  %2608 = vmatpush1.bf16.msra.mxu0 0
  %2609 = vmatprep.subr.bf16.mxu0 0
  %2610 = vmatpush1.bf16.msra.mxu0 0
  %2611 = vmatprep.subr.bf16.mxu0 0
  %2612 = vmatpush1.bf16.msra.mxu0 0
  %2613 = vmatprep.subr.bf16.mxu0 0
  %2614 = vmatpush1.bf16.msra.mxu0 0
  %2615 = vmatprep.subr.bf16.mxu0 0
  %2616 = vmatpush1.bf16.msra.mxu0 0
  %2617 = vmatprep.subr.bf16.mxu0 0
  %2618 = vmatpush1.bf16.msra.mxu0 0
  %2619 = vmatprep.subr.bf16.mxu0 0
  %2620 = vmatpush1.bf16.msra.mxu0 0
  %2621 = vmatprep.mubr.bf16.mxu0 0
  %2622 = vmatmul.mubr.bf16.gmra.mrb[0].mxu0 %v2587
  %v2623 = vpop.f32.mrb[0].mxu0
  %v2624 = vadd.f32 %v232, %v2623
  %v2625 = vpop.f32.mrb[0].mxu0
  %v2626 = vpop.f32.mrb[0].mxu0
  %v2627 = vpop.f32.mrb[0].mxu0
  %2628 = vdwg.mxu0
  %v2629 = vxor.u32 %v2624, 2147483648
  %v2630 = vmul.f32 %v2629, 1.442695
  %v2631 = vpow.pop %v2630
  %v2632 = vadd.f32 %v2631, 1.0
  %v2633 = vrcp.pop %v2632
  %v2634 = vmul.f32 1.0, %v2633
  %v2635 = vmul.f32 %v2634, 2.0
  %v2636 = vsub.f32 %v2635, 1.0
  %v2637 = vmul.f32 %v2634, %v2496
  %2639 = vrot.lane.b32.xlu0 %v2636, 64
  %v2640 = vpop.permute.xlu0 %2639
  %v2642 = vmul.f32 %v2634, %v2640
  %2644 = vrot.lane.b32.xlu0 %v2642, 32
  %v2645 = vpop.permute.xlu0 %2644
  %v2647 = vadd.f32 %v2637, %v2645
  %v2648 = vtanh.pop %v2647
  %2650 = vrot.lane.b32.xlu0 %v2648, 64
  %v2651 = vpop.permute.xlu0 %2650
  %v2653 = vmul.f32 %v2634, %v2651
  %v2654 = vpack.c.bf16 %v2575, %v2575
  %2656 = vrot.lane.b32.xlu0 %v2654, 32
  %v2657 = vpop.permute.xlu0 %2656
  %v2659 = vsel %vm153, %v2657, 0
  %2661 = vmatprep.subr.bf16.mxu0 0
  %2662 = vmatpush1.bf16.msra.mxu0 %v149
  %2663 = vmatprep.subr.bf16.mxu0 0
  %2664 = vmatpush1.bf16.msra.mxu0 %v150
  %2665 = vmatprep.subr.bf16.mxu0 0
  %2666 = vmatpush1.bf16.msra.mxu0 0
  %2667 = vmatprep.subr.bf16.mxu0 0
  %2668 = vmatpush1.bf16.msra.mxu0 0
  %2669 = vmatprep.subr.bf16.mxu0 0
  %2670 = vmatpush1.bf16.msra.mxu0 0
  %2671 = vmatprep.subr.bf16.mxu0 0
  %2672 = vmatpush1.bf16.msra.mxu0 0
  %2673 = vmatprep.subr.bf16.mxu0 0
  %2674 = vmatpush1.bf16.msra.mxu0 0
  %2675 = vmatprep.subr.bf16.mxu0 0
  %2676 = vmatpush1.bf16.msra.mxu0 0
  %2677 = vmatprep.subr.bf16.mxu0 0
  %2678 = vmatpush1.bf16.msra.mxu0 0
  %2679 = vmatprep.subr.bf16.mxu0 0
  %2680 = vmatpush1.bf16.msra.mxu0 0
  %2681 = vmatprep.subr.bf16.mxu0 0
  %2682 = vmatpush1.bf16.msra.mxu0 0
  %2683 = vmatprep.subr.bf16.mxu0 0
  %2684 = vmatpush1.bf16.msra.mxu0 0
  %2685 = vmatprep.subr.bf16.mxu0 0
  %2686 = vmatpush1.bf16.msra.mxu0 0
  %2687 = vmatprep.subr.bf16.mxu0 0
  %2688 = vmatpush1.bf16.msra.mxu0 0
  %2689 = vmatprep.subr.bf16.mxu0 0
  %2690 = vmatpush1.bf16.msra.mxu0 0
  %2691 = vmatprep.subr.bf16.mxu0 0
  %2692 = vmatpush1.bf16.msra.mxu0 0
  %2693 = vmatprep.mubr.bf16.mxu0 0
  %2694 = vmatmul.mubr.bf16.gmra.mrb[0].mxu0 %v2659
  %v2695 = vpop.f32.mrb[0].mxu0
  %v2696 = vadd.f32 0.0, %v2695
  %v2697 = vpop.f32.mrb[0].mxu0
  %v2698 = vpop.f32.mrb[0].mxu0
  %v2699 = vpop.f32.mrb[0].mxu0
  %2700 = vdwg.mxu0
  %v2701 = vadd.f32 %v1441, %v2696
  %v2702 = vxor.u32 %v2701, 2147483648
  %v2703 = vmul.f32 %v2702, 1.442695
  %v2704 = vpow.pop %v2703
  %v2705 = vadd.f32 %v2704, 1.0
  %v2706 = vrcp.pop %v2705
  %v2707 = vmul.f32 1.0, %v2706
  %v2708 = vmul.f32 %v2707, 2.0
  %v2709 = vsub.f32 %v2708, 1.0
  %v2710 = vmul.f32 %v2707, %v2569
  %2712 = vrot.lane.b32.xlu0 %v2709, 64
  %v2713 = vpop.permute.xlu0 %2712
  %v2715 = vmul.f32 %v2707, %v2713
  %2717 = vrot.lane.b32.xlu0 %v2715, 32
  %v2718 = vpop.permute.xlu0 %2717
  %v2720 = vadd.f32 %v2710, %v2718
  %v2721 = vtanh.pop %v2720
  %2723 = vrot.lane.b32.xlu0 %v2721, 64
  %v2724 = vpop.permute.xlu0 %2723
  %v2726 = vmul.f32 %v2707, %v2724
  %2728 = vrot.lane.b32.xlu0 %v2726, 32
  %v2729 = vpop.permute.xlu0 %2728
  %2732 = vrot.lane.b32.xlu0 %v2653, 64
  %v2733 = vpop.permute.xlu0 %2732
  %v2735 = vsel %vm153, %v2729, %v2733
  %v2736 = vpack.c.bf16 %v2735, %v2735
  %v2738 = vsel %vm257, %v2736, 0
  %2740 = vmatprep.subr.bf16.mxu0 0
  %2741 = vmatpush1.bf16.msra.mxu0 %v249
  %2742 = vmatprep.subr.bf16.mxu0 0
  %2743 = vmatpush1.bf16.msra.mxu0 %v250
  %2744 = vmatprep.subr.bf16.mxu0 0
  %2745 = vmatpush1.bf16.msra.mxu0 %v251
  %2746 = vmatprep.subr.bf16.mxu0 0
  %2747 = vmatpush1.bf16.msra.mxu0 %v252
  %2748 = vmatprep.subr.bf16.mxu0 0
  %2749 = vmatpush1.bf16.msra.mxu0 0
  %2750 = vmatprep.subr.bf16.mxu0 0
  %2751 = vmatpush1.bf16.msra.mxu0 0
  %2752 = vmatprep.subr.bf16.mxu0 0
  %2753 = vmatpush1.bf16.msra.mxu0 0
  %2754 = vmatprep.subr.bf16.mxu0 0
  %2755 = vmatpush1.bf16.msra.mxu0 0
  %2756 = vmatprep.subr.bf16.mxu0 0
  %2757 = vmatpush1.bf16.msra.mxu0 0
  %2758 = vmatprep.subr.bf16.mxu0 0
  %2759 = vmatpush1.bf16.msra.mxu0 0
  %2760 = vmatprep.subr.bf16.mxu0 0
  %2761 = vmatpush1.bf16.msra.mxu0 0
  %2762 = vmatprep.subr.bf16.mxu0 0
  %2763 = vmatpush1.bf16.msra.mxu0 0
  %2764 = vmatprep.subr.bf16.mxu0 0
  %2765 = vmatpush1.bf16.msra.mxu0 0
  %2766 = vmatprep.subr.bf16.mxu0 0
  %2767 = vmatpush1.bf16.msra.mxu0 0
  %2768 = vmatprep.subr.bf16.mxu0 0
  %2769 = vmatpush1.bf16.msra.mxu0 0
  %2770 = vmatprep.subr.bf16.mxu0 0
  %2771 = vmatpush1.bf16.msra.mxu0 0
  %2772 = vmatprep.mubr.bf16.mxu0 0
  %2773 = vmatmul.mubr.bf16.gmra.mrb[0].mxu0 %v2738
  %v2774 = vpop.f32.mrb[0].mxu0
  %v2775 = vadd.f32 %v232, %v2774
  %v2776 = vpop.f32.mrb[0].mxu0
  %v2777 = vpop.f32.mrb[0].mxu0
  %v2778 = vpop.f32.mrb[0].mxu0
  %2779 = vdwg.mxu0
  %v2780 = vxor.u32 %v2775, 2147483648
  %v2781 = vmul.f32 %v2780, 1.442695
  %v2782 = vpow.pop %v2781
  %v2783 = vadd.f32 %v2782, 1.0
  %v2784 = vrcp.pop %v2783
  %v2785 = vmul.f32 1.0, %v2784
  %v2786 = vmul.f32 %v2785, 2.0
  %v2787 = vsub.f32 %v2786, 1.0
  %v2788 = vmul.f32 %v2785, %v2647
  %2790 = vrot.lane.b32.xlu0 %v2787, 64
  %v2791 = vpop.permute.xlu0 %2790
  %v2793 = vmul.f32 %v2785, %v2791
  %2795 = vrot.lane.b32.xlu0 %v2793, 32
  %v2796 = vpop.permute.xlu0 %2795
  %v2798 = vadd.f32 %v2788, %v2796
  %v2799 = vtanh.pop %v2798
  %2801 = vrot.lane.b32.xlu0 %v2799, 64
  %v2802 = vpop.permute.xlu0 %2801
  %v2804 = vmul.f32 %v2785, %v2802
  %v2805 = vpack.c.bf16 %v2804, %v2804
  %2807 = vrot.lane.b32.xlu0 %v2805, 32
  %v2808 = vpop.permute.xlu0 %2807
  %v2810 = vsel %vm153, %v2808, 0
  %2812 = vmatprep.subr.bf16.mxu0 0
  %2813 = vmatpush1.bf16.msra.mxu0 %v1399
  %2814 = vmatprep.subr.bf16.mxu0 0
  %2815 = vmatpush1.bf16.msra.mxu0 %v1400
  %2816 = vmatprep.subr.bf16.mxu0 0
  %2817 = vmatpush1.bf16.msra.mxu0 0
  %2818 = vmatprep.subr.bf16.mxu0 0
  %2819 = vmatpush1.bf16.msra.mxu0 0
  %2820 = vmatprep.subr.bf16.mxu0 0
  %2821 = vmatpush1.bf16.msra.mxu0 0
  %2822 = vmatprep.subr.bf16.mxu0 0
  %2823 = vmatpush1.bf16.msra.mxu0 0
  %2824 = vmatprep.subr.bf16.mxu0 0
  %2825 = vmatpush1.bf16.msra.mxu0 0
  %2826 = vmatprep.subr.bf16.mxu0 0
  %2827 = vmatpush1.bf16.msra.mxu0 0
  %2828 = vmatprep.subr.bf16.mxu0 0
  %2829 = vmatpush1.bf16.msra.mxu0 0
  %2830 = vmatprep.subr.bf16.mxu0 0
  %2831 = vmatpush1.bf16.msra.mxu0 0
  %2832 = vmatprep.subr.bf16.mxu0 0
  %2833 = vmatpush1.bf16.msra.mxu0 0
  %2834 = vmatprep.subr.bf16.mxu0 0
  %2835 = vmatpush1.bf16.msra.mxu0 0
  %2836 = vmatprep.subr.bf16.mxu0 0
  %2837 = vmatpush1.bf16.msra.mxu0 0
  %2838 = vmatprep.subr.bf16.mxu0 0
  %2839 = vmatpush1.bf16.msra.mxu0 0
  %2840 = vmatprep.subr.bf16.mxu0 0
  %2841 = vmatpush1.bf16.msra.mxu0 0
  %2842 = vmatprep.subr.bf16.mxu0 0
  %2843 = vmatpush1.bf16.msra.mxu0 0
  %2844 = vmatprep.mubr.bf16.mxu0 0
  %2845 = vmatmul.mubr.bf16.gmra.mrb[0].mxu0 %v2810
  %v2846 = vpop.f32.mrb[0].mxu0
  %v2847 = vadd.f32 %v1387, %v2846
  %v2848 = vpop.f32.mrb[0].mxu0
  %v2849 = vpop.f32.mrb[0].mxu0
  %v2850 = vpop.f32.mrb[0].mxu0
  %2851 = vdwg.mxu0
  %v2852 = vpack.c.bf16 %v2726, %v2726
  %2854 = vrot.lane.b32.xlu0 %v2852, 32
  %v2855 = vpop.permute.xlu0 %2854
  %v2857 = vsel %vm153, %v2855, 0
  %2859 = vmatprep.subr.bf16.mxu0 0
  %2860 = vmatpush1.bf16.msra.mxu0 %v149
  %2861 = vmatprep.subr.bf16.mxu0 0
  %2862 = vmatpush1.bf16.msra.mxu0 %v150
  %2863 = vmatprep.subr.bf16.mxu0 0
  %2864 = vmatpush1.bf16.msra.mxu0 0
  %2865 = vmatprep.subr.bf16.mxu0 0
  %2866 = vmatpush1.bf16.msra.mxu0 0
  %2867 = vmatprep.subr.bf16.mxu0 0
  %2868 = vmatpush1.bf16.msra.mxu0 0
  %2869 = vmatprep.subr.bf16.mxu0 0
  %2870 = vmatpush1.bf16.msra.mxu0 0
  %2871 = vmatprep.subr.bf16.mxu0 0
  %2872 = vmatpush1.bf16.msra.mxu0 0
  %2873 = vmatprep.subr.bf16.mxu0 0
  %2874 = vmatpush1.bf16.msra.mxu0 0
  %2875 = vmatprep.subr.bf16.mxu0 0
  %2876 = vmatpush1.bf16.msra.mxu0 0
  %2877 = vmatprep.subr.bf16.mxu0 0
  %2878 = vmatpush1.bf16.msra.mxu0 0
  %2879 = vmatprep.subr.bf16.mxu0 0
  %2880 = vmatpush1.bf16.msra.mxu0 0
  %2881 = vmatprep.subr.bf16.mxu0 0
  %2882 = vmatpush1.bf16.msra.mxu0 0
  %2883 = vmatprep.subr.bf16.mxu0 0
  %2884 = vmatpush1.bf16.msra.mxu0 0
  %2885 = vmatprep.subr.bf16.mxu0 0
  %2886 = vmatpush1.bf16.msra.mxu0 0
  %2887 = vmatprep.subr.bf16.mxu0 0
  %2888 = vmatpush1.bf16.msra.mxu0 0
  %2889 = vmatprep.subr.bf16.mxu0 0
  %2890 = vmatpush1.bf16.msra.mxu0 0
  %2891 = vmatprep.mubr.bf16.mxu0 0
  %2892 = vmatmul.mubr.bf16.gmra.mrb[0].mxu0 %v2857
  %v2893 = vpop.f32.mrb[0].mxu0
  %v2894 = vadd.f32 0.0, %v2893
  %v2895 = vpop.f32.mrb[0].mxu0
  %v2896 = vpop.f32.mrb[0].mxu0
  %v2897 = vpop.f32.mrb[0].mxu0
  %2898 = vdwg.mxu0
  %v2899 = vadd.f32 %v111, %v2894
  %v2900 = vxor.u32 %v2899, 2147483648
  %v2901 = vmul.f32 %v2900, 1.442695
  %v2902 = vpow.pop %v2901
  %v2903 = vadd.f32 %v2902, 1.0
  %v2904 = vrcp.pop %v2903
  %v2905 = vmul.f32 1.0, %v2904
  %v2906 = vmul.f32 %v2905, 2.0
  %v2907 = vsub.f32 %v2906, 1.0
  %v2908 = vmul.f32 %v2905, %v2720
  %2910 = vrot.lane.b32.xlu0 %v2907, 64
  %v2911 = vpop.permute.xlu0 %2910
  %v2913 = vmul.f32 %v2905, %v2911
  %2915 = vrot.lane.b32.xlu0 %v2913, 32
  %v2916 = vpop.permute.xlu0 %2915
  %v2918 = vadd.f32 %v2908, %v2916
  %v2919 = vtanh.pop %v2918
  %2921 = vrot.lane.b32.xlu0 %v2919, 64
  %v2922 = vpop.permute.xlu0 %2921
  %v2924 = vmul.f32 %v2905, %v2922
  %2926 = vrot.lane.b32.xlu0 %v2924, 32
  %v2927 = vpop.permute.xlu0 %2926
  %2930 = vrot.lane.b32.xlu0 %v2804, 64
  %v2931 = vpop.permute.xlu0 %2930
  %v2933 = vsel %vm153, %v2927, %v2931
  %v2934 = vpack.c.bf16 %v2933, %v2933
  %v2936 = vsel %vm257, %v2934, 0
  %2938 = vmatprep.subr.bf16.mxu0 0
  %2939 = vmatpush1.bf16.msra.mxu0 %v249
  %2940 = vmatprep.subr.bf16.mxu0 0
  %2941 = vmatpush1.bf16.msra.mxu0 %v250
  %2942 = vmatprep.subr.bf16.mxu0 0
  %2943 = vmatpush1.bf16.msra.mxu0 %v251
  %2944 = vmatprep.subr.bf16.mxu0 0
  %2945 = vmatpush1.bf16.msra.mxu0 %v252
  %2946 = vmatprep.subr.bf16.mxu0 0
  %2947 = vmatpush1.bf16.msra.mxu0 0
  %2948 = vmatprep.subr.bf16.mxu0 0
  %2949 = vmatpush1.bf16.msra.mxu0 0
  %2950 = vmatprep.subr.bf16.mxu0 0
  %2951 = vmatpush1.bf16.msra.mxu0 0
  %2952 = vmatprep.subr.bf16.mxu0 0
  %2953 = vmatpush1.bf16.msra.mxu0 0
  %2954 = vmatprep.subr.bf16.mxu0 0
  %2955 = vmatpush1.bf16.msra.mxu0 0
  %2956 = vmatprep.subr.bf16.mxu0 0
  %2957 = vmatpush1.bf16.msra.mxu0 0
  %2958 = vmatprep.subr.bf16.mxu0 0
  %2959 = vmatpush1.bf16.msra.mxu0 0
  %2960 = vmatprep.subr.bf16.mxu0 0
  %2961 = vmatpush1.bf16.msra.mxu0 0
  %2962 = vmatprep.subr.bf16.mxu0 0
  %2963 = vmatpush1.bf16.msra.mxu0 0
  %2964 = vmatprep.subr.bf16.mxu0 0
  %2965 = vmatpush1.bf16.msra.mxu0 0
  %2966 = vmatprep.subr.bf16.mxu0 0
  %2967 = vmatpush1.bf16.msra.mxu0 0
  %2968 = vmatprep.subr.bf16.mxu0 0
  %2969 = vmatpush1.bf16.msra.mxu0 0
  %2970 = vmatprep.mubr.bf16.mxu0 0
  %2971 = vmatmul.mubr.bf16.gmra.mrb[0].mxu0 %v2936
  %v2972 = vpop.f32.mrb[0].mxu0
  %v2973 = vadd.f32 %v232, %v2972
  %v2974 = vpop.f32.mrb[0].mxu0
  %v2975 = vpop.f32.mrb[0].mxu0
  %v2976 = vpop.f32.mrb[0].mxu0
  %2977 = vdwg.mxu0
  %v2978 = vxor.u32 %v2973, 2147483648
  %v2979 = vmul.f32 %v2978, 1.442695
  %v2980 = vpow.pop %v2979
  %v2981 = vadd.f32 %v2980, 1.0
  %v2982 = vrcp.pop %v2981
  %v2983 = vmul.f32 1.0, %v2982
  %v2984 = vmul.f32 %v2983, 2.0
  %v2985 = vsub.f32 %v2984, 1.0
  %v2986 = vmul.f32 %v2983, %v2798
  %2988 = vrot.lane.b32.xlu0 %v2985, 64
  %v2989 = vpop.permute.xlu0 %2988
  %v2991 = vmul.f32 %v2983, %v2989
  %2993 = vrot.lane.b32.xlu0 %v2991, 32
  %v2994 = vpop.permute.xlu0 %2993
  %v2996 = vadd.f32 %v2986, %v2994
  %v2997 = vtanh.pop %v2996
  %2999 = vrot.lane.b32.xlu0 %v2997, 64
  %v3000 = vpop.permute.xlu0 %2999
  %v3002 = vmul.f32 %v2983, %v3000
  %v3003 = vpack.c.bf16 %v2924, %v2924
  %3005 = vrot.lane.b32.xlu0 %v3003, 32
  %v3006 = vpop.permute.xlu0 %3005
  %v3008 = vsel %vm153, %v3006, 0
  %3010 = vmatprep.subr.bf16.mxu0 0
  %3011 = vmatpush1.bf16.msra.mxu0 %v149
  %3012 = vmatprep.subr.bf16.mxu0 0
  %3013 = vmatpush1.bf16.msra.mxu0 %v150
  %3014 = vmatprep.subr.bf16.mxu0 0
  %3015 = vmatpush1.bf16.msra.mxu0 0
  %3016 = vmatprep.subr.bf16.mxu0 0
  %3017 = vmatpush1.bf16.msra.mxu0 0
  %3018 = vmatprep.subr.bf16.mxu0 0
  %3019 = vmatpush1.bf16.msra.mxu0 0
  %3020 = vmatprep.subr.bf16.mxu0 0
  %3021 = vmatpush1.bf16.msra.mxu0 0
  %3022 = vmatprep.subr.bf16.mxu0 0
  %3023 = vmatpush1.bf16.msra.mxu0 0
  %3024 = vmatprep.subr.bf16.mxu0 0
  %3025 = vmatpush1.bf16.msra.mxu0 0
  %3026 = vmatprep.subr.bf16.mxu0 0
  %3027 = vmatpush1.bf16.msra.mxu0 0
  %3028 = vmatprep.subr.bf16.mxu0 0
  %3029 = vmatpush1.bf16.msra.mxu0 0
  %3030 = vmatprep.subr.bf16.mxu0 0
  %3031 = vmatpush1.bf16.msra.mxu0 0
  %3032 = vmatprep.subr.bf16.mxu0 0
  %3033 = vmatpush1.bf16.msra.mxu0 0
  %3034 = vmatprep.subr.bf16.mxu0 0
  %3035 = vmatpush1.bf16.msra.mxu0 0
  %3036 = vmatprep.subr.bf16.mxu0 0
  %3037 = vmatpush1.bf16.msra.mxu0 0
  %3038 = vmatprep.subr.bf16.mxu0 0
  %3039 = vmatpush1.bf16.msra.mxu0 0
  %3040 = vmatprep.subr.bf16.mxu0 0
  %3041 = vmatpush1.bf16.msra.mxu0 0
  %3042 = vmatprep.mubr.bf16.mxu0 0
  %3043 = vmatmul.mubr.bf16.gmra.mrb[0].mxu0 %v3008
  %v3044 = vpop.f32.mrb[0].mxu0
  %v3045 = vadd.f32 0.0, %v3044
  %v3046 = vpop.f32.mrb[0].mxu0
  %v3047 = vpop.f32.mrb[0].mxu0
  %v3048 = vpop.f32.mrb[0].mxu0
  %3049 = vdwg.mxu0
  %v3050 = vadd.f32 %v114, %v3045
  %v3051 = vxor.u32 %v3050, 2147483648
  %v3052 = vmul.f32 %v3051, 1.442695
  %v3053 = vpow.pop %v3052
  %v3054 = vadd.f32 %v3053, 1.0
  %v3055 = vrcp.pop %v3054
  %v3056 = vmul.f32 1.0, %v3055
  %v3057 = vmul.f32 %v3056, 2.0
  %v3058 = vsub.f32 %v3057, 1.0
  %v3059 = vmul.f32 %v3056, %v2918
  %3061 = vrot.lane.b32.xlu0 %v3058, 64
  %v3062 = vpop.permute.xlu0 %3061
  %v3064 = vmul.f32 %v3056, %v3062
  %3066 = vrot.lane.b32.xlu0 %v3064, 32
  %v3067 = vpop.permute.xlu0 %3066
  %v3069 = vadd.f32 %v3059, %v3067
  %v3070 = vtanh.pop %v3069
  %3072 = vrot.lane.b32.xlu0 %v3070, 64
  %v3073 = vpop.permute.xlu0 %3072
  %v3075 = vmul.f32 %v3056, %v3073
  %3077 = vrot.lane.b32.xlu0 %v3075, 32
  %v3078 = vpop.permute.xlu0 %3077
  %3081 = vrot.lane.b32.xlu0 %v3002, 64
  %v3082 = vpop.permute.xlu0 %3081
  %v3084 = vsel %vm153, %v3078, %v3082
  %v3085 = vpack.c.bf16 %v3084, %v3084
  %v3087 = vsel %vm257, %v3085, 0
  %3089 = vmatprep.subr.bf16.mxu0 0
  %3090 = vmatpush1.bf16.msra.mxu0 %v249
  %3091 = vmatprep.subr.bf16.mxu0 0
  %3092 = vmatpush1.bf16.msra.mxu0 %v250
  %3093 = vmatprep.subr.bf16.mxu0 0
  %3094 = vmatpush1.bf16.msra.mxu0 %v251
  %3095 = vmatprep.subr.bf16.mxu0 0
  %3096 = vmatpush1.bf16.msra.mxu0 %v252
  %3097 = vmatprep.subr.bf16.mxu0 0
  %3098 = vmatpush1.bf16.msra.mxu0 0
  %3099 = vmatprep.subr.bf16.mxu0 0
  %3100 = vmatpush1.bf16.msra.mxu0 0
  %3101 = vmatprep.subr.bf16.mxu0 0
  %3102 = vmatpush1.bf16.msra.mxu0 0
  %3103 = vmatprep.subr.bf16.mxu0 0
  %3104 = vmatpush1.bf16.msra.mxu0 0
  %3105 = vmatprep.subr.bf16.mxu0 0
  %3106 = vmatpush1.bf16.msra.mxu0 0
  %3107 = vmatprep.subr.bf16.mxu0 0
  %3108 = vmatpush1.bf16.msra.mxu0 0
  %3109 = vmatprep.subr.bf16.mxu0 0
  %3110 = vmatpush1.bf16.msra.mxu0 0
  %3111 = vmatprep.subr.bf16.mxu0 0
  %3112 = vmatpush1.bf16.msra.mxu0 0
  %3113 = vmatprep.subr.bf16.mxu0 0
  %3114 = vmatpush1.bf16.msra.mxu0 0
  %3115 = vmatprep.subr.bf16.mxu0 0
  %3116 = vmatpush1.bf16.msra.mxu0 0
  %3117 = vmatprep.subr.bf16.mxu0 0
  %3118 = vmatpush1.bf16.msra.mxu0 0
  %3119 = vmatprep.subr.bf16.mxu0 0
  %3120 = vmatpush1.bf16.msra.mxu0 0
  %3121 = vmatprep.mubr.bf16.mxu0 0
  %3122 = vmatmul.mubr.bf16.gmra.mrb[0].mxu0 %v3087
  %v3123 = vpop.f32.mrb[0].mxu0
  %v3124 = vadd.f32 %v232, %v3123
  %v3125 = vpop.f32.mrb[0].mxu0
  %v3126 = vpop.f32.mrb[0].mxu0
  %v3127 = vpop.f32.mrb[0].mxu0
  %3128 = vdwg.mxu0
  %v3129 = vxor.u32 %v3124, 2147483648
  %v3130 = vmul.f32 %v3129, 1.442695
  %v3131 = vpow.pop %v3130
  %v3132 = vadd.f32 %v3131, 1.0
  %v3133 = vrcp.pop %v3132
  %v3134 = vmul.f32 1.0, %v3133
  %v3135 = vmul.f32 %v3134, 2.0
  %v3136 = vsub.f32 %v3135, 1.0
  %v3137 = vmul.f32 %v3134, %v2996
  %3139 = vrot.lane.b32.xlu0 %v3136, 64
  %v3140 = vpop.permute.xlu0 %3139
  %v3142 = vmul.f32 %v3134, %v3140
  %3144 = vrot.lane.b32.xlu0 %v3142, 32
  %v3145 = vpop.permute.xlu0 %3144
  %v3147 = vadd.f32 %v3137, %v3145
  %v3148 = vtanh.pop %v3147
  %3150 = vrot.lane.b32.xlu0 %v3148, 64
  %v3151 = vpop.permute.xlu0 %3150
  %v3153 = vmul.f32 %v3134, %v3151
  %v3154 = vpack.c.bf16 %v3075, %v3075
  %3156 = vrot.lane.b32.xlu0 %v3154, 32
  %v3157 = vpop.permute.xlu0 %3156
  %v3159 = vsel %vm153, %v3157, 0
  %3161 = vmatprep.subr.bf16.mxu0 0
  %3162 = vmatpush1.bf16.msra.mxu0 %v149
  %3163 = vmatprep.subr.bf16.mxu0 0
  %3164 = vmatpush1.bf16.msra.mxu0 %v150
  %3165 = vmatprep.subr.bf16.mxu0 0
  %3166 = vmatpush1.bf16.msra.mxu0 0
  %3167 = vmatprep.subr.bf16.mxu0 0
  %3168 = vmatpush1.bf16.msra.mxu0 0
  %3169 = vmatprep.subr.bf16.mxu0 0
  %3170 = vmatpush1.bf16.msra.mxu0 0
  %3171 = vmatprep.subr.bf16.mxu0 0
  %3172 = vmatpush1.bf16.msra.mxu0 0
  %3173 = vmatprep.subr.bf16.mxu0 0
  %3174 = vmatpush1.bf16.msra.mxu0 0
  %3175 = vmatprep.subr.bf16.mxu0 0
  %3176 = vmatpush1.bf16.msra.mxu0 0
  %3177 = vmatprep.subr.bf16.mxu0 0
  %3178 = vmatpush1.bf16.msra.mxu0 0
  %3179 = vmatprep.subr.bf16.mxu0 0
  %3180 = vmatpush1.bf16.msra.mxu0 0
  %3181 = vmatprep.subr.bf16.mxu0 0
  %3182 = vmatpush1.bf16.msra.mxu0 0
  %3183 = vmatprep.subr.bf16.mxu0 0
  %3184 = vmatpush1.bf16.msra.mxu0 0
  %3185 = vmatprep.subr.bf16.mxu0 0
  %3186 = vmatpush1.bf16.msra.mxu0 0
  %3187 = vmatprep.subr.bf16.mxu0 0
  %3188 = vmatpush1.bf16.msra.mxu0 0
  %3189 = vmatprep.subr.bf16.mxu0 0
  %3190 = vmatpush1.bf16.msra.mxu0 0
  %3191 = vmatprep.subr.bf16.mxu0 0
  %3192 = vmatpush1.bf16.msra.mxu0 0
  %3193 = vmatprep.mubr.bf16.mxu0 0
  %3194 = vmatmul.mubr.bf16.gmra.mrb[0].mxu0 %v3159
  %v3195 = vpop.f32.mrb[0].mxu0
  %v3196 = vadd.f32 0.0, %v3195
  %v3197 = vpop.f32.mrb[0].mxu0
  %v3198 = vpop.f32.mrb[0].mxu0
  %v3199 = vpop.f32.mrb[0].mxu0
  %3200 = vdwg.mxu0
  %v3201 = vadd.f32 %v119, %v3196
  %v3202 = vxor.u32 %v3201, 2147483648
  %v3203 = vmul.f32 %v3202, 1.442695
  %v3204 = vpow.pop %v3203
  %v3205 = vadd.f32 %v3204, 1.0
  %v3206 = vrcp.pop %v3205
  %v3207 = vmul.f32 1.0, %v3206
  %v3208 = vmul.f32 %v3207, 2.0
  %v3209 = vsub.f32 %v3208, 1.0
  %v3210 = vmul.f32 %v3207, %v3069
  %3212 = vrot.lane.b32.xlu0 %v3209, 64
  %v3213 = vpop.permute.xlu0 %3212
  %v3215 = vmul.f32 %v3207, %v3213
  %3217 = vrot.lane.b32.xlu0 %v3215, 32
  %v3218 = vpop.permute.xlu0 %3217
  %v3220 = vadd.f32 %v3210, %v3218
  %v3221 = vtanh.pop %v3220
  %3223 = vrot.lane.b32.xlu0 %v3221, 64
  %v3224 = vpop.permute.xlu0 %3223
  %v3226 = vmul.f32 %v3207, %v3224
  %3228 = vrot.lane.b32.xlu0 %v3226, 32
  %v3229 = vpop.permute.xlu0 %3228
  %3232 = vrot.lane.b32.xlu0 %v3153, 64
  %v3233 = vpop.permute.xlu0 %3232
  %v3235 = vsel %vm153, %v3229, %v3233
  %v3236 = vpack.c.bf16 %v3235, %v3235
  %v3238 = vsel %vm257, %v3236, 0
  %3240 = vmatprep.subr.bf16.mxu0 0
  %3241 = vmatpush1.bf16.msra.mxu0 %v249
  %3242 = vmatprep.subr.bf16.mxu0 0
  %3243 = vmatpush1.bf16.msra.mxu0 %v250
  %3244 = vmatprep.subr.bf16.mxu0 0
  %3245 = vmatpush1.bf16.msra.mxu0 %v251
  %3246 = vmatprep.subr.bf16.mxu0 0
  %3247 = vmatpush1.bf16.msra.mxu0 %v252
  %3248 = vmatprep.subr.bf16.mxu0 0
  %3249 = vmatpush1.bf16.msra.mxu0 0
  %3250 = vmatprep.subr.bf16.mxu0 0
  %3251 = vmatpush1.bf16.msra.mxu0 0
  %3252 = vmatprep.subr.bf16.mxu0 0
  %3253 = vmatpush1.bf16.msra.mxu0 0
  %3254 = vmatprep.subr.bf16.mxu0 0
  %3255 = vmatpush1.bf16.msra.mxu0 0
  %3256 = vmatprep.subr.bf16.mxu0 0
  %3257 = vmatpush1.bf16.msra.mxu0 0
  %3258 = vmatprep.subr.bf16.mxu0 0
  %3259 = vmatpush1.bf16.msra.mxu0 0
  %3260 = vmatprep.subr.bf16.mxu0 0
  %3261 = vmatpush1.bf16.msra.mxu0 0
  %3262 = vmatprep.subr.bf16.mxu0 0
  %3263 = vmatpush1.bf16.msra.mxu0 0
  %3264 = vmatprep.subr.bf16.mxu0 0
  %3265 = vmatpush1.bf16.msra.mxu0 0
  %3266 = vmatprep.subr.bf16.mxu0 0
  %3267 = vmatpush1.bf16.msra.mxu0 0
  %3268 = vmatprep.subr.bf16.mxu0 0
  %3269 = vmatpush1.bf16.msra.mxu0 0
  %3270 = vmatprep.subr.bf16.mxu0 0
  %3271 = vmatpush1.bf16.msra.mxu0 0
  %3272 = vmatprep.mubr.bf16.mxu0 0
  %3273 = vmatmul.mubr.bf16.gmra.mrb[0].mxu0 %v3238
  %v3274 = vpop.f32.mrb[0].mxu0
  %v3275 = vadd.f32 %v232, %v3274
  %v3276 = vpop.f32.mrb[0].mxu0
  %v3277 = vpop.f32.mrb[0].mxu0
  %v3278 = vpop.f32.mrb[0].mxu0
  %3279 = vdwg.mxu0
  %v3280 = vxor.u32 %v3275, 2147483648
  %v3281 = vmul.f32 %v3280, 1.442695
  %v3282 = vpow.pop %v3281
  %v3283 = vadd.f32 %v3282, 1.0
  %v3284 = vrcp.pop %v3283
  %v3285 = vmul.f32 1.0, %v3284
  %v3286 = vmul.f32 %v3285, 2.0
  %v3287 = vsub.f32 %v3286, 1.0
  %v3288 = vmul.f32 %v3285, %v3147
  %3290 = vrot.lane.b32.xlu0 %v3287, 64
  %v3291 = vpop.permute.xlu0 %3290
  %v3293 = vmul.f32 %v3285, %v3291
  %3295 = vrot.lane.b32.xlu0 %v3293, 32
  %v3296 = vpop.permute.xlu0 %3295
  %v3298 = vadd.f32 %v3288, %v3296
  %v3299 = vtanh.pop %v3298
  %3301 = vrot.lane.b32.xlu0 %v3299, 64
  %v3302 = vpop.permute.xlu0 %3301
  %v3304 = vmul.f32 %v3285, %v3302
  %v3305 = vpack.c.bf16 %v3226, %v3226
  %3307 = vrot.lane.b32.xlu0 %v3305, 32
  %v3308 = vpop.permute.xlu0 %3307
  %v3310 = vsel %vm153, %v3308, 0
  %3312 = vmatprep.subr.bf16.mxu0 0
  %3313 = vmatpush1.bf16.msra.mxu0 %v149
  %3314 = vmatprep.subr.bf16.mxu0 0
  %3315 = vmatpush1.bf16.msra.mxu0 %v150
  %3316 = vmatprep.subr.bf16.mxu0 0
  %3317 = vmatpush1.bf16.msra.mxu0 0
  %3318 = vmatprep.subr.bf16.mxu0 0
  %3319 = vmatpush1.bf16.msra.mxu0 0
  %3320 = vmatprep.subr.bf16.mxu0 0
  %3321 = vmatpush1.bf16.msra.mxu0 0
  %3322 = vmatprep.subr.bf16.mxu0 0
  %3323 = vmatpush1.bf16.msra.mxu0 0
  %3324 = vmatprep.subr.bf16.mxu0 0
  %3325 = vmatpush1.bf16.msra.mxu0 0
  %3326 = vmatprep.subr.bf16.mxu0 0
  %3327 = vmatpush1.bf16.msra.mxu0 0
  %3328 = vmatprep.subr.bf16.mxu0 0
  %3329 = vmatpush1.bf16.msra.mxu0 0
  %3330 = vmatprep.subr.bf16.mxu0 0
  %3331 = vmatpush1.bf16.msra.mxu0 0
  %3332 = vmatprep.subr.bf16.mxu0 0
  %3333 = vmatpush1.bf16.msra.mxu0 0
  %3334 = vmatprep.subr.bf16.mxu0 0
  %3335 = vmatpush1.bf16.msra.mxu0 0
  %3336 = vmatprep.subr.bf16.mxu0 0
  %3337 = vmatpush1.bf16.msra.mxu0 0
  %3338 = vmatprep.subr.bf16.mxu0 0
  %3339 = vmatpush1.bf16.msra.mxu0 0
  %3340 = vmatprep.subr.bf16.mxu0 0
  %3341 = vmatpush1.bf16.msra.mxu0 0
  %3342 = vmatprep.subr.bf16.mxu0 0
  %3343 = vmatpush1.bf16.msra.mxu0 0
  %3344 = vmatprep.mubr.bf16.mxu0 0
  %3345 = vmatmul.mubr.bf16.gmra.mrb[0].mxu0 %v3310
  %v3346 = vpop.f32.mrb[0].mxu0
  %v3347 = vadd.f32 0.0, %v3346
  %v3348 = vpop.f32.mrb[0].mxu0
  %v3349 = vpop.f32.mrb[0].mxu0
  %v3350 = vpop.f32.mrb[0].mxu0
  %3351 = vdwg.mxu0
  %v3352 = vadd.f32 %v122, %v3347
  %v3353 = vxor.u32 %v3352, 2147483648
  %v3354 = vmul.f32 %v3353, 1.442695
  %v3355 = vpow.pop %v3354
  %v3356 = vadd.f32 %v3355, 1.0
  %v3357 = vrcp.pop %v3356
  %v3358 = vmul.f32 1.0, %v3357
  %v3359 = vmul.f32 %v3358, 2.0
  %v3360 = vsub.f32 %v3359, 1.0
  %v3361 = vmul.f32 %v3358, %v3220
  %3363 = vrot.lane.b32.xlu0 %v3360, 64
  %v3364 = vpop.permute.xlu0 %3363
  %v3366 = vmul.f32 %v3358, %v3364
  %3368 = vrot.lane.b32.xlu0 %v3366, 32
  %v3369 = vpop.permute.xlu0 %3368
  %v3371 = vadd.f32 %v3361, %v3369
  %v3372 = vtanh.pop %v3371
  %3374 = vrot.lane.b32.xlu0 %v3372, 64
  %v3375 = vpop.permute.xlu0 %3374
  %v3377 = vmul.f32 %v3358, %v3375
  %3379 = vrot.lane.b32.xlu0 %v3377, 32
  %v3380 = vpop.permute.xlu0 %3379
  %3383 = vrot.lane.b32.xlu0 %v3304, 64
  %v3384 = vpop.permute.xlu0 %3383
  %v3386 = vsel %vm153, %v3380, %v3384
  %v3387 = vpack.c.bf16 %v3386, %v3386
  %v3389 = vsel %vm257, %v3387, 0
  %3391 = vmatprep.subr.bf16.mxu0 0
  %3392 = vmatpush1.bf16.msra.mxu0 %v249
  %3393 = vmatprep.subr.bf16.mxu0 0
  %3394 = vmatpush1.bf16.msra.mxu0 %v250
  %3395 = vmatprep.subr.bf16.mxu0 0
  %3396 = vmatpush1.bf16.msra.mxu0 %v251
  %3397 = vmatprep.subr.bf16.mxu0 0
  %3398 = vmatpush1.bf16.msra.mxu0 %v252
  %3399 = vmatprep.subr.bf16.mxu0 0
  %3400 = vmatpush1.bf16.msra.mxu0 0
  %3401 = vmatprep.subr.bf16.mxu0 0
  %3402 = vmatpush1.bf16.msra.mxu0 0
  %3403 = vmatprep.subr.bf16.mxu0 0
  %3404 = vmatpush1.bf16.msra.mxu0 0
  %3405 = vmatprep.subr.bf16.mxu0 0
  %3406 = vmatpush1.bf16.msra.mxu0 0
  %3407 = vmatprep.subr.bf16.mxu0 0
  %3408 = vmatpush1.bf16.msra.mxu0 0
  %3409 = vmatprep.subr.bf16.mxu0 0
  %3410 = vmatpush1.bf16.msra.mxu0 0
  %3411 = vmatprep.subr.bf16.mxu0 0
  %3412 = vmatpush1.bf16.msra.mxu0 0
  %3413 = vmatprep.subr.bf16.mxu0 0
  %3414 = vmatpush1.bf16.msra.mxu0 0
  %3415 = vmatprep.subr.bf16.mxu0 0
  %3416 = vmatpush1.bf16.msra.mxu0 0
  %3417 = vmatprep.subr.bf16.mxu0 0
  %3418 = vmatpush1.bf16.msra.mxu0 0
  %3419 = vmatprep.subr.bf16.mxu0 0
  %3420 = vmatpush1.bf16.msra.mxu0 0
  %3421 = vmatprep.subr.bf16.mxu0 0
  %3422 = vmatpush1.bf16.msra.mxu0 0
  %3423 = vmatprep.mubr.bf16.mxu0 0
  %3424 = vmatmul.mubr.bf16.gmra.mrb[0].mxu0 %v3389
  %v3425 = vpop.f32.mrb[0].mxu0
  %v3426 = vadd.f32 %v232, %v3425
  %v3427 = vpop.f32.mrb[0].mxu0
  %v3428 = vpop.f32.mrb[0].mxu0
  %v3429 = vpop.f32.mrb[0].mxu0
  %3430 = vdwg.mxu0
  %v3431 = vxor.u32 %v3426, 2147483648
  %v3432 = vmul.f32 %v3431, 1.442695
  %v3433 = vpow.pop %v3432
  %v3434 = vadd.f32 %v3433, 1.0
  %v3435 = vrcp.pop %v3434
  %v3436 = vmul.f32 1.0, %v3435
  %v3437 = vmul.f32 %v3436, 2.0
  %v3438 = vsub.f32 %v3437, 1.0
  %v3439 = vmul.f32 %v3436, %v3298
  %3441 = vrot.lane.b32.xlu0 %v3438, 64
  %v3442 = vpop.permute.xlu0 %3441
  %v3444 = vmul.f32 %v3436, %v3442
  %3446 = vrot.lane.b32.xlu0 %v3444, 32
  %v3447 = vpop.permute.xlu0 %3446
  %v3449 = vadd.f32 %v3439, %v3447
  %v3450 = vtanh.pop %v3449
  %3452 = vrot.lane.b32.xlu0 %v3450, 64
  %v3453 = vpop.permute.xlu0 %3452
  %v3455 = vmul.f32 %v3436, %v3453
  %v3456 = vpack.c.bf16 %v3377, %v3377
  %3458 = vrot.lane.b32.xlu0 %v3456, 32
  %v3459 = vpop.permute.xlu0 %3458
  %v3461 = vsel %vm153, %v3459, 0
  %3463 = vmatprep.subr.bf16.mxu0 0
  %3464 = vmatpush1.bf16.msra.mxu0 %v149
  %3465 = vmatprep.subr.bf16.mxu0 0
  %3466 = vmatpush1.bf16.msra.mxu0 %v150
  %3467 = vmatprep.subr.bf16.mxu0 0
  %3468 = vmatpush1.bf16.msra.mxu0 0
  %3469 = vmatprep.subr.bf16.mxu0 0
  %3470 = vmatpush1.bf16.msra.mxu0 0
  %3471 = vmatprep.subr.bf16.mxu0 0
  %3472 = vmatpush1.bf16.msra.mxu0 0
  %3473 = vmatprep.subr.bf16.mxu0 0
  %3474 = vmatpush1.bf16.msra.mxu0 0
  %3475 = vmatprep.subr.bf16.mxu0 0
  %3476 = vmatpush1.bf16.msra.mxu0 0
  %3477 = vmatprep.subr.bf16.mxu0 0
  %3478 = vmatpush1.bf16.msra.mxu0 0
  %3479 = vmatprep.subr.bf16.mxu0 0
  %3480 = vmatpush1.bf16.msra.mxu0 0
  %3481 = vmatprep.subr.bf16.mxu0 0
  %3482 = vmatpush1.bf16.msra.mxu0 0
  %3483 = vmatprep.subr.bf16.mxu0 0
  %3484 = vmatpush1.bf16.msra.mxu0 0
  %3485 = vmatprep.subr.bf16.mxu0 0
  %3486 = vmatpush1.bf16.msra.mxu0 0
  %3487 = vmatprep.subr.bf16.mxu0 0
  %3488 = vmatpush1.bf16.msra.mxu0 0
  %3489 = vmatprep.subr.bf16.mxu0 0
  %3490 = vmatpush1.bf16.msra.mxu0 0
  %3491 = vmatprep.subr.bf16.mxu0 0
  %3492 = vmatpush1.bf16.msra.mxu0 0
  %3493 = vmatprep.subr.bf16.mxu0 0
  %3494 = vmatpush1.bf16.msra.mxu0 0
  %3495 = vmatprep.mubr.bf16.mxu0 0
  %3496 = vmatmul.mubr.bf16.gmra.mrb[0].mxu0 %v3461
  %v3497 = vpop.f32.mrb[0].mxu0
  %v3498 = vadd.f32 0.0, %v3497
  %v3499 = vpop.f32.mrb[0].mxu0
  %v3500 = vpop.f32.mrb[0].mxu0
  %v3501 = vpop.f32.mrb[0].mxu0
  %3502 = vdwg.mxu0
  %v3503 = vadd.f32 %v127, %v3498
  %v3504 = vxor.u32 %v3503, 2147483648
  %v3505 = vmul.f32 %v3504, 1.442695
  %v3506 = vpow.pop %v3505
  %v3507 = vadd.f32 %v3506, 1.0
  %v3508 = vrcp.pop %v3507
  %v3509 = vmul.f32 1.0, %v3508
  %v3510 = vmul.f32 %v3509, 2.0
  %v3511 = vsub.f32 %v3510, 1.0
  %v3512 = vmul.f32 %v3509, %v3371
  %3514 = vrot.lane.b32.xlu0 %v3511, 64
  %v3515 = vpop.permute.xlu0 %3514
  %v3517 = vmul.f32 %v3509, %v3515
  %3519 = vrot.lane.b32.xlu0 %v3517, 32
  %v3520 = vpop.permute.xlu0 %3519
  %v3522 = vadd.f32 %v3512, %v3520
  %v3523 = vtanh.pop %v3522
  %3525 = vrot.lane.b32.xlu0 %v3523, 64
  %v3526 = vpop.permute.xlu0 %3525
  %v3528 = vmul.f32 %v3509, %v3526
  %3530 = vrot.lane.b32.xlu0 %v3528, 32
  %v3531 = vpop.permute.xlu0 %3530
  %3534 = vrot.lane.b32.xlu0 %v3455, 64
  %v3535 = vpop.permute.xlu0 %3534
  %v3537 = vsel %vm153, %v3531, %v3535
  %v3538 = vpack.c.bf16 %v3537, %v3537
  %v3540 = vsel %vm257, %v3538, 0
  %3542 = vmatprep.subr.bf16.mxu0 0
  %3543 = vmatpush1.bf16.msra.mxu0 %v249
  %3544 = vmatprep.subr.bf16.mxu0 0
  %3545 = vmatpush1.bf16.msra.mxu0 %v250
  %3546 = vmatprep.subr.bf16.mxu0 0
  %3547 = vmatpush1.bf16.msra.mxu0 %v251
  %3548 = vmatprep.subr.bf16.mxu0 0
  %3549 = vmatpush1.bf16.msra.mxu0 %v252
  %3550 = vmatprep.subr.bf16.mxu0 0
  %3551 = vmatpush1.bf16.msra.mxu0 0
  %3552 = vmatprep.subr.bf16.mxu0 0
  %3553 = vmatpush1.bf16.msra.mxu0 0
  %3554 = vmatprep.subr.bf16.mxu0 0
  %3555 = vmatpush1.bf16.msra.mxu0 0
  %3556 = vmatprep.subr.bf16.mxu0 0
  %3557 = vmatpush1.bf16.msra.mxu0 0
  %3558 = vmatprep.subr.bf16.mxu0 0
  %3559 = vmatpush1.bf16.msra.mxu0 0
  %3560 = vmatprep.subr.bf16.mxu0 0
  %3561 = vmatpush1.bf16.msra.mxu0 0
  %3562 = vmatprep.subr.bf16.mxu0 0
  %3563 = vmatpush1.bf16.msra.mxu0 0
  %3564 = vmatprep.subr.bf16.mxu0 0
  %3565 = vmatpush1.bf16.msra.mxu0 0
  %3566 = vmatprep.subr.bf16.mxu0 0
  %3567 = vmatpush1.bf16.msra.mxu0 0
  %3568 = vmatprep.subr.bf16.mxu0 0
  %3569 = vmatpush1.bf16.msra.mxu0 0
  %3570 = vmatprep.subr.bf16.mxu0 0
  %3571 = vmatpush1.bf16.msra.mxu0 0
  %3572 = vmatprep.subr.bf16.mxu0 0
  %3573 = vmatpush1.bf16.msra.mxu0 0
  %3574 = vmatprep.mubr.bf16.mxu0 0
  %3575 = vmatmul.mubr.bf16.gmra.mrb[0].mxu0 %v3540
  %v3576 = vpop.f32.mrb[0].mxu0
  %v3577 = vadd.f32 %v232, %v3576
  %v3578 = vpop.f32.mrb[0].mxu0
  %v3579 = vpop.f32.mrb[0].mxu0
  %v3580 = vpop.f32.mrb[0].mxu0
  %3581 = vdwg.mxu0
  %v3582 = vxor.u32 %v3577, 2147483648
  %v3583 = vmul.f32 %v3582, 1.442695
  %v3584 = vpow.pop %v3583
  %v3585 = vadd.f32 %v3584, 1.0
  %v3586 = vrcp.pop %v3585
  %v3587 = vmul.f32 1.0, %v3586
  %v3588 = vmul.f32 %v3587, 2.0
  %v3589 = vsub.f32 %v3588, 1.0
  %v3590 = vmul.f32 %v3587, %v3449
  %3592 = vrot.lane.b32.xlu0 %v3589, 64
  %v3593 = vpop.permute.xlu0 %3592
  %v3595 = vmul.f32 %v3587, %v3593
  %3597 = vrot.lane.b32.xlu0 %v3595, 32
  %v3598 = vpop.permute.xlu0 %3597
  %v3600 = vadd.f32 %v3590, %v3598
  %v3601 = vtanh.pop %v3600
  %3603 = vrot.lane.b32.xlu0 %v3601, 64
  %v3604 = vpop.permute.xlu0 %3603
  %v3606 = vmul.f32 %v3587, %v3604
  %v3607 = vpack.c.bf16 %v3528, %v3528
  %3609 = vrot.lane.b32.xlu0 %v3607, 32
  %v3610 = vpop.permute.xlu0 %3609
  %v3612 = vsel %vm153, %v3610, 0
  %3614 = vmatprep.subr.bf16.mxu0 0
  %3615 = vmatpush1.bf16.msra.mxu0 %v149
  %3616 = vmatprep.subr.bf16.mxu0 0
  %3617 = vmatpush1.bf16.msra.mxu0 %v150
  %3618 = vmatprep.subr.bf16.mxu0 0
  %3619 = vmatpush1.bf16.msra.mxu0 0
  %3620 = vmatprep.subr.bf16.mxu0 0
  %3621 = vmatpush1.bf16.msra.mxu0 0
  %3622 = vmatprep.subr.bf16.mxu0 0
  %3623 = vmatpush1.bf16.msra.mxu0 0
  %3624 = vmatprep.subr.bf16.mxu0 0
  %3625 = vmatpush1.bf16.msra.mxu0 0
  %3626 = vmatprep.subr.bf16.mxu0 0
  %3627 = vmatpush1.bf16.msra.mxu0 0
  %3628 = vmatprep.subr.bf16.mxu0 0
  %3629 = vmatpush1.bf16.msra.mxu0 0
  %3630 = vmatprep.subr.bf16.mxu0 0
  %3631 = vmatpush1.bf16.msra.mxu0 0
  %3632 = vmatprep.subr.bf16.mxu0 0
  %3633 = vmatpush1.bf16.msra.mxu0 0
  %3634 = vmatprep.subr.bf16.mxu0 0
  %3635 = vmatpush1.bf16.msra.mxu0 0
  %3636 = vmatprep.subr.bf16.mxu0 0
  %3637 = vmatpush1.bf16.msra.mxu0 0
  %3638 = vmatprep.subr.bf16.mxu0 0
  %3639 = vmatpush1.bf16.msra.mxu0 0
  %3640 = vmatprep.subr.bf16.mxu0 0
  %3641 = vmatpush1.bf16.msra.mxu0 0
  %3642 = vmatprep.subr.bf16.mxu0 0
  %3643 = vmatpush1.bf16.msra.mxu0 0
  %3644 = vmatprep.subr.bf16.mxu0 0
  %3645 = vmatpush1.bf16.msra.mxu0 0
  %3646 = vmatprep.mubr.bf16.mxu0 0
  %3647 = vmatmul.mubr.bf16.gmra.mrb[0].mxu0 %v3612
  %v3648 = vpop.f32.mrb[0].mxu0
  %v3649 = vadd.f32 0.0, %v3648
  %v3650 = vpop.f32.mrb[0].mxu0
  %v3651 = vpop.f32.mrb[0].mxu0
  %v3652 = vpop.f32.mrb[0].mxu0
  %3653 = vdwg.mxu0
  %v3654 = vadd.f32 %v130, %v3649
  %v3655 = vxor.u32 %v3654, 2147483648
  %v3656 = vmul.f32 %v3655, 1.442695
  %v3657 = vpow.pop %v3656
  %v3658 = vadd.f32 %v3657, 1.0
  %v3659 = vrcp.pop %v3658
  %v3660 = vmul.f32 1.0, %v3659
  %v3661 = vmul.f32 %v3660, 2.0
  %v3662 = vsub.f32 %v3661, 1.0
  %v3663 = vmul.f32 %v3660, %v3522
  %3665 = vrot.lane.b32.xlu0 %v3662, 64
  %v3666 = vpop.permute.xlu0 %3665
  %v3668 = vmul.f32 %v3660, %v3666
  %3670 = vrot.lane.b32.xlu0 %v3668, 32
  %v3671 = vpop.permute.xlu0 %3670
  %v3673 = vadd.f32 %v3663, %v3671
  %v3674 = vtanh.pop %v3673
  %3676 = vrot.lane.b32.xlu0 %v3674, 64
  %v3677 = vpop.permute.xlu0 %3676
  %v3679 = vmul.f32 %v3660, %v3677
  %3681 = vrot.lane.b32.xlu0 %v3679, 32
  %v3682 = vpop.permute.xlu0 %3681
  %3685 = vrot.lane.b32.xlu0 %v3606, 64
  %v3686 = vpop.permute.xlu0 %3685
  %v3688 = vsel %vm153, %v3682, %v3686
  %v3689 = vpack.c.bf16 %v3688, %v3688
  %v3691 = vsel %vm257, %v3689, 0
  %3693 = vmatprep.subr.bf16.mxu0 0
  %3694 = vmatpush1.bf16.msra.mxu0 %v249
  %3695 = vmatprep.subr.bf16.mxu0 0
  %3696 = vmatpush1.bf16.msra.mxu0 %v250
  %3697 = vmatprep.subr.bf16.mxu0 0
  %3698 = vmatpush1.bf16.msra.mxu0 %v251
  %3699 = vmatprep.subr.bf16.mxu0 0
  %3700 = vmatpush1.bf16.msra.mxu0 %v252
  %3701 = vmatprep.subr.bf16.mxu0 0
  %3702 = vmatpush1.bf16.msra.mxu0 0
  %3703 = vmatprep.subr.bf16.mxu0 0
  %3704 = vmatpush1.bf16.msra.mxu0 0
  %3705 = vmatprep.subr.bf16.mxu0 0
  %3706 = vmatpush1.bf16.msra.mxu0 0
  %3707 = vmatprep.subr.bf16.mxu0 0
  %3708 = vmatpush1.bf16.msra.mxu0 0
  %3709 = vmatprep.subr.bf16.mxu0 0
  %3710 = vmatpush1.bf16.msra.mxu0 0
  %3711 = vmatprep.subr.bf16.mxu0 0
  %3712 = vmatpush1.bf16.msra.mxu0 0
  %3713 = vmatprep.subr.bf16.mxu0 0
  %3714 = vmatpush1.bf16.msra.mxu0 0
  %3715 = vmatprep.subr.bf16.mxu0 0
  %3716 = vmatpush1.bf16.msra.mxu0 0
  %3717 = vmatprep.subr.bf16.mxu0 0
  %3718 = vmatpush1.bf16.msra.mxu0 0
  %3719 = vmatprep.subr.bf16.mxu0 0
  %3720 = vmatpush1.bf16.msra.mxu0 0
  %3721 = vmatprep.subr.bf16.mxu0 0
  %3722 = vmatpush1.bf16.msra.mxu0 0
  %3723 = vmatprep.subr.bf16.mxu0 0
  %3724 = vmatpush1.bf16.msra.mxu0 0
  %3725 = vmatprep.mubr.bf16.mxu0 0
  %3726 = vmatmul.mubr.bf16.gmra.mrb[0].mxu0 %v3691
  %v3727 = vpop.f32.mrb[0].mxu0
  %v3728 = vadd.f32 %v232, %v3727
  %v3729 = vpop.f32.mrb[0].mxu0
  %v3730 = vpop.f32.mrb[0].mxu0
  %v3731 = vpop.f32.mrb[0].mxu0
  %3732 = vdwg.mxu0
  %v3733 = vxor.u32 %v3728, 2147483648
  %v3734 = vmul.f32 %v3733, 1.442695
  %v3735 = vpow.pop %v3734
  %v3736 = vadd.f32 %v3735, 1.0
  %v3737 = vrcp.pop %v3736
  %v3738 = vmul.f32 1.0, %v3737
  %v3739 = vmul.f32 %v3738, 2.0
  %v3740 = vsub.f32 %v3739, 1.0
  %v3741 = vmul.f32 %v3738, %v3600
  %3743 = vrot.lane.b32.xlu0 %v3740, 64
  %v3744 = vpop.permute.xlu0 %3743
  %v3746 = vmul.f32 %v3738, %v3744
  %3748 = vrot.lane.b32.xlu0 %v3746, 32
  %v3749 = vpop.permute.xlu0 %3748
  %v3751 = vadd.f32 %v3741, %v3749
  %v3752 = vtanh.pop %v3751
  %3754 = vrot.lane.b32.xlu0 %v3752, 64
  %v3755 = vpop.permute.xlu0 %3754
  %v3757 = vmul.f32 %v3738, %v3755
  %v3758 = vpack.c.bf16 %v3679, %v3679
  %3760 = vrot.lane.b32.xlu0 %v3758, 32
  %v3761 = vpop.permute.xlu0 %3760
  %v3763 = vsel %vm153, %v3761, 0
  %3765 = vmatprep.subr.bf16.mxu0 0
  %3766 = vmatpush1.bf16.msra.mxu0 %v149
  %3767 = vmatprep.subr.bf16.mxu0 0
  %3768 = vmatpush1.bf16.msra.mxu0 %v150
  %3769 = vmatprep.subr.bf16.mxu0 0
  %3770 = vmatpush1.bf16.msra.mxu0 0
  %3771 = vmatprep.subr.bf16.mxu0 0
  %3772 = vmatpush1.bf16.msra.mxu0 0
  %3773 = vmatprep.subr.bf16.mxu0 0
  %3774 = vmatpush1.bf16.msra.mxu0 0
  %3775 = vmatprep.subr.bf16.mxu0 0
  %3776 = vmatpush1.bf16.msra.mxu0 0
  %3777 = vmatprep.subr.bf16.mxu0 0
  %3778 = vmatpush1.bf16.msra.mxu0 0
  %3779 = vmatprep.subr.bf16.mxu0 0
  %3780 = vmatpush1.bf16.msra.mxu0 0
  %3781 = vmatprep.subr.bf16.mxu0 0
  %3782 = vmatpush1.bf16.msra.mxu0 0
  %3783 = vmatprep.subr.bf16.mxu0 0
  %3784 = vmatpush1.bf16.msra.mxu0 0
  %3785 = vmatprep.subr.bf16.mxu0 0
  %3786 = vmatpush1.bf16.msra.mxu0 0
  %3787 = vmatprep.subr.bf16.mxu0 0
  %3788 = vmatpush1.bf16.msra.mxu0 0
  %3789 = vmatprep.subr.bf16.mxu0 0
  %3790 = vmatpush1.bf16.msra.mxu0 0
  %3791 = vmatprep.subr.bf16.mxu0 0
  %3792 = vmatpush1.bf16.msra.mxu0 0
  %3793 = vmatprep.subr.bf16.mxu0 0
  %3794 = vmatpush1.bf16.msra.mxu0 0
  %3795 = vmatprep.subr.bf16.mxu0 0
  %3796 = vmatpush1.bf16.msra.mxu0 0
  %3797 = vmatprep.mubr.bf16.mxu0 0
  %3798 = vmatmul.mubr.bf16.gmra.mrb[0].mxu0 %v3763
  %v3799 = vpop.f32.mrb[0].mxu0
  %v3800 = vadd.f32 0.0, %v3799
  %v3801 = vpop.f32.mrb[0].mxu0
  %v3802 = vpop.f32.mrb[0].mxu0
  %v3803 = vpop.f32.mrb[0].mxu0
  %3804 = vdwg.mxu0
  %v3805 = vadd.f32 %v135, %v3800
  %v3806 = vxor.u32 %v3805, 2147483648
  %v3807 = vmul.f32 %v3806, 1.442695
  %v3808 = vpow.pop %v3807
  %v3809 = vadd.f32 %v3808, 1.0
  %v3810 = vrcp.pop %v3809
  %v3811 = vmul.f32 1.0, %v3810
  %v3812 = vmul.f32 %v3811, 2.0
  %v3813 = vsub.f32 %v3812, 1.0
  %v3814 = vmul.f32 %v3811, %v3673
  %3816 = vrot.lane.b32.xlu0 %v3813, 64
  %v3817 = vpop.permute.xlu0 %3816
  %v3819 = vmul.f32 %v3811, %v3817
  %3821 = vrot.lane.b32.xlu0 %v3819, 32
  %v3822 = vpop.permute.xlu0 %3821
  %v3824 = vadd.f32 %v3814, %v3822
  %v3825 = vtanh.pop %v3824
  %3827 = vrot.lane.b32.xlu0 %v3825, 64
  %v3828 = vpop.permute.xlu0 %3827
  %v3830 = vmul.f32 %v3811, %v3828
  %3832 = vrot.lane.b32.xlu0 %v3830, 32
  %v3833 = vpop.permute.xlu0 %3832
  %3836 = vrot.lane.b32.xlu0 %v3757, 64
  %v3837 = vpop.permute.xlu0 %3836
  %v3839 = vsel %vm153, %v3833, %v3837
  %v3840 = vpack.c.bf16 %v3839, %v3839
  %v3842 = vsel %vm257, %v3840, 0
  %3844 = vmatprep.subr.bf16.mxu0 0
  %3845 = vmatpush1.bf16.msra.mxu0 %v249
  %3846 = vmatprep.subr.bf16.mxu0 0
  %3847 = vmatpush1.bf16.msra.mxu0 %v250
  %3848 = vmatprep.subr.bf16.mxu0 0
  %3849 = vmatpush1.bf16.msra.mxu0 %v251
  %3850 = vmatprep.subr.bf16.mxu0 0
  %3851 = vmatpush1.bf16.msra.mxu0 %v252
  %3852 = vmatprep.subr.bf16.mxu0 0
  %3853 = vmatpush1.bf16.msra.mxu0 0
  %3854 = vmatprep.subr.bf16.mxu0 0
  %3855 = vmatpush1.bf16.msra.mxu0 0
  %3856 = vmatprep.subr.bf16.mxu0 0
  %3857 = vmatpush1.bf16.msra.mxu0 0
  %3858 = vmatprep.subr.bf16.mxu0 0
  %3859 = vmatpush1.bf16.msra.mxu0 0
  %3860 = vmatprep.subr.bf16.mxu0 0
  %3861 = vmatpush1.bf16.msra.mxu0 0
  %3862 = vmatprep.subr.bf16.mxu0 0
  %3863 = vmatpush1.bf16.msra.mxu0 0
  %3864 = vmatprep.subr.bf16.mxu0 0
  %3865 = vmatpush1.bf16.msra.mxu0 0
  %3866 = vmatprep.subr.bf16.mxu0 0
  %3867 = vmatpush1.bf16.msra.mxu0 0
  %3868 = vmatprep.subr.bf16.mxu0 0
  %3869 = vmatpush1.bf16.msra.mxu0 0
  %3870 = vmatprep.subr.bf16.mxu0 0
  %3871 = vmatpush1.bf16.msra.mxu0 0
  %3872 = vmatprep.subr.bf16.mxu0 0
  %3873 = vmatpush1.bf16.msra.mxu0 0
  %3874 = vmatprep.subr.bf16.mxu0 0
  %3875 = vmatpush1.bf16.msra.mxu0 0
  %3876 = vmatprep.mubr.bf16.mxu0 0
  %3877 = vmatmul.mubr.bf16.gmra.mrb[0].mxu0 %v3842
  %v3878 = vpop.f32.mrb[0].mxu0
  %v3879 = vadd.f32 %v232, %v3878
  %v3880 = vpop.f32.mrb[0].mxu0
  %v3881 = vpop.f32.mrb[0].mxu0
  %v3882 = vpop.f32.mrb[0].mxu0
  %3883 = vdwg.mxu0
  %v3884 = vxor.u32 %v3879, 2147483648
  %v3885 = vmul.f32 %v3884, 1.442695
  %v3886 = vpow.pop %v3885
  %v3887 = vadd.f32 %v3886, 1.0
  %v3888 = vrcp.pop %v3887
  %v3889 = vmul.f32 1.0, %v3888
  %v3890 = vmul.f32 %v3889, 2.0
  %v3891 = vsub.f32 %v3890, 1.0
  %v3892 = vmul.f32 %v3889, %v3751
  %3894 = vrot.lane.b32.xlu0 %v3891, 64
  %v3895 = vpop.permute.xlu0 %3894
  %v3897 = vmul.f32 %v3889, %v3895
  %3899 = vrot.lane.b32.xlu0 %v3897, 32
  %v3900 = vpop.permute.xlu0 %3899
  %v3902 = vadd.f32 %v3892, %v3900
  %v3903 = vtanh.pop %v3902
  %3905 = vrot.lane.b32.xlu0 %v3903, 64
  %v3906 = vpop.permute.xlu0 %3905
  %v3908 = vmul.f32 %v3889, %v3906
  %v3909 = vpack.c.bf16 %v3830, %v3830
  %3911 = vrot.lane.b32.xlu0 %v3909, 32
  %v3912 = vpop.permute.xlu0 %3911
  %v3914 = vsel %vm153, %v3912, 0
  %3916 = vmatprep.subr.bf16.mxu0 0
  %3917 = vmatpush1.bf16.msra.mxu0 %v149
  %3918 = vmatprep.subr.bf16.mxu0 0
  %3919 = vmatpush1.bf16.msra.mxu0 %v150
  %3920 = vmatprep.subr.bf16.mxu0 0
  %3921 = vmatpush1.bf16.msra.mxu0 0
  %3922 = vmatprep.subr.bf16.mxu0 0
  %3923 = vmatpush1.bf16.msra.mxu0 0
  %3924 = vmatprep.subr.bf16.mxu0 0
  %3925 = vmatpush1.bf16.msra.mxu0 0
  %3926 = vmatprep.subr.bf16.mxu0 0
  %3927 = vmatpush1.bf16.msra.mxu0 0
  %3928 = vmatprep.subr.bf16.mxu0 0
  %3929 = vmatpush1.bf16.msra.mxu0 0
  %3930 = vmatprep.subr.bf16.mxu0 0
  %3931 = vmatpush1.bf16.msra.mxu0 0
  %3932 = vmatprep.subr.bf16.mxu0 0
  %3933 = vmatpush1.bf16.msra.mxu0 0
  %3934 = vmatprep.subr.bf16.mxu0 0
  %3935 = vmatpush1.bf16.msra.mxu0 0
  %3936 = vmatprep.subr.bf16.mxu0 0
  %3937 = vmatpush1.bf16.msra.mxu0 0
  %3938 = vmatprep.subr.bf16.mxu0 0
  %3939 = vmatpush1.bf16.msra.mxu0 0
  %3940 = vmatprep.subr.bf16.mxu0 0
  %3941 = vmatpush1.bf16.msra.mxu0 0
  %3942 = vmatprep.subr.bf16.mxu0 0
  %3943 = vmatpush1.bf16.msra.mxu0 0
  %3944 = vmatprep.subr.bf16.mxu0 0
  %3945 = vmatpush1.bf16.msra.mxu0 0
  %3946 = vmatprep.subr.bf16.mxu0 0
  %3947 = vmatpush1.bf16.msra.mxu0 0
  %3948 = vmatprep.mubr.bf16.mxu0 0
  %3949 = vmatmul.mubr.bf16.gmra.mrb[0].mxu0 %v3914
  %v3950 = vpop.f32.mrb[0].mxu0
  %v3951 = vadd.f32 0.0, %v3950
  %v3952 = vpop.f32.mrb[0].mxu0
  %v3953 = vpop.f32.mrb[0].mxu0
  %v3954 = vpop.f32.mrb[0].mxu0
  %3955 = vdwg.mxu0
  %v3956 = vadd.f32 %v138, %v3951
  %v3957 = vxor.u32 %v3956, 2147483648
  %v3958 = vmul.f32 %v3957, 1.442695
  %v3959 = vpow.pop %v3958
  %v3960 = vadd.f32 %v3959, 1.0
  %v3961 = vrcp.pop %v3960
  %v3962 = vmul.f32 1.0, %v3961
  %v3963 = vmul.f32 %v3962, 2.0
  %v3964 = vsub.f32 %v3963, 1.0
  %v3965 = vmul.f32 %v3962, %v3824
  %3967 = vrot.lane.b32.xlu0 %v3964, 64
  %v3968 = vpop.permute.xlu0 %3967
  %v3970 = vmul.f32 %v3962, %v3968
  %3972 = vrot.lane.b32.xlu0 %v3970, 32
  %v3973 = vpop.permute.xlu0 %3972
  %v3975 = vadd.f32 %v3965, %v3973
  %v3976 = vtanh.pop %v3975
  %3978 = vrot.lane.b32.xlu0 %v3976, 64
  %v3979 = vpop.permute.xlu0 %3978
  %v3981 = vmul.f32 %v3962, %v3979
  %3983 = vrot.lane.b32.xlu0 %v3981, 32
  %v3984 = vpop.permute.xlu0 %3983
  %3987 = vrot.lane.b32.xlu0 %v3908, 64
  %v3988 = vpop.permute.xlu0 %3987
  %v3990 = vsel %vm153, %v3984, %v3988
  %v3991 = vpack.c.bf16 %v3990, %v3990
  %v3993 = vsel %vm257, %v3991, 0
  %3995 = vmatprep.subr.bf16.mxu0 0
  %3996 = vmatpush1.bf16.msra.mxu0 %v249
  %3997 = vmatprep.subr.bf16.mxu0 0
  %3998 = vmatpush1.bf16.msra.mxu0 %v250
  %3999 = vmatprep.subr.bf16.mxu0 0
  %4000 = vmatpush1.bf16.msra.mxu0 %v251
  %4001 = vmatprep.subr.bf16.mxu0 0
  %4002 = vmatpush1.bf16.msra.mxu0 %v252
  %4003 = vmatprep.subr.bf16.mxu0 0
  %4004 = vmatpush1.bf16.msra.mxu0 0
  %4005 = vmatprep.subr.bf16.mxu0 0
  %4006 = vmatpush1.bf16.msra.mxu0 0
  %4007 = vmatprep.subr.bf16.mxu0 0
  %4008 = vmatpush1.bf16.msra.mxu0 0
  %4009 = vmatprep.subr.bf16.mxu0 0
  %4010 = vmatpush1.bf16.msra.mxu0 0
  %4011 = vmatprep.subr.bf16.mxu0 0
  %4012 = vmatpush1.bf16.msra.mxu0 0
  %4013 = vmatprep.subr.bf16.mxu0 0
  %4014 = vmatpush1.bf16.msra.mxu0 0
  %4015 = vmatprep.subr.bf16.mxu0 0
  %4016 = vmatpush1.bf16.msra.mxu0 0
  %4017 = vmatprep.subr.bf16.mxu0 0
  %4018 = vmatpush1.bf16.msra.mxu0 0
  %4019 = vmatprep.subr.bf16.mxu0 0
  %4020 = vmatpush1.bf16.msra.mxu0 0
  %4021 = vmatprep.subr.bf16.mxu0 0
  %4022 = vmatpush1.bf16.msra.mxu0 0
  %4023 = vmatprep.subr.bf16.mxu0 0
  %4024 = vmatpush1.bf16.msra.mxu0 0
  %4025 = vmatprep.subr.bf16.mxu0 0
  %4026 = vmatpush1.bf16.msra.mxu0 0
  %4027 = vmatprep.mubr.bf16.mxu0 0
  %4028 = vmatmul.mubr.bf16.gmra.mrb[0].mxu0 %v3993
  %v4029 = vpop.f32.mrb[0].mxu0
  %v4030 = vadd.f32 %v232, %v4029
  %v4031 = vpop.f32.mrb[0].mxu0
  %v4032 = vpop.f32.mrb[0].mxu0
  %v4033 = vpop.f32.mrb[0].mxu0
  %4034 = vdwg.mxu0
  %v4035 = vxor.u32 %v4030, 2147483648
  %v4036 = vmul.f32 %v4035, 1.442695
  %v4037 = vpow.pop %v4036
  %v4038 = vadd.f32 %v4037, 1.0
  %v4039 = vrcp.pop %v4038
  %v4040 = vmul.f32 1.0, %v4039
  %v4041 = vmul.f32 %v4040, 2.0
  %v4042 = vsub.f32 %v4041, 1.0
  %v4043 = vmul.f32 %v4040, %v3902
  %4045 = vrot.lane.b32.xlu0 %v4042, 64
  %v4046 = vpop.permute.xlu0 %4045
  %v4048 = vmul.f32 %v4040, %v4046
  %4050 = vrot.lane.b32.xlu0 %v4048, 32
  %v4051 = vpop.permute.xlu0 %4050
  %v4053 = vadd.f32 %v4043, %v4051
  %v4054 = vtanh.pop %v4053
  %4056 = vrot.lane.b32.xlu0 %v4054, 64
  %v4057 = vpop.permute.xlu0 %4056
  %v4059 = vmul.f32 %v4040, %v4057
  %v4060 = vpack.c.bf16 %v3981, %v3981
  %4062 = vrot.lane.b32.xlu0 %v4060, 32
  %v4063 = vpop.permute.xlu0 %4062
  %v4065 = vsel %vm153, %v4063, 0
  %4067 = vmatprep.subr.bf16.mxu0 0
  %4068 = vmatpush1.bf16.msra.mxu0 %v149
  %4069 = vmatprep.subr.bf16.mxu0 0
  %4070 = vmatpush1.bf16.msra.mxu0 %v150
  %4071 = vmatprep.subr.bf16.mxu0 0
  %4072 = vmatpush1.bf16.msra.mxu0 0
  %4073 = vmatprep.subr.bf16.mxu0 0
  %4074 = vmatpush1.bf16.msra.mxu0 0
  %4075 = vmatprep.subr.bf16.mxu0 0
  %4076 = vmatpush1.bf16.msra.mxu0 0
  %4077 = vmatprep.subr.bf16.mxu0 0
  %4078 = vmatpush1.bf16.msra.mxu0 0
  %4079 = vmatprep.subr.bf16.mxu0 0
  %4080 = vmatpush1.bf16.msra.mxu0 0
  %4081 = vmatprep.subr.bf16.mxu0 0
  %4082 = vmatpush1.bf16.msra.mxu0 0
  %4083 = vmatprep.subr.bf16.mxu0 0
  %4084 = vmatpush1.bf16.msra.mxu0 0
  %4085 = vmatprep.subr.bf16.mxu0 0
  %4086 = vmatpush1.bf16.msra.mxu0 0
  %4087 = vmatprep.subr.bf16.mxu0 0
  %4088 = vmatpush1.bf16.msra.mxu0 0
  %4089 = vmatprep.subr.bf16.mxu0 0
  %4090 = vmatpush1.bf16.msra.mxu0 0
  %4091 = vmatprep.subr.bf16.mxu0 0
  %4092 = vmatpush1.bf16.msra.mxu0 0
  %4093 = vmatprep.subr.bf16.mxu0 0
  %4094 = vmatpush1.bf16.msra.mxu0 0
  %4095 = vmatprep.subr.bf16.mxu0 0
  %4096 = vmatpush1.bf16.msra.mxu0 0
  %4097 = vmatprep.subr.bf16.mxu0 0
  %4098 = vmatpush1.bf16.msra.mxu0 0
  %4099 = vmatprep.mubr.bf16.mxu0 0
  %4100 = vmatmul.mubr.bf16.gmra.mrb[0].mxu0 %v4065
  %v4101 = vpop.f32.mrb[0].mxu0
  %v4102 = vadd.f32 0.0, %v4101
  %v4103 = vpop.f32.mrb[0].mxu0
  %v4104 = vpop.f32.mrb[0].mxu0
  %v4105 = vpop.f32.mrb[0].mxu0
  %4106 = vdwg.mxu0
  %v4107 = vadd.f32 %v2847, %v4102
  %v4108 = vxor.u32 %v4107, 2147483648
  %v4109 = vmul.f32 %v4108, 1.442695
  %v4110 = vpow.pop %v4109
  %v4111 = vadd.f32 %v4110, 1.0
  %v4112 = vrcp.pop %v4111
  %v4113 = vmul.f32 1.0, %v4112
  %v4114 = vmul.f32 %v4113, 2.0
  %v4115 = vsub.f32 %v4114, 1.0
  %v4116 = vmul.f32 %v4113, %v3975
  %4118 = vrot.lane.b32.xlu0 %v4115, 64
  %v4119 = vpop.permute.xlu0 %4118
  %v4121 = vmul.f32 %v4113, %v4119
  %4123 = vrot.lane.b32.xlu0 %v4121, 32
  %v4124 = vpop.permute.xlu0 %4123
  %v4126 = vadd.f32 %v4116, %v4124
  %v4127 = vtanh.pop %v4126
  %4129 = vrot.lane.b32.xlu0 %v4127, 64
  %v4130 = vpop.permute.xlu0 %4129
  %v4132 = vmul.f32 %v4113, %v4130
  %4134 = vrot.lane.b32.xlu0 %v4132, 32
  %v4135 = vpop.permute.xlu0 %4134
  %4138 = vrot.lane.b32.xlu0 %v4059, 64
  %v4139 = vpop.permute.xlu0 %4138
  %v4141 = vsel %vm153, %v4135, %v4139
  %v4142 = vpack.c.bf16 %v4141, %v4141
  %v4144 = vsel %vm257, %v4142, 0
  %4146 = vmatprep.subr.bf16.mxu0 0
  %4147 = vmatpush1.bf16.msra.mxu0 %v249
  %4148 = vmatprep.subr.bf16.mxu0 0
  %4149 = vmatpush1.bf16.msra.mxu0 %v250
  %4150 = vmatprep.subr.bf16.mxu0 0
  %4151 = vmatpush1.bf16.msra.mxu0 %v251
  %4152 = vmatprep.subr.bf16.mxu0 0
  %4153 = vmatpush1.bf16.msra.mxu0 %v252
  %4154 = vmatprep.subr.bf16.mxu0 0
  %4155 = vmatpush1.bf16.msra.mxu0 0
  %4156 = vmatprep.subr.bf16.mxu0 0
  %4157 = vmatpush1.bf16.msra.mxu0 0
  %4158 = vmatprep.subr.bf16.mxu0 0
  %4159 = vmatpush1.bf16.msra.mxu0 0
  %4160 = vmatprep.subr.bf16.mxu0 0
  %4161 = vmatpush1.bf16.msra.mxu0 0
  %4162 = vmatprep.subr.bf16.mxu0 0
  %4163 = vmatpush1.bf16.msra.mxu0 0
  %4164 = vmatprep.subr.bf16.mxu0 0
  %4165 = vmatpush1.bf16.msra.mxu0 0
  %4166 = vmatprep.subr.bf16.mxu0 0
  %4167 = vmatpush1.bf16.msra.mxu0 0
  %4168 = vmatprep.subr.bf16.mxu0 0
  %4169 = vmatpush1.bf16.msra.mxu0 0
  %4170 = vmatprep.subr.bf16.mxu0 0
  %4171 = vmatpush1.bf16.msra.mxu0 0
  %4172 = vmatprep.subr.bf16.mxu0 0
  %4173 = vmatpush1.bf16.msra.mxu0 0
  %4174 = vmatprep.subr.bf16.mxu0 0
  %4175 = vmatpush1.bf16.msra.mxu0 0
  %4176 = vmatprep.subr.bf16.mxu0 0
  %4177 = vmatpush1.bf16.msra.mxu0 0
  %4178 = vmatprep.mubr.bf16.mxu0 0
  %4179 = vmatmul.mubr.bf16.gmra.mrb[0].mxu0 %v4144
  %v4180 = vpop.f32.mrb[0].mxu0
  %v4181 = vadd.f32 %v232, %v4180
  %v4182 = vpop.f32.mrb[0].mxu0
  %v4183 = vpop.f32.mrb[0].mxu0
  %v4184 = vpop.f32.mrb[0].mxu0
  %4185 = vdwg.mxu0
  %v4186 = vxor.u32 %v4181, 2147483648
  %v4187 = vmul.f32 %v4186, 1.442695
  %v4188 = vpow.pop %v4187
  %v4189 = vadd.f32 %v4188, 1.0
  %v4190 = vrcp.pop %v4189
  %v4191 = vmul.f32 1.0, %v4190
  %v4192 = vmul.f32 %v4191, 2.0
  %v4193 = vsub.f32 %v4192, 1.0
  %v4194 = vmul.f32 %v4191, %v4053
  %4196 = vrot.lane.b32.xlu0 %v4193, 64
  %v4197 = vpop.permute.xlu0 %4196
  %v4199 = vmul.f32 %v4191, %v4197
  %4201 = vrot.lane.b32.xlu0 %v4199, 32
  %v4202 = vpop.permute.xlu0 %4201
  %v4204 = vadd.f32 %v4194, %v4202
  %v4205 = vtanh.pop %v4204
  %4207 = vrot.lane.b32.xlu0 %v4205, 64
  %v4208 = vpop.permute.xlu0 %4207
  %v4210 = vmul.f32 %v4191, %v4208
  %v4211 = vpack.c.bf16 %v2804, %v1382
  %v4212 = vpack.c.bf16 %v4210, %v4210
  %v4213 = vlaneseq
  %v4214 = vshrl.u32 %v4213, 7
  %v4215 = vsub.s32 0, %v4214
  %v4216 = vrot.slane %v40, %v4215
  %4219 = vrot.lane.b32.xlu0 %v4211, 32
  %v4220 = vpop.permute.xlu0 %4219
  %4221 = vrot.lane.b32.xlu0 %v4212, 32
  %v4222 = vpop.permute.xlu0 %4221
  %v4227 = vunpack.c.l.b16 %v33
  %v4228 = vunpack.c.l.b16 %v34
  %v4229 = vunpack.c.l.b16 %v35
  %v4230 = vunpack.c.l.b16 %v36
  %v4231 = vpack.c.b16 %v4228, %v4227
  %v4232 = vpack.c.b16 %v4230, %v4229
  %v4236 = vsel %vm153, %v4220, 0
  %v4239 = vsel %vm153, %v4222, 0
  %4241 = vmatprep.subr.bf16.mxu0 0
  %4242 = vmatpush1.bf16.msra.mxu0 %v4231
  %4243 = vmatprep.subr.bf16.mxu0 0
  %4244 = vmatpush1.bf16.msra.mxu0 %v4232
  %4245 = vmatprep.subr.bf16.mxu0 0
  %4246 = vmatpush1.bf16.msra.mxu0 0
  %4247 = vmatprep.subr.bf16.mxu0 0
  %4248 = vmatpush1.bf16.msra.mxu0 0
  %4249 = vmatprep.subr.bf16.mxu0 0
  %4250 = vmatpush1.bf16.msra.mxu0 0
  %4251 = vmatprep.subr.bf16.mxu0 0
  %4252 = vmatpush1.bf16.msra.mxu0 0
  %4253 = vmatprep.subr.bf16.mxu0 0
  %4254 = vmatpush1.bf16.msra.mxu0 0
  %4255 = vmatprep.subr.bf16.mxu0 0
  %4256 = vmatpush1.bf16.msra.mxu0 0
  %4257 = vmatprep.subr.bf16.mxu0 0
  %4258 = vmatpush1.bf16.msra.mxu0 0
  %4259 = vmatprep.subr.bf16.mxu0 0
  %4260 = vmatpush1.bf16.msra.mxu0 0
  %4261 = vmatprep.subr.bf16.mxu0 0
  %4262 = vmatpush1.bf16.msra.mxu0 0
  %4263 = vmatprep.subr.bf16.mxu0 0
  %4264 = vmatpush1.bf16.msra.mxu0 0
  %4265 = vmatprep.subr.bf16.mxu0 0
  %4266 = vmatpush1.bf16.msra.mxu0 0
  %4267 = vmatprep.subr.bf16.mxu0 0
  %4268 = vmatpush1.bf16.msra.mxu0 0
  %4269 = vmatprep.subr.bf16.mxu0 0
  %4270 = vmatpush1.bf16.msra.mxu0 0
  %4271 = vmatprep.subr.bf16.mxu0 0
  %4272 = vmatpush1.bf16.msra.mxu0 0
  %4273 = vmatprep.mubr.bf16.mxu0 0
  %4274 = vmatmul.mubr.bf16.gmra.mrb[0].mxu0 %v4236
  %v4275 = vpop.f32.mrb[0].mxu0
  %v4276 = vadd.f32 %v4216, %v4275
  %v4277 = vpop.f32.mrb[0].mxu0
  %v4278 = vpop.f32.mrb[0].mxu0
  %v4279 = vadd.f32 %v4216, %v4278
  %v4280 = vpop.f32.mrb[0].mxu0
  %4281 = vmatprep.mubr.bf16.mxu0 0
  %4282 = vmatmul.mubr.bf16.gmra.mrb[0].mxu0 %v4239
  %v4283 = vpop.f32.mrb[0].mxu0
  %v4284 = vadd.f32 %v4216, %v4283
  %v4285 = vpop.f32.mrb[0].mxu0
  %v4286 = vpop.f32.mrb[0].mxu0
  %v4287 = vpop.f32.mrb[0].mxu0
  %4288 = vdwg.mxu0
  %4289 = vst [vmem:[%s3] sm:$0xff] %v4276
  %4290 = vst [vmem:[%s3 + $0x8] sm:$0xff] %v4279
  %4291 = vst [vmem:[%s3 + $0x10] sm:$0xff] %v4284
  // Predicated region
  $region14: #{lstm_model_v2_forward.1} parent=0 // pred_check
    _
  $region15: #{lstm_model_v2_forward.1} parent=0 // pred_check_branch
    %4293 = sbr.rel (0) target = $region17
  $region16: #{lstm_model_v2_forward.1} parent=0 // pred_region
    _
  $region17: #{lstm_model_v2_forward.1} parent=0 // pred_fallthru
    _
  // Predicated region
  $region18: #{lstm_model_v2_forward.1} parent=0 // pred_check
    _
  $region19: #{lstm_model_v2_forward.1} parent=0 // pred_check_branch
    %4295 = sbr.rel (0) target = $region21
  $region20: #{lstm_model_v2_forward.1} parent=0 // pred_region
    _
  $region21: #{lstm_model_v2_forward.1} parent=0 // pred_fallthru
    _

</llo_original>
